<compile_context>
chip_gen: v6e
topology: v6e:2x2x1
jax: 0.10.0
libtpu: 0.0.40
codegen_flags: <defaults>
</compile_context>

<pallas_src>
import jax
import jax.numpy as jnp
from jax.experimental import pallas as pl
from jax.experimental.pallas import tpu as pltpu

BN_EPS = 1e-5
NEG_SLOPE = 0.2
VMEM_LIMIT_BYTES = 48 * 1024 * 1024   # headroom below v7x's 64 MiB physical VMEM


# ---------------------------------------------------------------------------
# Pallas kernels (all GEMMs are transposed / lane-dense: out = W2d @ cols)
# ---------------------------------------------------------------------------
def _conv_bias_leaky_kernel(w_ref, cols_ref, b_ref, o_ref):
    """(C_out, K) @ (K, TILE_M) + bias + LeakyReLU(0.2). bf16 MXU, f32 epilogue."""
    z = jnp.dot(w_ref[...], cols_ref[...], preferred_element_type=jnp.float32)
    y = z + b_ref[...]                       # (C_out, 1) bias broadcast over lanes
    y = jnp.where(y >= 0, y, NEG_SLOPE * y)
    o_ref[...] = y.astype(o_ref.dtype)


def _conv_bn_leaky_kernel(w_ref, cols_ref, gb_ref, o_ref, z_ref, stat_ref):
    """Two-phase, M-tiled Conv(no bias) + BatchNorm2d(batch stats) + LeakyReLU.

    grid = (2, num_m_tiles):
      phase 0: z_tile = W @ cols_tile  -> f32 VMEM scratch; accumulate
               per-channel sum and sum-of-squares (single pass).
      phase 1: mu / var from the accumulators, per-channel affine + LeakyReLU
               applied tile-by-tile, bf16 output tiles streamed out.
    Columns are (N, H_out, W_out) flattened, so per-ROW stats over the lane
    axis across ALL tiles are exactly BatchNorm2d's per-channel statistics.
    """
    phase = pl.program_id(0)
    i = pl.program_id(1)
    tile_m = o_ref.shape[1]
    m_total = z_ref.shape[1]

    @pl.when((phase == 0) & (i == 0))
    def _():
        stat_ref[...] = jnp.zeros_like(stat_ref)

    @pl.when(phase == 0)
    def _():
        z = jnp.dot(w_ref[...], cols_ref[...], preferred_element_type=jnp.float32)
        off = pl.multiple_of(i * tile_m, tile_m)
        z_ref[:, pl.ds(off, tile_m)] = z
        stat_ref[:, 0:1] += jnp.sum(z, axis=1, keepdims=True)
        stat_ref[:, 1:2] += jnp.sum(z * z, axis=1, keepdims=True)

    @pl.when(phase == 1)
    def _():
        inv_m = 1.0 / m_total
        mu = stat_ref[:, 0:1] * inv_m
        var = jnp.maximum(stat_ref[:, 1:2] * inv_m - mu * mu, 0.0)   # biased var
        scale = gb_ref[:, 0:1] * jax.lax.rsqrt(var + BN_EPS)
        shift = gb_ref[:, 1:2] - mu * scale
        off = pl.multiple_of(i * tile_m, tile_m)
        y = z_ref[:, pl.ds(off, tile_m)] * scale + shift
        y = jnp.where(y >= 0, y, NEG_SLOPE * y)
        o_ref[...] = y.astype(o_ref.dtype)


def _conv_bn_leaky_head_kernel(w_ref, cols_ref, gb_ref, w5_ref, b5_ref, o_ref):
    """Layer-4 block fused with the final Conv(8F->1, 4, 2, 0) + Sigmoid.

    cols are TAP-MAJOR: column index = p * N + n with p = i*4 + j the 4x4
    spatial position of the layer-4 output (== conv5 kernel tap).  Hence
      y[:, p*N:(p+1)*N] is the (8F, N) activation at spatial position p and
      out[n] = sigmoid( sum_p  w5[:, p] . y[:, p*N + n]  + b5 ).
    """
    n = o_ref.shape[1]
    n_taps = w5_ref.shape[1]                                   # 16
    z = jnp.dot(w_ref[...], cols_ref[...], preferred_element_type=jnp.float32)
    inv_m = 1.0 / z.shape[1]
    mu = jnp.sum(z, axis=1, keepdims=True) * inv_m
    var = jnp.maximum(jnp.sum(z * z, axis=1, keepdims=True) * inv_m - mu * mu, 0.0)
    scale = gb_ref[:, 0:1] * jax.lax.rsqrt(var + BN_EPS)
    shift = gb_ref[:, 1:2] - mu * scale
    y = z * scale + shift
    y = jnp.where(y >= 0, y, NEG_SLOPE * y)                    # (8F, 16*N)
    out = jnp.zeros((1, n), jnp.float32) + b5_ref[...]
    for p in range(n_taps):                                    # static taps
        out = out + jnp.sum(y[:, p * n:(p + 1) * n] * w5_ref[:, p:p + 1],
                            axis=0, keepdims=True)
    o_ref[...] = jax.nn.sigmoid(out).astype(o_ref.dtype)


# ---------------------------------------------------------------------------
# pallas_call wrappers
# ---------------------------------------------------------------------------
def _pick_tile_m(m, target):
    """Largest multiple-of-128 divisor of m that is <= target (or m itself)."""
    if m <= target:
        return m
    best = 0
    t = 128
    while t <= target:
        if m % t == 0:
            best = t
        t += 128
    # Fallback keeps correctness for awkward M (rare for DCGAN shapes).
    return best if best > 0 else m


def _conv_bias_leaky(w2d, cols, bias, *, target_tile_m=8192):
    c_out, k = w2d.shape
    _, m = cols.shape
    tile_m = _pick_tile_m(m, target_tile_m)
    return pl.pallas_call(
        _conv_bias_leaky_kernel,
        out_shape=jax.ShapeDtypeStruct((c_out, m), jnp.bfloat16),
        grid=(m // tile_m,),
        in_specs=[
            pl.BlockSpec((c_out, k), lambda i: (0, 0)),
            pl.BlockSpec((k, tile_m), lambda i: (0, i)),
            pl.BlockSpec((c_out, 1), lambda i: (0, 0)),
        ],
        out_specs=pl.BlockSpec((c_out, tile_m), lambda i: (0, i)),
        compiler_params=pltpu.CompilerParams(
            dimension_semantics=("parallel",),
            vmem_limit_bytes=VMEM_LIMIT_BYTES),
    )(w2d, cols, bias)


def _conv_bn_leaky(w2d, cols, gb, *, target_tile_m=2048):
    c_out, k = w2d.shape
    _, m = cols.shape
    tile_m = _pick_tile_m(m, target_tile_m)
    nt = m // tile_m
    return pl.pallas_call(
        _conv_bn_leaky_kernel,
        out_shape=jax.ShapeDtypeStruct((c_out, m), jnp.bfloat16),
        grid=(2, nt),
        in_specs=[
            pl.BlockSpec((c_out, k), lambda p, i: (0, 0)),
            # cols only needed in phase 0; stay on block 0 during phase 1
            pl.BlockSpec((k, tile_m), lambda p, i: (0, i * (1 - p))),
            pl.BlockSpec((c_out, 2), lambda p, i: (0, 0)),     # packed gamma/beta
        ],
        # output blocks written only in phase 1 (held at block 0 in phase 0)
        out_specs=pl.BlockSpec((c_out, tile_m), lambda p, i: (0, i * p)),
        scratch_shapes=[
            pltpu.VMEM((c_out, m), jnp.float32),               # f32 z staging
            pltpu.VMEM((c_out, 2), jnp.float32),               # sum / sum-of-sq
        ],
        compiler_params=pltpu.CompilerParams(
            dimension_semantics=("arbitrary", "arbitrary"),
            vmem_limit_bytes=VMEM_LIMIT_BYTES),
    )(w2d, cols, gb)


def _conv_bn_leaky_head(w2d, cols, gb, w5, b5):
    c_out, k = w2d.shape
    _, m = cols.shape
    n = m // w5.shape[1]
    return pl.pallas_call(
        _conv_bn_leaky_head_kernel,
        out_shape=jax.ShapeDtypeStruct((1, n), jnp.float32),
        grid=(1,),
        in_specs=[
            pl.BlockSpec((c_out, k), lambda i: (0, 0)),
            pl.BlockSpec((k, m), lambda i: (0, 0)),
            pl.BlockSpec((c_out, 2), lambda i: (0, 0)),
            pl.BlockSpec((c_out, w5.shape[1]), lambda i: (0, 0)),
            pl.BlockSpec((1, 1), lambda i: (0, 0)),
        ],
        out_specs=pl.BlockSpec((1, n), lambda i: (0, 0)),
        compiler_params=pltpu.CompilerParams(
            vmem_limit_bytes=VMEM_LIMIT_BYTES),
    )(w2d, cols, gb, w5, b5)


# ---------------------------------------------------------------------------
# JAX glue: channel-major im2col (rows ordered (c_in, i, j) to match
# PyTorch's weight.reshape(C_out, -1) column order)
# ---------------------------------------------------------------------------
def _im2col_T(x_cnhw, kh, kw, stride, pad, tap_major=False):
    """(C, N, H, W) -> cols (C*kh*kw, N*H_out*W_out), plus (H_out, W_out).

    Column ordering: sample-major (N, ho, wo) by default, or tap-major
    (ho, wo, N) when `tap_major=True` (used by the fused head).
    """
    c, n, h, w = x_cnhw.shape
    xp = jnp.pad(x_cnhw, ((0, 0), (0, 0), (pad, pad), (pad, pad)))
    ho = (h + 2 * pad - kh) // stride + 1
    wo = (w + 2 * pad - kw) // stride + 1
    taps = []
    for i in range(kh):
        for j in range(kw):
            taps.append(
                xp[:, :, i : i + stride * ho : stride, j : j + stride * wo : stride]
            )  # (C, N, ho, wo)
    cols = jnp.stack(taps, axis=1)                      # (C, kh*kw, N, ho, wo)
    if tap_major:
        cols = jnp.transpose(cols, (0, 1, 3, 4, 2))     # (C, kh*kw, ho, wo, N)
    return cols.reshape(c * kh * kw, n * ho * wo), ho, wo


# ---------------------------------------------------------------------------
# Discriminator
# ---------------------------------------------------------------------------
def init_params(key, channels, features):
    ks = jax.random.split(key, 10)
    p = {}

    def nrm(k, shape):  # deterministic small-scale init
        return 0.05 * jax.random.normal(k, shape, jnp.float32)

    p["c1_w"] = nrm(ks[0], (features, channels, 4, 4))
    p["c1_b"] = nrm(ks[1], (features,))
    p["b2_w"] = nrm(ks[2], (features * 2, features, 4, 4))
    p["b2_g"] = jnp.ones((features * 2,), jnp.float32)   # BN default: gamma=1
    p["b2_b"] = jnp.zeros((features * 2,), jnp.float32)  # BN default: beta=0
    p["b3_w"] = nrm(ks[4], (features * 4, features * 2, 4, 4))
    p["b3_g"] = jnp.ones((features * 4,), jnp.float32)
    p["b3_b"] = jnp.zeros((features * 4,), jnp.float32)
    p["b4_w"] = nrm(ks[6], (features * 8, features * 4, 4, 4))
    p["b4_g"] = jnp.ones((features * 8,), jnp.float32)
    p["b4_b"] = jnp.zeros((features * 8,), jnp.float32)
    p["c5_w"] = nrm(ks[8], (1, features * 8, 4, 4))
    p["c5_b"] = nrm(ks[9], (1,))
    return p


def discriminator_forward(params, x):
    """x: (N, C, H, W) float32 NCHW, as in PyTorch. Returns (N, 1, 1, 1)."""
    n = x.shape[0]
    # channel-major activations throughout; bf16 for the MXU operands
    a = jnp.transpose(x, (1, 0, 2, 3)).astype(jnp.bfloat16)   # (C, N, H, W)

    # Conv(C -> F, 4, 2, 1) + bias + LeakyReLU(0.2)   [M-tiled, parallel grid]
    w1 = params["c1_w"]
    f1 = w1.shape[0]
    cols, ho, wo = _im2col_T(a, 4, 4, 2, 1)
    a = _conv_bias_leaky(
        w1.reshape(f1, -1).astype(jnp.bfloat16),
        cols,
        params["c1_b"].reshape(f1, 1).astype(jnp.float32),
    ).reshape(f1, n, ho, wo)

    # _block(F,2F), _block(2F,4F): Conv(4,2,1,no bias)+BN(batch stats)+LeakyReLU
    for name in ("b2", "b3"):
        w = params[name + "_w"]
        c_out = w.shape[0]
        cols, ho, wo = _im2col_T(a, 4, 4, 2, 1)
        gb = jnp.stack([params[name + "_g"], params[name + "_b"]], axis=1)
        a = _conv_bn_leaky(
            w.reshape(c_out, -1).astype(jnp.bfloat16),
            cols,
            gb.astype(jnp.float32),
        ).reshape(c_out, n, ho, wo)

    # _block(4F,8F) fused with Conv(8F -> 1, 4, 2, 0) + Sigmoid (tap-major cols)
    w4 = params["b4_w"]
    c4 = w4.shape[0]
    cols, ho, wo = _im2col_T(a, 4, 4, 2, 1, tap_major=True)    # ho = wo = 4
    gb4 = jnp.stack([params["b4_g"], params["b4_b"]], axis=1).astype(jnp.float32)
    w5 = params["c5_w"].reshape(c4, ho * wo).astype(jnp.float32)   # (8F, 16)
    out = _conv_bn_leaky_head(
        w4.reshape(c4, -1).astype(jnp.bfloat16),
        cols,
        gb4,
        w5,
        params["c5_b"].reshape(1, 1).astype(jnp.float32),
    )                                                          # (1, N)
    return jnp.transpose(out).reshape(n, 1, 1, 1)


if __name__ == "__main__":
    channels, features = 3, 8
    batch, spatial = 2, 64  # 64 -> 32 -> 16 -> 8 -> 4 -> 1 (final valid 4x4 conv)

    key = jax.random.PRNGKey(0)
    k_x, k_p = jax.random.split(key)
    x = jax.random.normal(k_x, (batch, channels, spatial, spatial), jnp.float32)
    params = init_params(k_p, channels, features)

    out = jax.jit(discriminator_forward)(params, x)
    out = jax.block_until_ready(out)

    assert out.shape == (batch, 1, 1, 1), out.shape
    assert bool(jnp.all(jnp.isfinite(out)))
    assert bool(jnp.all((out >= 0.0) & (out <= 1.0)))  # sigmoid output range
    print("KERNEL_OK")
</pallas_src>

<mosaic_0001>
module attributes {stable_mosaic.version = 11 : i64} {
  func.func @_conv_bias_leaky_kernel(%arg0: i32, %arg1: memref<8x48xbf16, #tpu.memory_space<vmem>>, %arg2: memref<48x2048xbf16, #tpu.memory_space<vmem>>, %arg3: memref<8x1xf32, #tpu.memory_space<vmem>>, %arg4: memref<8x2048xbf16, #tpu.memory_space<vmem>>) attributes {dimension_semantics = [#tpu.dimension_semantics<parallel>], iteration_bounds = array<i64: 1>, scalar_prefetch = 0 : i64, scratch_operands = 0 : i64, tpu.core_type = #tpu.core_type<tc>, window_params = [{pipeline_mode = #tpu.pipeline_mode<synchronous>, transform_indices = @transform_0, window_bounds = array<i64: 8, 48>}, {transform_indices = @transform_1, window_bounds = array<i64: 48, 2048>}, {pipeline_mode = #tpu.pipeline_mode<synchronous>, transform_indices = @transform_2, window_bounds = array<i64: 8, 1>}, {transform_indices = @transform_3, window_bounds = array<i64: 8, 2048>}]} {
    %c0 = arith.constant 0 : index
    %c0_0 = arith.constant 0 : index
    %0 = vector.load %arg1[%c0, %c0_0] : memref<8x48xbf16, #tpu.memory_space<vmem>>, vector<8x48xbf16>
    %c0_1 = arith.constant 0 : index
    %c0_2 = arith.constant 0 : index
    %1 = vector.load %arg2[%c0_1, %c0_2] : memref<48x2048xbf16, #tpu.memory_space<vmem>>, vector<48x2048xbf16>
    %cst = arith.constant dense<0.000000e+00> : vector<8x2048xf32>
    %2 = tpu.matmul %0, %1, %cst {dimension_numbers = #tpu.dot_dimension_numbers<[1], [0], [0], [1], [0, 0, 1, 1], [], []>} : vector<8x48xbf16>, vector<48x2048xbf16>, vector<8x2048xf32> -> vector<8x2048xf32>
    %c0_3 = arith.constant 0 : index
    %c0_4 = arith.constant 0 : index
    %3 = vector.load %arg3[%c0_3, %c0_4] : memref<8x1xf32, #tpu.memory_space<vmem>>, vector<8x1xf32>
    %4 = vector.broadcast %3 : vector<8x1xf32> to vector<8x2048xf32>
    %5 = arith.addf %2, %4 : vector<8x2048xf32>
    %cst_5 = arith.constant 0.000000e+00 : f32
    %6 = vector.broadcast %cst_5 : f32 to vector<8x2048xf32>
    %7 = arith.cmpf oge, %5, %6 : vector<8x2048xf32>
    %cst_6 = arith.constant 2.000000e-01 : f32
    %8 = vector.broadcast %cst_6 : f32 to vector<8x2048xf32>
    %9 = arith.mulf %8, %5 : vector<8x2048xf32>
    %10 = arith.select %7, %5, %9 : vector<8x2048xi1>, vector<8x2048xf32>
    %11 = arith.truncf %10 : vector<8x2048xf32> to vector<8x2048xbf16>
    %c0_7 = arith.constant 0 : index
    %c0_8 = arith.constant 0 : index
    %12 = vector.load %arg4[%c0_7, %c0_8] : memref<8x2048xbf16, #tpu.memory_space<vmem>>, vector<8x2048xbf16>
    tpu.vector_store %arg4[%c0_7, %c0_8], %11 {strides = array<i32>} : memref<8x2048xbf16, #tpu.memory_space<vmem>>, vector<8x2048xbf16>,
    return
  }
  func.func @transform_0(%arg0: i32) -> (i32, i32) {
    %c0_i32 = arith.constant 0 : i32
    %c0_i32_0 = arith.constant 0 : i32
    %c0_i32_1 = arith.constant 0 : i32
    return %c0_i32, %c0_i32_0 : i32, i32
  }
  func.func @transform_1(%arg0: i32) -> (i32, i32) {
    %c0_i32 = arith.constant 0 : i32
    %c0_i32_0 = arith.constant 0 : i32
    return %c0_i32, %arg0 : i32, i32
  }
  func.func @transform_2(%arg0: i32) -> (i32, i32) {
    %c0_i32 = arith.constant 0 : i32
    %c0_i32_0 = arith.constant 0 : i32
    %c0_i32_1 = arith.constant 0 : i32
    return %c0_i32, %c0_i32_0 : i32, i32
  }
  func.func @transform_3(%arg0: i32) -> (i32, i32) {
    %c0_i32 = arith.constant 0 : i32
    %c0_i32_0 = arith.constant 0 : i32
    return %c0_i32, %arg0 : i32, i32
  }
}

module attributes {stable_mosaic.version = 11 : i64} {
  func.func @_conv_bn_leaky_kernel(%arg0: i32, %arg1: i32, %arg2: memref<16x128xbf16, #tpu.memory_space<vmem>>, %arg3: memref<128x512xbf16, #tpu.memory_space<vmem>>, %arg4: memref<16x2xf32, #tpu.memory_space<vmem>>, %arg5: memref<16x512xbf16, #tpu.memory_space<vmem>>, %arg6: memref<16x512xf32, #tpu.memory_space<vmem>>, %arg7: memref<16x2xf32, #tpu.memory_space<vmem>>) attributes {dimension_semantics = [#tpu.dimension_semantics<arbitrary>, #tpu.dimension_semantics<arbitrary>], iteration_bounds = array<i64: 2, 1>, scalar_prefetch = 0 : i64, scratch_operands = 2 : i64, tpu.core_type = #tpu.core_type<tc>, window_params = [{pipeline_mode = #tpu.pipeline_mode<synchronous>, transform_indices = @transform_0, window_bounds = array<i64: 16, 128>}, {transform_indices = @transform_1, window_bounds = array<i64: 128, 512>}, {pipeline_mode = #tpu.pipeline_mode<synchronous>, transform_indices = @transform_2, window_bounds = array<i64: 16, 2>}, {transform_indices = @transform_3, window_bounds = array<i64: 16, 512>}]} {
    %c0_i32 = arith.constant 0 : i32
    %0 = arith.cmpi eq, %arg0, %c0_i32 : i32
    %c0_i32_0 = arith.constant 0 : i32
    %1 = arith.cmpi eq, %arg1, %c0_i32_0 : i32
    %2 = arith.andi %0, %1 : i1
    %3 = arith.extui %2 : i1 to i32
    %c0_i32_1 = arith.constant 0 : i32
    %4 = arith.cmpi ne, %3, %c0_i32_1 : i32
    scf.if %4 {
      %cst = arith.constant 0.000000e+00 : f32
      %11 = vector.broadcast %cst : f32 to vector<16x2xf32>
      %c0 = arith.constant 0 : index
      %c0_5 = arith.constant 0 : index
      %12 = vector.load %arg7[%c0, %c0_5] : memref<16x2xf32, #tpu.memory_space<vmem>>, vector<16x2xf32>
      tpu.vector_store %arg7[%c0, %c0_5], %11 {strides = array<i32>} : memref<16x2xf32, #tpu.memory_space<vmem>>, vector<16x2xf32>,
    } else {
    }
    %c0_i32_2 = arith.constant 0 : i32
    %5 = arith.cmpi eq, %arg0, %c0_i32_2 : i32
    %6 = arith.extui %5 : i1 to i32
    %c0_i32_3 = arith.constant 0 : i32
    %7 = arith.cmpi ne, %6, %c0_i32_3 : i32
    scf.if %7 {
      %c0 = arith.constant 0 : index
      %c0_5 = arith.constant 0 : index
      %11 = vector.load %arg2[%c0, %c0_5] : memref<16x128xbf16, #tpu.memory_space<vmem>>, vector<16x128xbf16>
      %c0_6 = arith.constant 0 : index
      %c0_7 = arith.constant 0 : index
      %12 = vector.load %arg3[%c0_6, %c0_7] : memref<128x512xbf16, #tpu.memory_space<vmem>>, vector<128x512xbf16>
      %cst = arith.constant dense<0.000000e+00> : vector<16x512xf32>
      %13 = tpu.matmul %11, %12, %cst {dimension_numbers = #tpu.dot_dimension_numbers<[1], [0], [0], [1], [0, 0, 1, 1], [], []>} : vector<16x128xbf16>, vector<128x512xbf16>, vector<16x512xf32> -> vector<16x512xf32>
      %c512_i32 = arith.constant 512 : i32
      %14 = arith.muli %arg1, %c512_i32 : i32
      %15 = tpu.assume_multiple %14, 512 : i32
      %c0_8 = arith.constant 0 : index
      %16 = arith.index_cast %15 : i32 to index
      %17 = vector.load %arg6[%c0_8, %16] : memref<16x512xf32, #tpu.memory_space<vmem>>, vector<16x512xf32>
      tpu.vector_store %arg6[%c0_8, %16], %13 {strides = array<i32>} : memref<16x512xf32, #tpu.memory_space<vmem>>, vector<16x512xf32>,
      %c0_9 = arith.constant 0 : index
      %c0_10 = arith.constant 0 : index
      %18 = vector.load %arg7[%c0_9, %c0_10] : memref<16x2xf32, #tpu.memory_space<vmem>>, vector<16x1xf32>
      %cst_11 = arith.constant dense<0.000000e+00> : vector<16xf32>
      %19 = vector.multi_reduction <add>, %13, %cst_11 [1] : vector<16x512xf32> to vector<16xf32>
      %20 = vector.shape_cast %19 : vector<16xf32> to vector<16x1xf32>
      %21 = arith.addf %18, %20 : vector<16x1xf32>
      %c0_12 = arith.constant 0 : index
      %c0_13 = arith.constant 0 : index
      %22 = vector.load %arg7[%c0_12, %c0_13] : memref<16x2xf32, #tpu.memory_space<vmem>>, vector<16x1xf32>
      tpu.vector_store %arg7[%c0_12, %c0_13], %21 {strides = array<i32>} : memref<16x2xf32, #tpu.memory_space<vmem>>, vector<16x1xf32>,
      %c0_14 = arith.constant 0 : index
      %c1 = arith.constant 1 : index
      %23 = vector.load %arg7[%c0_14, %c1] : memref<16x2xf32, #tpu.memory_space<vmem>>, vector<16x1xf32>
      %24 = arith.mulf %13, %13 : vector<16x512xf32>
      %cst_15 = arith.constant dense<0.000000e+00> : vector<16xf32>
      %25 = vector.multi_reduction <add>, %24, %cst_15 [1] : vector<16x512xf32> to vector<16xf32>
      %26 = vector.shape_cast %25 : vector<16xf32> to vector<16x1xf32>
      %27 = arith.addf %23, %26 : vector<16x1xf32>
      %c0_16 = arith.constant 0 : index
      %c1_17 = arith.constant 1 : index
      %28 = vector.load %arg7[%c0_16, %c1_17] : memref<16x2xf32, #tpu.memory_space<vmem>>, vector<16x1xf32>
      tpu.vector_store %arg7[%c0_16, %c1_17], %27 {strides = array<i32>} : memref<16x2xf32, #tpu.memory_space<vmem>>, vector<16x1xf32>,
    } else {
    }
    %c1_i32 = arith.constant 1 : i32
    %8 = arith.cmpi eq, %arg0, %c1_i32 : i32
    %9 = arith.extui %8 : i1 to i32
    %c0_i32_4 = arith.constant 0 : i32
    %10 = arith.cmpi ne, %9, %c0_i32_4 : i32
    scf.if %10 {
      %c0 = arith.constant 0 : index
      %c0_5 = arith.constant 0 : index
      %11 = vector.load %arg7[%c0, %c0_5] : memref<16x2xf32, #tpu.memory_space<vmem>>, vector<16x1xf32>
      %cst = arith.constant 0.001953125 : f32
      %12 = vector.broadcast %cst : f32 to vector<16x1xf32>
      %13 = arith.mulf %11, %12 : vector<16x1xf32>
      %c0_6 = arith.constant 0 : index
      %c1 = arith.constant 1 : index
      %14 = vector.load %arg7[%c0_6, %c1] : memref<16x2xf32, #tpu.memory_space<vmem>>, vector<16x1xf32>
      %cst_7 = arith.constant 0.001953125 : f32
      %15 = vector.broadcast %cst_7 : f32 to vector<16x1xf32>
      %16 = arith.mulf %14, %15 : vector<16x1xf32>
      %17 = arith.mulf %13, %13 : vector<16x1xf32>
      %18 = arith.subf %16, %17 : vector<16x1xf32>
      %cst_8 = arith.constant 0.000000e+00 : f32
      %19 = vector.broadcast %cst_8 : f32 to vector<16x1xf32>
      %20 = arith.maximumf %18, %19 : vector<16x1xf32>
      %c0_9 = arith.constant 0 : index
      %c0_10 = arith.constant 0 : index
      %21 = vector.load %arg4[%c0_9, %c0_10] : memref<16x2xf32, #tpu.memory_space<vmem>>, vector<16x1xf32>
      %cst_11 = arith.constant 9.99999974E-6 : f32
      %22 = vector.broadcast %cst_11 : f32 to vector<16x1xf32>
      %23 = arith.addf %20, %22 : vector<16x1xf32>
      %24 = math.rsqrt %23 : vector<16x1xf32>
      %25 = arith.mulf %21, %24 : vector<16x1xf32>
      %c0_12 = arith.constant 0 : index
      %c1_13 = arith.constant 1 : index
      %26 = vector.load %arg4[%c0_12, %c1_13] : memref<16x2xf32, #tpu.memory_space<vmem>>, vector<16x1xf32>
      %27 = arith.mulf %13, %25 : vector<16x1xf32>
      %28 = arith.subf %26, %27 : vector<16x1xf32>
      %c512_i32 = arith.constant 512 : i32
      %29 = arith.muli %arg1, %c512_i32 : i32
      %30 = tpu.assume_multiple %29, 512 : i32
      %c0_14 = arith.constant 0 : index
      %31 = arith.index_cast %30 : i32 to index
      %32 = vector.load %arg6[%c0_14, %31] : memref<16x512xf32, #tpu.memory_space<vmem>>, vector<16x512xf32>
      %33 = vector.broadcast %25 : vector<16x1xf32> to vector<16x512xf32>
      %34 = arith.mulf %32, %33 : vector<16x512xf32>
      %35 = vector.broadcast %28 : vector<16x1xf32> to vector<16x512xf32>
      %36 = arith.addf %34, %35 : vector<16x512xf32>
      %cst_15 = arith.constant 0.000000e+00 : f32
      %37 = vector.broadcast %cst_15 : f32 to vector<16x512xf32>
      %38 = arith.cmpf oge, %36, %37 : vector<16x512xf32>
      %cst_16 = arith.constant 2.000000e-01 : f32
      %39 = vector.broadcast %cst_16 : f32 to vector<16x512xf32>
      %40 = arith.mulf %39, %36 : vector<16x512xf32>
      %41 = arith.select %38, %36, %40 : vector<16x512xi1>, vector<16x512xf32>
      %42 = arith.truncf %41 : vector<16x512xf32> to vector<16x512xbf16>
      %c0_17 = arith.constant 0 : index
      %c0_18 = arith.constant 0 : index
      %43 = vector.load %arg5[%c0_17, %c0_18] : memref<16x512xbf16, #tpu.memory_space<vmem>>, vector<16x512xbf16>
      tpu.vector_store %arg5[%c0_17, %c0_18], %42 {strides = array<i32>} : memref<16x512xbf16, #tpu.memory_space<vmem>>, vector<16x512xbf16>,
    } else {
    }
    return
  }
  func.func @transform_0(%arg0: i32, %arg1: i32) -> (i32, i32) {
    %c0_i32 = arith.constant 0 : i32
    %c0_i32_0 = arith.constant 0 : i32
    %c0_i32_1 = arith.constant 0 : i32
    return %c0_i32, %c0_i32_0 : i32, i32
  }
  func.func @transform_1(%arg0: i32, %arg1: i32) -> (i32, i32) {
    %c1_i32 = arith.constant 1 : i32
    %0 = arith.subi %c1_i32, %arg0 : i32
    %1 = arith.muli %arg1, %0 : i32
    %c0_i32 = arith.constant 0 : i32
    %c0_i32_0 = arith.constant 0 : i32
    return %c0_i32, %1 : i32, i32
  }
  func.func @transform_2(%arg0: i32, %arg1: i32) -> (i32, i32) {
    %c0_i32 = arith.constant 0 : i32
    %c0_i32_0 = arith.constant 0 : i32
    %c0_i32_1 = arith.constant 0 : i32
    return %c0_i32, %c0_i32_0 : i32, i32
  }
  func.func @transform_3(%arg0: i32, %arg1: i32) -> (i32, i32) {
    %0 = arith.muli %arg1, %arg0 : i32
    %c0_i32 = arith.constant 0 : i32
    %c0_i32_0 = arith.constant 0 : i32
    return %c0_i32, %0 : i32, i32
  }
}

module attributes {stable_mosaic.version = 11 : i64} {
  func.func @_conv_bn_leaky_kernel(%arg0: i32, %arg1: i32, %arg2: memref<32x256xbf16, #tpu.memory_space<vmem>>, %arg3: memref<256x128xbf16, #tpu.memory_space<vmem>>, %arg4: memref<32x2xf32, #tpu.memory_space<vmem>>, %arg5: memref<32x128xbf16, #tpu.memory_space<vmem>>, %arg6: memref<32x128xf32, #tpu.memory_space<vmem>>, %arg7: memref<32x2xf32, #tpu.memory_space<vmem>>) attributes {dimension_semantics = [#tpu.dimension_semantics<arbitrary>, #tpu.dimension_semantics<arbitrary>], iteration_bounds = array<i64: 2, 1>, scalar_prefetch = 0 : i64, scratch_operands = 2 : i64, tpu.core_type = #tpu.core_type<tc>, window_params = [{pipeline_mode = #tpu.pipeline_mode<synchronous>, transform_indices = @transform_0, window_bounds = array<i64: 32, 256>}, {transform_indices = @transform_1, window_bounds = array<i64: 256, 128>}, {pipeline_mode = #tpu.pipeline_mode<synchronous>, transform_indices = @transform_2, window_bounds = array<i64: 32, 2>}, {transform_indices = @transform_3, window_bounds = array<i64: 32, 128>}]} {
    %c0_i32 = arith.constant 0 : i32
    %0 = arith.cmpi eq, %arg0, %c0_i32 : i32
    %c0_i32_0 = arith.constant 0 : i32
    %1 = arith.cmpi eq, %arg1, %c0_i32_0 : i32
    %2 = arith.andi %0, %1 : i1
    %3 = arith.extui %2 : i1 to i32
    %c0_i32_1 = arith.constant 0 : i32
    %4 = arith.cmpi ne, %3, %c0_i32_1 : i32
    scf.if %4 {
      %cst = arith.constant 0.000000e+00 : f32
      %11 = vector.broadcast %cst : f32 to vector<32x2xf32>
      %c0 = arith.constant 0 : index
      %c0_5 = arith.constant 0 : index
      %12 = vector.load %arg7[%c0, %c0_5] : memref<32x2xf32, #tpu.memory_space<vmem>>, vector<32x2xf32>
      tpu.vector_store %arg7[%c0, %c0_5], %11 {strides = array<i32>} : memref<32x2xf32, #tpu.memory_space<vmem>>, vector<32x2xf32>,
    } else {
    }
    %c0_i32_2 = arith.constant 0 : i32
    %5 = arith.cmpi eq, %arg0, %c0_i32_2 : i32
    %6 = arith.extui %5 : i1 to i32
    %c0_i32_3 = arith.constant 0 : i32
    %7 = arith.cmpi ne, %6, %c0_i32_3 : i32
    scf.if %7 {
      %c0 = arith.constant 0 : index
      %c0_5 = arith.constant 0 : index
      %11 = vector.load %arg2[%c0, %c0_5] : memref<32x256xbf16, #tpu.memory_space<vmem>>, vector<32x256xbf16>
      %c0_6 = arith.constant 0 : index
      %c0_7 = arith.constant 0 : index
      %12 = vector.load %arg3[%c0_6, %c0_7] : memref<256x128xbf16, #tpu.memory_space<vmem>>, vector<256x128xbf16>
      %cst = arith.constant dense<0.000000e+00> : vector<32x128xf32>
      %13 = tpu.matmul %11, %12, %cst {dimension_numbers = #tpu.dot_dimension_numbers<[1], [0], [0], [1], [0, 0, 1, 1], [], []>} : vector<32x256xbf16>, vector<256x128xbf16>, vector<32x128xf32> -> vector<32x128xf32>
      %c128_i32 = arith.constant 128 : i32
      %14 = arith.muli %arg1, %c128_i32 : i32
      %15 = tpu.assume_multiple %14, 128 : i32
      %c0_8 = arith.constant 0 : index
      %16 = arith.index_cast %15 : i32 to index
      %17 = vector.load %arg6[%c0_8, %16] : memref<32x128xf32, #tpu.memory_space<vmem>>, vector<32x128xf32>
      tpu.vector_store %arg6[%c0_8, %16], %13 {strides = array<i32>} : memref<32x128xf32, #tpu.memory_space<vmem>>, vector<32x128xf32>,
      %c0_9 = arith.constant 0 : index
      %c0_10 = arith.constant 0 : index
      %18 = vector.load %arg7[%c0_9, %c0_10] : memref<32x2xf32, #tpu.memory_space<vmem>>, vector<32x1xf32>
      %cst_11 = arith.constant dense<0.000000e+00> : vector<32xf32>
      %19 = vector.multi_reduction <add>, %13, %cst_11 [1] : vector<32x128xf32> to vector<32xf32>
      %20 = vector.shape_cast %19 : vector<32xf32> to vector<32x1xf32>
      %21 = arith.addf %18, %20 : vector<32x1xf32>
      %c0_12 = arith.constant 0 : index
      %c0_13 = arith.constant 0 : index
      %22 = vector.load %arg7[%c0_12, %c0_13] : memref<32x2xf32, #tpu.memory_space<vmem>>, vector<32x1xf32>
      tpu.vector_store %arg7[%c0_12, %c0_13], %21 {strides = array<i32>} : memref<32x2xf32, #tpu.memory_space<vmem>>, vector<32x1xf32>,
      %c0_14 = arith.constant 0 : index
      %c1 = arith.constant 1 : index
      %23 = vector.load %arg7[%c0_14, %c1] : memref<32x2xf32, #tpu.memory_space<vmem>>, vector<32x1xf32>
      %24 = arith.mulf %13, %13 : vector<32x128xf32>
      %cst_15 = arith.constant dense<0.000000e+00> : vector<32xf32>
      %25 = vector.multi_reduction <add>, %24, %cst_15 [1] : vector<32x128xf32> to vector<32xf32>
      %26 = vector.shape_cast %25 : vector<32xf32> to vector<32x1xf32>
      %27 = arith.addf %23, %26 : vector<32x1xf32>
      %c0_16 = arith.constant 0 : index
      %c1_17 = arith.constant 1 : index
      %28 = vector.load %arg7[%c0_16, %c1_17] : memref<32x2xf32, #tpu.memory_space<vmem>>, vector<32x1xf32>
      tpu.vector_store %arg7[%c0_16, %c1_17], %27 {strides = array<i32>} : memref<32x2xf32, #tpu.memory_space<vmem>>, vector<32x1xf32>,
    } else {
    }
    %c1_i32 = arith.constant 1 : i32
    %8 = arith.cmpi eq, %arg0, %c1_i32 : i32
    %9 = arith.extui %8 : i1 to i32
    %c0_i32_4 = arith.constant 0 : i32
    %10 = arith.cmpi ne, %9, %c0_i32_4 : i32
    scf.if %10 {
      %c0 = arith.constant 0 : index
      %c0_5 = arith.constant 0 : index
      %11 = vector.load %arg7[%c0, %c0_5] : memref<32x2xf32, #tpu.memory_space<vmem>>, vector<32x1xf32>
      %cst = arith.constant 7.812500e-03 : f32
      %12 = vector.broadcast %cst : f32 to vector<32x1xf32>
      %13 = arith.mulf %11, %12 : vector<32x1xf32>
      %c0_6 = arith.constant 0 : index
      %c1 = arith.constant 1 : index
      %14 = vector.load %arg7[%c0_6, %c1] : memref<32x2xf32, #tpu.memory_space<vmem>>, vector<32x1xf32>
      %cst_7 = arith.constant 7.812500e-03 : f32
      %15 = vector.broadcast %cst_7 : f32 to vector<32x1xf32>
      %16 = arith.mulf %14, %15 : vector<32x1xf32>
      %17 = arith.mulf %13, %13 : vector<32x1xf32>
      %18 = arith.subf %16, %17 : vector<32x1xf32>
      %cst_8 = arith.constant 0.000000e+00 : f32
      %19 = vector.broadcast %cst_8 : f32 to vector<32x1xf32>
      %20 = arith.maximumf %18, %19 : vector<32x1xf32>
      %c0_9 = arith.constant 0 : index
      %c0_10 = arith.constant 0 : index
      %21 = vector.load %arg4[%c0_9, %c0_10] : memref<32x2xf32, #tpu.memory_space<vmem>>, vector<32x1xf32>
      %cst_11 = arith.constant 9.99999974E-6 : f32
      %22 = vector.broadcast %cst_11 : f32 to vector<32x1xf32>
      %23 = arith.addf %20, %22 : vector<32x1xf32>
      %24 = math.rsqrt %23 : vector<32x1xf32>
      %25 = arith.mulf %21, %24 : vector<32x1xf32>
      %c0_12 = arith.constant 0 : index
      %c1_13 = arith.constant 1 : index
      %26 = vector.load %arg4[%c0_12, %c1_13] : memref<32x2xf32, #tpu.memory_space<vmem>>, vector<32x1xf32>
      %27 = arith.mulf %13, %25 : vector<32x1xf32>
      %28 = arith.subf %26, %27 : vector<32x1xf32>
      %c128_i32 = arith.constant 128 : i32
      %29 = arith.muli %arg1, %c128_i32 : i32
      %30 = tpu.assume_multiple %29, 128 : i32
      %c0_14 = arith.constant 0 : index
      %31 = arith.index_cast %30 : i32 to index
      %32 = vector.load %arg6[%c0_14, %31] : memref<32x128xf32, #tpu.memory_space<vmem>>, vector<32x128xf32>
      %33 = vector.broadcast %25 : vector<32x1xf32> to vector<32x128xf32>
      %34 = arith.mulf %32, %33 : vector<32x128xf32>
      %35 = vector.broadcast %28 : vector<32x1xf32> to vector<32x128xf32>
      %36 = arith.addf %34, %35 : vector<32x128xf32>
      %cst_15 = arith.constant 0.000000e+00 : f32
      %37 = vector.broadcast %cst_15 : f32 to vector<32x128xf32>
      %38 = arith.cmpf oge, %36, %37 : vector<32x128xf32>
      %cst_16 = arith.constant 2.000000e-01 : f32
      %39 = vector.broadcast %cst_16 : f32 to vector<32x128xf32>
      %40 = arith.mulf %39, %36 : vector<32x128xf32>
      %41 = arith.select %38, %36, %40 : vector<32x128xi1>, vector<32x128xf32>
      %42 = arith.truncf %41 : vector<32x128xf32> to vector<32x128xbf16>
      %c0_17 = arith.constant 0 : index
      %c0_18 = arith.constant 0 : index
      %43 = vector.load %arg5[%c0_17, %c0_18] : memref<32x128xbf16, #tpu.memory_space<vmem>>, vector<32x128xbf16>
      tpu.vector_store %arg5[%c0_17, %c0_18], %42 {strides = array<i32>} : memref<32x128xbf16, #tpu.memory_space<vmem>>, vector<32x128xbf16>,
    } else {
    }
    return
  }
  func.func @transform_0(%arg0: i32, %arg1: i32) -> (i32, i32) {
    %c0_i32 = arith.constant 0 : i32
    %c0_i32_0 = arith.constant 0 : i32
    %c0_i32_1 = arith.constant 0 : i32
    return %c0_i32, %c0_i32_0 : i32, i32
  }
  func.func @transform_1(%arg0: i32, %arg1: i32) -> (i32, i32) {
    %c1_i32 = arith.constant 1 : i32
    %0 = arith.subi %c1_i32, %arg0 : i32
    %1 = arith.muli %arg1, %0 : i32
    %c0_i32 = arith.constant 0 : i32
    %c0_i32_0 = arith.constant 0 : i32
    return %c0_i32, %1 : i32, i32
  }
  func.func @transform_2(%arg0: i32, %arg1: i32) -> (i32, i32) {
    %c0_i32 = arith.constant 0 : i32
    %c0_i32_0 = arith.constant 0 : i32
    %c0_i32_1 = arith.constant 0 : i32
    return %c0_i32, %c0_i32_0 : i32, i32
  }
  func.func @transform_3(%arg0: i32, %arg1: i32) -> (i32, i32) {
    %0 = arith.muli %arg1, %arg0 : i32
    %c0_i32 = arith.constant 0 : i32
    %c0_i32_0 = arith.constant 0 : i32
    return %c0_i32, %0 : i32, i32
  }
}

module attributes {stable_mosaic.version = 11 : i64} {
  func.func @_conv_bn_leaky_head_kernel(%arg0: i32, %arg1: memref<64x512xbf16, #tpu.memory_space<vmem>>, %arg2: memref<512x32xbf16, #tpu.memory_space<vmem>>, %arg3: memref<64x2xf32, #tpu.memory_space<vmem>>, %arg4: memref<64x16xf32, #tpu.memory_space<vmem>>, %arg5: memref<1x1xf32, #tpu.memory_space<vmem>>, %arg6: memref<1x2xf32, #tpu.memory_space<vmem>>) attributes {dimension_semantics = [#tpu.dimension_semantics<arbitrary>], iteration_bounds = array<i64: 1>, scalar_prefetch = 0 : i64, scratch_operands = 0 : i64, tpu.core_type = #tpu.core_type<tc>, window_params = [{pipeline_mode = #tpu.pipeline_mode<synchronous>, transform_indices = @transform_0, window_bounds = array<i64: 64, 512>}, {pipeline_mode = #tpu.pipeline_mode<synchronous>, transform_indices = @transform_1, window_bounds = array<i64: 512, 32>}, {pipeline_mode = #tpu.pipeline_mode<synchronous>, transform_indices = @transform_2, window_bounds = array<i64: 64, 2>}, {pipeline_mode = #tpu.pipeline_mode<synchronous>, transform_indices = @transform_3, window_bounds = array<i64: 64, 16>}, {pipeline_mode = #tpu.pipeline_mode<synchronous>, transform_indices = @transform_4, window_bounds = array<i64: 1, 1>}, {pipeline_mode = #tpu.pipeline_mode<synchronous>, transform_indices = @transform_5, window_bounds = array<i64: 1, 2>}]} {
    %c0 = arith.constant 0 : index
    %c0_0 = arith.constant 0 : index
    %0 = vector.load %arg1[%c0, %c0_0] : memref<64x512xbf16, #tpu.memory_space<vmem>>, vector<64x512xbf16>
    %c0_1 = arith.constant 0 : index
    %c0_2 = arith.constant 0 : index
    %1 = vector.load %arg2[%c0_1, %c0_2] : memref<512x32xbf16, #tpu.memory_space<vmem>>, vector<512x32xbf16>
    %cst = arith.constant dense<0.000000e+00> : vector<64x32xf32>
    %2 = tpu.matmul %0, %1, %cst {dimension_numbers = #tpu.dot_dimension_numbers<[1], [0], [0], [1], [0, 0, 1, 1], [], []>} : vector<64x512xbf16>, vector<512x32xbf16>, vector<64x32xf32> -> vector<64x32xf32>
    %cst_3 = arith.constant dense<0.000000e+00> : vector<64xf32>
    %3 = vector.multi_reduction <add>, %2, %cst_3 [1] : vector<64x32xf32> to vector<64xf32>
    %4 = vector.shape_cast %3 : vector<64xf32> to vector<64x1xf32>
    %cst_4 = arith.constant 3.125000e-02 : f32
    %5 = vector.broadcast %cst_4 : f32 to vector<64x1xf32>
    %6 = arith.mulf %4, %5 : vector<64x1xf32>
    %7 = arith.mulf %2, %2 : vector<64x32xf32>
    %cst_5 = arith.constant dense<0.000000e+00> : vector<64xf32>
    %8 = vector.multi_reduction <add>, %7, %cst_5 [1] : vector<64x32xf32> to vector<64xf32>
    %9 = vector.shape_cast %8 : vector<64xf32> to vector<64x1xf32>
    %cst_6 = arith.constant 3.125000e-02 : f32
    %10 = vector.broadcast %cst_6 : f32 to vector<64x1xf32>
    %11 = arith.mulf %9, %10 : vector<64x1xf32>
    %12 = arith.mulf %6, %6 : vector<64x1xf32>
    %13 = arith.subf %11, %12 : vector<64x1xf32>
    %cst_7 = arith.constant 0.000000e+00 : f32
    %14 = vector.broadcast %cst_7 : f32 to vector<64x1xf32>
    %15 = arith.maximumf %13, %14 : vector<64x1xf32>
    %c0_8 = arith.constant 0 : index
    %c0_9 = arith.constant 0 : index
    %16 = vector.load %arg3[%c0_8, %c0_9] : memref<64x2xf32, #tpu.memory_space<vmem>>, vector<64x1xf32>
    %cst_10 = arith.constant 9.99999974E-6 : f32
    %17 = vector.broadcast %cst_10 : f32 to vector<64x1xf32>
    %18 = arith.addf %15, %17 : vector<64x1xf32>
    %19 = math.rsqrt %18 : vector<64x1xf32>
    %20 = arith.mulf %16, %19 : vector<64x1xf32>
    %c0_11 = arith.constant 0 : index
    %c1 = arith.constant 1 : index
    %21 = vector.load %arg3[%c0_11, %c1] : memref<64x2xf32, #tpu.memory_space<vmem>>, vector<64x1xf32>
    %22 = arith.mulf %6, %20 : vector<64x1xf32>
    %23 = arith.subf %21, %22 : vector<64x1xf32>
    %24 = vector.broadcast %20 : vector<64x1xf32> to vector<64x32xf32>
    %25 = arith.mulf %2, %24 : vector<64x32xf32>
    %26 = vector.broadcast %23 : vector<64x1xf32> to vector<64x32xf32>
    %27 = arith.addf %25, %26 : vector<64x32xf32>
    %cst_12 = arith.constant 0.000000e+00 : f32
    %28 = vector.broadcast %cst_12 : f32 to vector<64x32xf32>
    %29 = arith.cmpf oge, %27, %28 : vector<64x32xf32>
    %cst_13 = arith.constant 2.000000e-01 : f32
    %30 = vector.broadcast %cst_13 : f32 to vector<64x32xf32>
    %31 = arith.mulf %30, %27 : vector<64x32xf32>
    %32 = arith.select %29, %27, %31 : vector<64x32xi1>, vector<64x32xf32>
    %cst_14 = arith.constant 0.000000e+00 : f32
    %33 = vector.broadcast %cst_14 : f32 to vector<1x2xf32>
    %c0_15 = arith.constant 0 : index
    %c0_16 = arith.constant 0 : index
    %34 = vector.load %arg5[%c0_15, %c0_16] : memref<1x1xf32, #tpu.memory_space<vmem>>, vector<1x1xf32>
    %35 = vector.broadcast %34 : vector<1x1xf32> to vector<1x2xf32>
    %36 = arith.addf %33, %35 : vector<1x2xf32>
    %37 = vector.extract_strided_slice %32 {offsets = [0, 0], sizes = [64, 2], strides = [1, 1]} : vector<64x32xf32> to vector<64x2xf32>
    %c0_17 = arith.constant 0 : index
    %c0_18 = arith.constant 0 : index
    %38 = vector.load %arg4[%c0_17, %c0_18] : memref<64x16xf32, #tpu.memory_space<vmem>>, vector<64x1xf32>
    %39 = vector.broadcast %38 : vector<64x1xf32> to vector<64x2xf32>
    %40 = arith.mulf %37, %39 : vector<64x2xf32>
    %cst_19 = arith.constant dense<0.000000e+00> : vector<2xf32>
    %41 = vector.multi_reduction <add>, %40, %cst_19 [0] : vector<64x2xf32> to vector<2xf32>
    %42 = vector.shape_cast %41 : vector<2xf32> to vector<1x2xf32>
    %43 = arith.addf %36, %42 : vector<1x2xf32>
    %44 = vector.extract_strided_slice %32 {offsets = [0, 2], sizes = [64, 2], strides = [1, 1]} : vector<64x32xf32> to vector<64x2xf32>
    %c0_20 = arith.constant 0 : index
    %c1_21 = arith.constant 1 : index
    %45 = vector.load %arg4[%c0_20, %c1_21] : memref<64x16xf32, #tpu.memory_space<vmem>>, vector<64x1xf32>
    %46 = vector.broadcast %45 : vector<64x1xf32> to vector<64x2xf32>
    %47 = arith.mulf %44, %46 : vector<64x2xf32>
    %cst_22 = arith.constant dense<0.000000e+00> : vector<2xf32>
    %48 = vector.multi_reduction <add>, %47, %cst_22 [0] : vector<64x2xf32> to vector<2xf32>
    %49 = vector.shape_cast %48 : vector<2xf32> to vector<1x2xf32>
    %50 = arith.addf %43, %49 : vector<1x2xf32>
    %51 = vector.extract_strided_slice %32 {offsets = [0, 4], sizes = [64, 2], strides = [1, 1]} : vector<64x32xf32> to vector<64x2xf32>
    %c0_23 = arith.constant 0 : index
    %c2 = arith.constant 2 : index
    %52 = vector.load %arg4[%c0_23, %c2] : memref<64x16xf32, #tpu.memory_space<vmem>>, vector<64x1xf32>
    %53 = vector.broadcast %52 : vector<64x1xf32> to vector<64x2xf32>
    %54 = arith.mulf %51, %53 : vector<64x2xf32>
    %cst_24 = arith.constant dense<0.000000e+00> : vector<2xf32>
    %55 = vector.multi_reduction <add>, %54, %cst_24 [0] : vector<64x2xf32> to vector<2xf32>
    %56 = vector.shape_cast %55 : vector<2xf32> to vector<1x2xf32>
    %57 = arith.addf %50, %56 : vector<1x2xf32>
    %58 = vector.extract_strided_slice %32 {offsets = [0, 6], sizes = [64, 2], strides = [1, 1]} : vector<64x32xf32> to vector<64x2xf32>
    %c0_25 = arith.constant 0 : index
    %c3 = arith.constant 3 : index
    %59 = vector.load %arg4[%c0_25, %c3] : memref<64x16xf32, #tpu.memory_space<vmem>>, vector<64x1xf32>
    %60 = vector.broadcast %59 : vector<64x1xf32> to vector<64x2xf32>
    %61 = arith.mulf %58, %60 : vector<64x2xf32>
    %cst_26 = arith.constant dense<0.000000e+00> : vector<2xf32>
    %62 = vector.multi_reduction <add>, %61, %cst_26 [0] : vector<64x2xf32> to vector<2xf32>
    %63 = vector.shape_cast %62 : vector<2xf32> to vector<1x2xf32>
    %64 = arith.addf %57, %63 : vector<1x2xf32>
    %65 = vector.extract_strided_slice %32 {offsets = [0, 8], sizes = [64, 2], strides = [1, 1]} : vector<64x32xf32> to vector<64x2xf32>
    %c0_27 = arith.constant 0 : index
    %c4 = arith.constant 4 : index
    %66 = vector.load %arg4[%c0_27, %c4] : memref<64x16xf32, #tpu.memory_space<vmem>>, vector<64x1xf32>
    %67 = vector.broadcast %66 : vector<64x1xf32> to vector<64x2xf32>
    %68 = arith.mulf %65, %67 : vector<64x2xf32>
    %cst_28 = arith.constant dense<0.000000e+00> : vector<2xf32>
    %69 = vector.multi_reduction <add>, %68, %cst_28 [0] : vector<64x2xf32> to vector<2xf32>
    %70 = vector.shape_cast %69 : vector<2xf32> to vector<1x2xf32>
    %71 = arith.addf %64, %70 : vector<1x2xf32>
    %72 = vector.extract_strided_slice %32 {offsets = [0, 10], sizes = [64, 2], strides = [1, 1]} : vector<64x32xf32> to vector<64x2xf32>
    %c0_29 = arith.constant 0 : index
    %c5 = arith.constant 5 : index
    %73 = vector.load %arg4[%c0_29, %c5] : memref<64x16xf32, #tpu.memory_space<vmem>>, vector<64x1xf32>
    %74 = vector.broadcast %73 : vector<64x1xf32> to vector<64x2xf32>
    %75 = arith.mulf %72, %74 : vector<64x2xf32>
    %cst_30 = arith.constant dense<0.000000e+00> : vector<2xf32>
    %76 = vector.multi_reduction <add>, %75, %cst_30 [0] : vector<64x2xf32> to vector<2xf32>
    %77 = vector.shape_cast %76 : vector<2xf32> to vector<1x2xf32>
    %78 = arith.addf %71, %77 : vector<1x2xf32>
    %79 = vector.extract_strided_slice %32 {offsets = [0, 12], sizes = [64, 2], strides = [1, 1]} : vector<64x32xf32> to vector<64x2xf32>
    %c0_31 = arith.constant 0 : index
    %c6 = arith.constant 6 : index
    %80 = vector.load %arg4[%c0_31, %c6] : memref<64x16xf32, #tpu.memory_space<vmem>>, vector<64x1xf32>
    %81 = vector.broadcast %80 : vector<64x1xf32> to vector<64x2xf32>
    %82 = arith.mulf %79, %81 : vector<64x2xf32>
    %cst_32 = arith.constant dense<0.000000e+00> : vector<2xf32>
    %83 = vector.multi_reduction <add>, %82, %cst_32 [0] : vector<64x2xf32> to vector<2xf32>
    %84 = vector.shape_cast %83 : vector<2xf32> to vector<1x2xf32>
    %85 = arith.addf %78, %84 : vector<1x2xf32>
    %86 = vector.extract_strided_slice %32 {offsets = [0, 14], sizes = [64, 2], strides = [1, 1]} : vector<64x32xf32> to vector<64x2xf32>
    %c0_33 = arith.constant 0 : index
    %c7 = arith.constant 7 : index
    %87 = vector.load %arg4[%c0_33, %c7] : memref<64x16xf32, #tpu.memory_space<vmem>>, vector<64x1xf32>
    %88 = vector.broadcast %87 : vector<64x1xf32> to vector<64x2xf32>
    %89 = arith.mulf %86, %88 : vector<64x2xf32>
    %cst_34 = arith.constant dense<0.000000e+00> : vector<2xf32>
    %90 = vector.multi_reduction <add>, %89, %cst_34 [0] : vector<64x2xf32> to vector<2xf32>
    %91 = vector.shape_cast %90 : vector<2xf32> to vector<1x2xf32>
    %92 = arith.addf %85, %91 : vector<1x2xf32>
    %93 = vector.extract_strided_slice %32 {offsets = [0, 16], sizes = [64, 2], strides = [1, 1]} : vector<64x32xf32> to vector<64x2xf32>
    %c0_35 = arith.constant 0 : index
    %c8 = arith.constant 8 : index
    %94 = vector.load %arg4[%c0_35, %c8] : memref<64x16xf32, #tpu.memory_space<vmem>>, vector<64x1xf32>
    %95 = vector.broadcast %94 : vector<64x1xf32> to vector<64x2xf32>
    %96 = arith.mulf %93, %95 : vector<64x2xf32>
    %cst_36 = arith.constant dense<0.000000e+00> : vector<2xf32>
    %97 = vector.multi_reduction <add>, %96, %cst_36 [0] : vector<64x2xf32> to vector<2xf32>
    %98 = vector.shape_cast %97 : vector<2xf32> to vector<1x2xf32>
    %99 = arith.addf %92, %98 : vector<1x2xf32>
    %100 = vector.extract_strided_slice %32 {offsets = [0, 18], sizes = [64, 2], strides = [1, 1]} : vector<64x32xf32> to vector<64x2xf32>
    %c0_37 = arith.constant 0 : index
    %c9 = arith.constant 9 : index
    %101 = vector.load %arg4[%c0_37, %c9] : memref<64x16xf32, #tpu.memory_space<vmem>>, vector<64x1xf32>
    %102 = vector.broadcast %101 : vector<64x1xf32> to vector<64x2xf32>
    %103 = arith.mulf %100, %102 : vector<64x2xf32>
    %cst_38 = arith.constant dense<0.000000e+00> : vector<2xf32>
    %104 = vector.multi_reduction <add>, %103, %cst_38 [0] : vector<64x2xf32> to vector<2xf32>
    %105 = vector.shape_cast %104 : vector<2xf32> to vector<1x2xf32>
    %106 = arith.addf %99, %105 : vector<1x2xf32>
    %107 = vector.extract_strided_slice %32 {offsets = [0, 20], sizes = [64, 2], strides = [1, 1]} : vector<64x32xf32> to vector<64x2xf32>
    %c0_39 = arith.constant 0 : index
    %c10 = arith.constant 10 : index
    %108 = vector.load %arg4[%c0_39, %c10] : memref<64x16xf32, #tpu.memory_space<vmem>>, vector<64x1xf32>
    %109 = vector.broadcast %108 : vector<64x1xf32> to vector<64x2xf32>
    %110 = arith.mulf %107, %109 : vector<64x2xf32>
    %cst_40 = arith.constant dense<0.000000e+00> : vector<2xf32>
    %111 = vector.multi_reduction <add>, %110, %cst_40 [0] : vector<64x2xf32> to vector<2xf32>
    %112 = vector.shape_cast %111 : vector<2xf32> to vector<1x2xf32>
    %113 = arith.addf %106, %112 : vector<1x2xf32>
    %114 = vector.extract_strided_slice %32 {offsets = [0, 22], sizes = [64, 2], strides = [1, 1]} : vector<64x32xf32> to vector<64x2xf32>
    %c0_41 = arith.constant 0 : index
    %c11 = arith.constant 11 : index
    %115 = vector.load %arg4[%c0_41, %c11] : memref<64x16xf32, #tpu.memory_space<vmem>>, vector<64x1xf32>
    %116 = vector.broadcast %115 : vector<64x1xf32> to vector<64x2xf32>
    %117 = arith.mulf %114, %116 : vector<64x2xf32>
    %cst_42 = arith.constant dense<0.000000e+00> : vector<2xf32>
    %118 = vector.multi_reduction <add>, %117, %cst_42 [0] : vector<64x2xf32> to vector<2xf32>
    %119 = vector.shape_cast %118 : vector<2xf32> to vector<1x2xf32>
    %120 = arith.addf %113, %119 : vector<1x2xf32>
    %121 = vector.extract_strided_slice %32 {offsets = [0, 24], sizes = [64, 2], strides = [1, 1]} : vector<64x32xf32> to vector<64x2xf32>
    %c0_43 = arith.constant 0 : index
    %c12 = arith.constant 12 : index
    %122 = vector.load %arg4[%c0_43, %c12] : memref<64x16xf32, #tpu.memory_space<vmem>>, vector<64x1xf32>
    %123 = vector.broadcast %122 : vector<64x1xf32> to vector<64x2xf32>
    %124 = arith.mulf %121, %123 : vector<64x2xf32>
    %cst_44 = arith.constant dense<0.000000e+00> : vector<2xf32>
    %125 = vector.multi_reduction <add>, %124, %cst_44 [0] : vector<64x2xf32> to vector<2xf32>
    %126 = vector.shape_cast %125 : vector<2xf32> to vector<1x2xf32>
    %127 = arith.addf %120, %126 : vector<1x2xf32>
    %128 = vector.extract_strided_slice %32 {offsets = [0, 26], sizes = [64, 2], strides = [1, 1]} : vector<64x32xf32> to vector<64x2xf32>
    %c0_45 = arith.constant 0 : index
    %c13 = arith.constant 13 : index
    %129 = vector.load %arg4[%c0_45, %c13] : memref<64x16xf32, #tpu.memory_space<vmem>>, vector<64x1xf32>
    %130 = vector.broadcast %129 : vector<64x1xf32> to vector<64x2xf32>
    %131 = arith.mulf %128, %130 : vector<64x2xf32>
    %cst_46 = arith.constant dense<0.000000e+00> : vector<2xf32>
    %132 = vector.multi_reduction <add>, %131, %cst_46 [0] : vector<64x2xf32> to vector<2xf32>
    %133 = vector.shape_cast %132 : vector<2xf32> to vector<1x2xf32>
    %134 = arith.addf %127, %133 : vector<1x2xf32>
    %135 = vector.extract_strided_slice %32 {offsets = [0, 28], sizes = [64, 2], strides = [1, 1]} : vector<64x32xf32> to vector<64x2xf32>
    %c0_47 = arith.constant 0 : index
    %c14 = arith.constant 14 : index
    %136 = vector.load %arg4[%c0_47, %c14] : memref<64x16xf32, #tpu.memory_space<vmem>>, vector<64x1xf32>
    %137 = vector.broadcast %136 : vector<64x1xf32> to vector<64x2xf32>
    %138 = arith.mulf %135, %137 : vector<64x2xf32>
    %cst_48 = arith.constant dense<0.000000e+00> : vector<2xf32>
    %139 = vector.multi_reduction <add>, %138, %cst_48 [0] : vector<64x2xf32> to vector<2xf32>
    %140 = vector.shape_cast %139 : vector<2xf32> to vector<1x2xf32>
    %141 = arith.addf %134, %140 : vector<1x2xf32>
    %142 = vector.extract_strided_slice %32 {offsets = [0, 30], sizes = [64, 2], strides = [1, 1]} : vector<64x32xf32> to vector<64x2xf32>
    %c0_49 = arith.constant 0 : index
    %c15 = arith.constant 15 : index
    %143 = vector.load %arg4[%c0_49, %c15] : memref<64x16xf32, #tpu.memory_space<vmem>>, vector<64x1xf32>
    %144 = vector.broadcast %143 : vector<64x1xf32> to vector<64x2xf32>
    %145 = arith.mulf %142, %144 : vector<64x2xf32>
    %cst_50 = arith.constant dense<0.000000e+00> : vector<2xf32>
    %146 = vector.multi_reduction <add>, %145, %cst_50 [0] : vector<64x2xf32> to vector<2xf32>
    %147 = vector.shape_cast %146 : vector<2xf32> to vector<1x2xf32>
    %148 = arith.addf %141, %147 : vector<1x2xf32>
    %149 = arith.negf %148 : vector<1x2xf32>
    %150 = math.exp %149 : vector<1x2xf32>
    %cst_51 = arith.constant 1.000000e+00 : f32
    %151 = vector.broadcast %cst_51 : f32 to vector<1x2xf32>
    %152 = arith.addf %151, %150 : vector<1x2xf32>
    %153 = arith.divf %151, %152 : vector<1x2xf32>
    %c0_52 = arith.constant 0 : index
    %c0_53 = arith.constant 0 : index
    %154 = vector.load %arg6[%c0_52, %c0_53] : memref<1x2xf32, #tpu.memory_space<vmem>>, vector<1x2xf32>
    tpu.vector_store %arg6[%c0_52, %c0_53], %153 {strides = array<i32>} : memref<1x2xf32, #tpu.memory_space<vmem>>, vector<1x2xf32>,
    return
  }
  func.func @transform_0(%arg0: i32) -> (i32, i32) {
    %c0_i32 = arith.constant 0 : i32
    %c0_i32_0 = arith.constant 0 : i32
    %c0_i32_1 = arith.constant 0 : i32
    return %c0_i32, %c0_i32_0 : i32, i32
  }
  func.func @transform_1(%arg0: i32) -> (i32, i32) {
    %c0_i32 = arith.constant 0 : i32
    %c0_i32_0 = arith.constant 0 : i32
    %c0_i32_1 = arith.constant 0 : i32
    return %c0_i32, %c0_i32_0 : i32, i32
  }
  func.func @transform_2(%arg0: i32) -> (i32, i32) {
    %c0_i32 = arith.constant 0 : i32
    %c0_i32_0 = arith.constant 0 : i32
    %c0_i32_1 = arith.constant 0 : i32
    return %c0_i32, %c0_i32_0 : i32, i32
  }
  func.func @transform_3(%arg0: i32) -> (i32, i32) {
    %c0_i32 = arith.constant 0 : i32
    %c0_i32_0 = arith.constant 0 : i32
    %c0_i32_1 = arith.constant 0 : i32
    return %c0_i32, %c0_i32_0 : i32, i32
  }
  func.func @transform_4(%arg0: i32) -> (i32, i32) {
    %c0_i32 = arith.constant 0 : i32
    %c0_i32_0 = arith.constant 0 : i32
    %c0_i32_1 = arith.constant 0 : i32
    return %c0_i32, %c0_i32_0 : i32, i32
  }
  func.func @transform_5(%arg0: i32) -> (i32, i32) {
    %c0_i32 = arith.constant 0 : i32
    %c0_i32_0 = arith.constant 0 : i32
    %c0_i32_1 = arith.constant 0 : i32
    return %c0_i32, %c0_i32_0 : i32, i32
  }
}

</mosaic_0001>

<llo_original>
// kernel: discriminator_forward.4
$region0: #{discriminator_forward.4}
  #allocation0 [shape = 'u32[]', space=smem, size = 0x4, offset = 0x4, fixed_abs, tag = 'smem constant byte address 0x4 - core index']
  #allocation1 [shape = 'u32[144,128]{1,0:T(1,128)}', space=vmem, size = 0x12000, scoped, tag = 'internal scratch']
  %s0 = inlined_call_operand.vmem [shape: bf16[8,48], index: 0, kind: input, shape index: {}]
  %s1 = inlined_call_operand.vmem [shape: bf16[48,2048], index: 1, kind: input, shape index: {}]
  %s2 = inlined_call_operand.vmem [shape: f32[8,1], index: 2, kind: input, shape index: {}]
  %s3 = inlined_call_operand.vmem [shape: bf16[8,2048], index: 3, kind: output, shape index: {}]
  %s4 = sld [smem:[#allocation0]]
  $region22: #{discriminator_forward.4} parent=0
    _
  %s6 = ssub.s32 1, %s4
  %s7 = scalar_select 0, %s6, %s4
  // Predicated region
  $region2: #{discriminator_forward.4} parent=0 // pred_check
    _
  $region3: #{discriminator_forward.4} parent=0 // pred_check_branch
    %9 = sbr.rel (0) target = $region5
  $region4: #{discriminator_forward.4} parent=0 // pred_region
    _
  $region5: #{discriminator_forward.4} parent=0 // pred_fallthru
    _
  // Predicated region
  $region6: #{discriminator_forward.4} parent=0 // pred_check
    _
  $region7: #{discriminator_forward.4} parent=0 // pred_check_branch
    %11 = sbr.rel (0) target = $region9
  $region8: #{discriminator_forward.4} parent=0 // pred_region
    _
  $region9: #{discriminator_forward.4} parent=0 // pred_fallthru
    _
  // Predicated region
  $region10: #{discriminator_forward.4} parent=0 // pred_check
    _
  $region11: #{discriminator_forward.4} parent=0 // pred_check_branch
    %13 = sbr.rel (0) target = $region13
  $region12: #{discriminator_forward.4} parent=0 // pred_region
    _
  $region13: #{discriminator_forward.4} parent=0 // pred_fallthru
    _
  %v15 = vld [vmem:[%s0] sm:$0xf]
  %v16 = vld [vmem:[%s1] sm:$0xff]
  %v17 = vld [vmem:[%s1 + $0x8] sm:$0xff]
  %v18 = vld [vmem:[%s1 + $0x10] sm:$0xff]
  %v19 = vld [vmem:[%s1 + $0x18] sm:$0xff]
  %v20 = vld [vmem:[%s1 + $0x20] sm:$0xff]
  %v21 = vld [vmem:[%s1 + $0x28] sm:$0xff]
  %v22 = vld [vmem:[%s1 + $0x30] sm:$0xff]
  %v23 = vld [vmem:[%s1 + $0x38] sm:$0xff]
  %v24 = vld [vmem:[%s1 + $0x40] sm:$0xff]
  %v25 = vld [vmem:[%s1 + $0x48] sm:$0xff]
  %v26 = vld [vmem:[%s1 + $0x50] sm:$0xff]
  %v27 = vld [vmem:[%s1 + $0x58] sm:$0xff]
  %v28 = vld [vmem:[%s1 + $0x60] sm:$0xff]
  %v29 = vld [vmem:[%s1 + $0x68] sm:$0xff]
  %v30 = vld [vmem:[%s1 + $0x70] sm:$0xff]
  %v31 = vld [vmem:[%s1 + $0x78] sm:$0xff]
  %v32 = vld [vmem:[%s1 + $0x80] sm:$0xff]
  %v33 = vld [vmem:[%s1 + $0x88] sm:$0xff]
  %v34 = vld [vmem:[%s1 + $0x90] sm:$0xff]
  %v35 = vld [vmem:[%s1 + $0x98] sm:$0xff]
  %v36 = vld [vmem:[%s1 + $0xa0] sm:$0xff]
  %v37 = vld [vmem:[%s1 + $0xa8] sm:$0xff]
  %v38 = vld [vmem:[%s1 + $0xb0] sm:$0xff]
  %v39 = vld [vmem:[%s1 + $0xb8] sm:$0xff]
  %v40 = vld [vmem:[%s1 + $0xc0] sm:$0xff]
  %v41 = vld [vmem:[%s1 + $0xc8] sm:$0xff]
  %v42 = vld [vmem:[%s1 + $0xd0] sm:$0xff]
  %v43 = vld [vmem:[%s1 + $0xd8] sm:$0xff]
  %v44 = vld [vmem:[%s1 + $0xe0] sm:$0xff]
  %v45 = vld [vmem:[%s1 + $0xe8] sm:$0xff]
  %v46 = vld [vmem:[%s1 + $0xf0] sm:$0xff]
  %v47 = vld [vmem:[%s1 + $0xf8] sm:$0xff]
  %v48 = vld [vmem:[%s1 + $0x100] sm:$0xff]
  %v49 = vld [vmem:[%s1 + $0x108] sm:$0xff]
  %v50 = vld [vmem:[%s1 + $0x110] sm:$0xff]
  %v51 = vld [vmem:[%s1 + $0x118] sm:$0xff]
  %v52 = vld [vmem:[%s1 + $0x120] sm:$0xff]
  %v53 = vld [vmem:[%s1 + $0x128] sm:$0xff]
  %v54 = vld [vmem:[%s1 + $0x130] sm:$0xff]
  %v55 = vld [vmem:[%s1 + $0x138] sm:$0xff]
  %v56 = vld [vmem:[%s1 + $0x140] sm:$0xff]
  %v57 = vld [vmem:[%s1 + $0x148] sm:$0xff]
  %v58 = vld [vmem:[%s1 + $0x150] sm:$0xff]
  %v59 = vld [vmem:[%s1 + $0x158] sm:$0xff]
  %v60 = vld [vmem:[%s1 + $0x160] sm:$0xff]
  %v61 = vld [vmem:[%s1 + $0x168] sm:$0xff]
  %v62 = vld [vmem:[%s1 + $0x170] sm:$0xff]
  %v63 = vld [vmem:[%s1 + $0x178] sm:$0xff]
  %v64 = vld [vmem:[%s2] sm:$0xff]
  %66 = vset.pattern.permute.xlu0 0
  %67 = vperm.xlu0 %66, %v64
  %v68 = vpop.permute.xlu0 %67
  %v118 = vunpack.c.l.b16 %v16
  %v119 = vunpack.c.h.b16 %v16
  %v120 = vunpack.c.l.b16 %v17
  %v121 = vunpack.c.h.b16 %v17
  %v122 = vunpack.c.l.b16 %v18
  %v123 = vunpack.c.h.b16 %v18
  %v124 = vunpack.c.l.b16 %v19
  %v125 = vunpack.c.h.b16 %v19
  %v126 = vunpack.c.l.b16 %v20
  %v127 = vunpack.c.h.b16 %v20
  %v128 = vunpack.c.l.b16 %v21
  %v129 = vunpack.c.h.b16 %v21
  %v130 = vunpack.c.l.b16 %v22
  %v131 = vunpack.c.h.b16 %v22
  %v132 = vunpack.c.l.b16 %v23
  %v133 = vunpack.c.h.b16 %v23
  %v134 = vunpack.c.l.b16 %v24
  %v135 = vunpack.c.h.b16 %v24
  %v136 = vunpack.c.l.b16 %v25
  %v137 = vunpack.c.h.b16 %v25
  %v138 = vunpack.c.l.b16 %v26
  %v139 = vunpack.c.h.b16 %v26
  %v140 = vunpack.c.l.b16 %v27
  %v141 = vunpack.c.h.b16 %v27
  %v142 = vunpack.c.l.b16 %v28
  %v143 = vunpack.c.h.b16 %v28
  %v144 = vunpack.c.l.b16 %v29
  %v145 = vunpack.c.h.b16 %v29
  %v146 = vunpack.c.l.b16 %v30
  %v147 = vunpack.c.h.b16 %v30
  %v148 = vunpack.c.l.b16 %v31
  %v149 = vunpack.c.h.b16 %v31
  %v150 = vunpack.c.l.b16 %v32
  %v151 = vunpack.c.h.b16 %v32
  %v152 = vunpack.c.l.b16 %v33
  %v153 = vunpack.c.h.b16 %v33
  %v154 = vunpack.c.l.b16 %v34
  %v155 = vunpack.c.h.b16 %v34
  %v156 = vunpack.c.l.b16 %v35
  %v157 = vunpack.c.h.b16 %v35
  %v158 = vunpack.c.l.b16 %v36
  %v159 = vunpack.c.h.b16 %v36
  %v160 = vunpack.c.l.b16 %v37
  %v161 = vunpack.c.h.b16 %v37
  %v162 = vunpack.c.l.b16 %v38
  %v163 = vunpack.c.h.b16 %v38
  %v164 = vunpack.c.l.b16 %v39
  %v165 = vunpack.c.h.b16 %v39
  %v166 = vunpack.c.l.b16 %v40
  %v167 = vunpack.c.h.b16 %v40
  %v168 = vunpack.c.l.b16 %v41
  %v169 = vunpack.c.h.b16 %v41
  %v170 = vunpack.c.l.b16 %v42
  %v171 = vunpack.c.h.b16 %v42
  %v172 = vunpack.c.l.b16 %v43
  %v173 = vunpack.c.h.b16 %v43
  %v174 = vunpack.c.l.b16 %v44
  %v175 = vunpack.c.h.b16 %v44
  %v176 = vunpack.c.l.b16 %v45
  %v177 = vunpack.c.h.b16 %v45
  %v178 = vunpack.c.l.b16 %v46
  %v179 = vunpack.c.h.b16 %v46
  %v180 = vunpack.c.l.b16 %v47
  %v181 = vunpack.c.h.b16 %v47
  %v182 = vunpack.c.l.b16 %v48
  %v183 = vunpack.c.h.b16 %v48
  %v184 = vunpack.c.l.b16 %v49
  %v185 = vunpack.c.h.b16 %v49
  %v186 = vunpack.c.l.b16 %v50
  %v187 = vunpack.c.h.b16 %v50
  %v188 = vunpack.c.l.b16 %v51
  %v189 = vunpack.c.h.b16 %v51
  %v190 = vunpack.c.l.b16 %v52
  %v191 = vunpack.c.h.b16 %v52
  %v192 = vunpack.c.l.b16 %v53
  %v193 = vunpack.c.h.b16 %v53
  %v194 = vunpack.c.l.b16 %v54
  %v195 = vunpack.c.h.b16 %v54
  %v196 = vunpack.c.l.b16 %v55
  %v197 = vunpack.c.h.b16 %v55
  %v198 = vunpack.c.l.b16 %v56
  %v199 = vunpack.c.h.b16 %v56
  %v200 = vunpack.c.l.b16 %v57
  %v201 = vunpack.c.h.b16 %v57
  %v202 = vunpack.c.l.b16 %v58
  %v203 = vunpack.c.h.b16 %v58
  %v204 = vunpack.c.l.b16 %v59
  %v205 = vunpack.c.h.b16 %v59
  %v206 = vunpack.c.l.b16 %v60
  %v207 = vunpack.c.h.b16 %v60
  %v208 = vunpack.c.l.b16 %v61
  %v209 = vunpack.c.h.b16 %v61
  %v210 = vunpack.c.l.b16 %v62
  %v211 = vunpack.c.h.b16 %v62
  %v212 = vunpack.c.l.b16 %v63
  %v213 = vunpack.c.h.b16 %v63
  %v214 = vpack.c.b16 %v134, %v118
  %v215 = vpack.c.b16 %v135, %v119
  %v216 = vpack.c.b16 %v136, %v120
  %v217 = vpack.c.b16 %v137, %v121
  %v218 = vpack.c.b16 %v138, %v122
  %v219 = vpack.c.b16 %v139, %v123
  %v220 = vpack.c.b16 %v140, %v124
  %v221 = vpack.c.b16 %v141, %v125
  %v222 = vpack.c.b16 %v142, %v126
  %v223 = vpack.c.b16 %v143, %v127
  %v224 = vpack.c.b16 %v144, %v128
  %v225 = vpack.c.b16 %v145, %v129
  %v226 = vpack.c.b16 %v146, %v130
  %v227 = vpack.c.b16 %v147, %v131
  %v228 = vpack.c.b16 %v148, %v132
  %v229 = vpack.c.b16 %v149, %v133
  %v230 = vpack.c.b16 %v166, %v150
  %v231 = vpack.c.b16 %v167, %v151
  %v232 = vpack.c.b16 %v168, %v152
  %v233 = vpack.c.b16 %v169, %v153
  %v234 = vpack.c.b16 %v170, %v154
  %v235 = vpack.c.b16 %v171, %v155
  %v236 = vpack.c.b16 %v172, %v156
  %v237 = vpack.c.b16 %v173, %v157
  %v238 = vpack.c.b16 %v174, %v158
  %v239 = vpack.c.b16 %v175, %v159
  %v240 = vpack.c.b16 %v176, %v160
  %v241 = vpack.c.b16 %v177, %v161
  %v242 = vpack.c.b16 %v178, %v162
  %v243 = vpack.c.b16 %v179, %v163
  %v244 = vpack.c.b16 %v180, %v164
  %v245 = vpack.c.b16 %v181, %v165
  %v246 = vpack.c.b16 %v198, %v182
  %v247 = vpack.c.b16 %v199, %v183
  %v248 = vpack.c.b16 %v200, %v184
  %v249 = vpack.c.b16 %v201, %v185
  %v250 = vpack.c.b16 %v202, %v186
  %v251 = vpack.c.b16 %v203, %v187
  %v252 = vpack.c.b16 %v204, %v188
  %v253 = vpack.c.b16 %v205, %v189
  %v254 = vpack.c.b16 %v206, %v190
  %v255 = vpack.c.b16 %v207, %v191
  %v256 = vpack.c.b16 %v208, %v192
  %v257 = vpack.c.b16 %v209, %v193
  %v258 = vpack.c.b16 %v210, %v194
  %v259 = vpack.c.b16 %v211, %v195
  %v260 = vpack.c.b16 %v212, %v196
  %v261 = vpack.c.b16 %v213, %v197
  %vm310 = vcmask 392192
  %v312 = vsel %vm310, %v15, 0
  %314 = vmatprep.subr.bf16.mxu0 0
  %315 = vmatpush1.bf16.msra.mxu0 0
  %316 = vmatprep.subr.bf16.mxu0 0
  %317 = vmatpush1.bf16.msra.mxu0 0
  %318 = vmatprep.subr.bf16.mxu0 0
  %319 = vmatpush1.bf16.msra.mxu0 0
  %320 = vmatprep.subr.bf16.mxu0 0
  %321 = vmatpush1.bf16.msra.mxu0 0
  %322 = vmatprep.subr.bf16.mxu0 0
  %323 = vmatpush1.bf16.msra.mxu0 0
  %324 = vmatprep.subr.bf16.mxu0 %v247
  %325 = vmatpush1.bf16.msra.mxu0 %v246
  %326 = vmatprep.subr.bf16.mxu0 %v231
  %327 = vmatpush1.bf16.msra.mxu0 %v230
  %328 = vmatprep.subr.bf16.mxu0 %v215
  %329 = vmatpush1.bf16.msra.mxu0 %v214
  %330 = vmatprep.subr.bf16.mxu0 0
  %331 = vmatpush2.bf16.msra.mxu0 0
  %332 = vmatprep.subr.bf16.mxu0 0
  %333 = vmatpush2.bf16.msra.mxu0 0
  %334 = vmatprep.subr.bf16.mxu0 0
  %335 = vmatpush2.bf16.msra.mxu0 0
  %336 = vmatprep.subr.bf16.mxu0 0
  %337 = vmatpush2.bf16.msra.mxu0 0
  %338 = vmatprep.subr.bf16.mxu0 0
  %339 = vmatpush2.bf16.msra.mxu0 0
  %340 = vmatprep.subr.bf16.mxu0 0
  %341 = vmatpush2.bf16.msra.mxu0 0
  %342 = vmatprep.subr.bf16.mxu0 0
  %343 = vmatpush2.bf16.msra.mxu0 0
  %344 = vmatprep.subr.bf16.mxu0 0
  %345 = vmatpush2.bf16.msra.mxu0 0
  %346 = vmatprep.mubr.bf16.mxu0 0
  %347 = vmatmul.mubr.bf16.gmra.mxu0 %v312
  %v348 = vpop.f32.mrf.mxu0
  %v349 = vadd.f32 %v68, %v348
  %v350 = vpop.f32.mrf.mxu0
  %v351 = vadd.f32 %v68, %v350
  %v352 = vpop.f32.mrf.mxu0
  %v353 = vpop.f32.mrf.mxu0
  %354 = vdwg.mxu0
  %355 = vmatprep.subr.bf16.mxu0 0
  %356 = vmatpush1.bf16.msra.mxu0 0
  %357 = vmatprep.subr.bf16.mxu0 0
  %358 = vmatpush1.bf16.msra.mxu0 0
  %359 = vmatprep.subr.bf16.mxu0 0
  %360 = vmatpush1.bf16.msra.mxu0 0
  %361 = vmatprep.subr.bf16.mxu0 0
  %362 = vmatpush1.bf16.msra.mxu0 0
  %363 = vmatprep.subr.bf16.mxu0 0
  %364 = vmatpush1.bf16.msra.mxu0 0
  %365 = vmatprep.subr.bf16.mxu0 %v249
  %366 = vmatpush1.bf16.msra.mxu0 %v248
  %367 = vmatprep.subr.bf16.mxu0 %v233
  %368 = vmatpush1.bf16.msra.mxu0 %v232
  %369 = vmatprep.subr.bf16.mxu0 %v217
  %370 = vmatpush1.bf16.msra.mxu0 %v216
  %371 = vmatprep.subr.bf16.mxu0 0
  %372 = vmatpush2.bf16.msra.mxu0 0
  %373 = vmatprep.subr.bf16.mxu0 0
  %374 = vmatpush2.bf16.msra.mxu0 0
  %375 = vmatprep.subr.bf16.mxu0 0
  %376 = vmatpush2.bf16.msra.mxu0 0
  %377 = vmatprep.subr.bf16.mxu0 0
  %378 = vmatpush2.bf16.msra.mxu0 0
  %379 = vmatprep.subr.bf16.mxu0 0
  %380 = vmatpush2.bf16.msra.mxu0 0
  %381 = vmatprep.subr.bf16.mxu0 0
  %382 = vmatpush2.bf16.msra.mxu0 0
  %383 = vmatprep.subr.bf16.mxu0 0
  %384 = vmatpush2.bf16.msra.mxu0 0
  %385 = vmatprep.subr.bf16.mxu0 0
  %386 = vmatpush2.bf16.msra.mxu0 0
  %387 = vmatprep.mubr.bf16.mxu0 0
  %388 = vmatmul.mubr.bf16.gmra.mxu0 %v312
  %v389 = vpop.f32.mrf.mxu0
  %v390 = vadd.f32 %v68, %v389
  %v391 = vpop.f32.mrf.mxu0
  %v392 = vadd.f32 %v68, %v391
  %v393 = vpop.f32.mrf.mxu0
  %v394 = vpop.f32.mrf.mxu0
  %395 = vdwg.mxu0
  %396 = vmatprep.subr.bf16.mxu0 0
  %397 = vmatpush1.bf16.msra.mxu0 0
  %398 = vmatprep.subr.bf16.mxu0 0
  %399 = vmatpush1.bf16.msra.mxu0 0
  %400 = vmatprep.subr.bf16.mxu0 0
  %401 = vmatpush1.bf16.msra.mxu0 0
  %402 = vmatprep.subr.bf16.mxu0 0
  %403 = vmatpush1.bf16.msra.mxu0 0
  %404 = vmatprep.subr.bf16.mxu0 0
  %405 = vmatpush1.bf16.msra.mxu0 0
  %406 = vmatprep.subr.bf16.mxu0 %v251
  %407 = vmatpush1.bf16.msra.mxu0 %v250
  %408 = vmatprep.subr.bf16.mxu0 %v235
  %409 = vmatpush1.bf16.msra.mxu0 %v234
  %410 = vmatprep.subr.bf16.mxu0 %v219
  %411 = vmatpush1.bf16.msra.mxu0 %v218
  %412 = vmatprep.subr.bf16.mxu0 0
  %413 = vmatpush2.bf16.msra.mxu0 0
  %414 = vmatprep.subr.bf16.mxu0 0
  %415 = vmatpush2.bf16.msra.mxu0 0
  %416 = vmatprep.subr.bf16.mxu0 0
  %417 = vmatpush2.bf16.msra.mxu0 0
  %418 = vmatprep.subr.bf16.mxu0 0
  %419 = vmatpush2.bf16.msra.mxu0 0
  %420 = vmatprep.subr.bf16.mxu0 0
  %421 = vmatpush2.bf16.msra.mxu0 0
  %422 = vmatprep.subr.bf16.mxu0 0
  %423 = vmatpush2.bf16.msra.mxu0 0
  %424 = vmatprep.subr.bf16.mxu0 0
  %425 = vmatpush2.bf16.msra.mxu0 0
  %426 = vmatprep.subr.bf16.mxu0 0
  %427 = vmatpush2.bf16.msra.mxu0 0
  %428 = vmatprep.mubr.bf16.mxu0 0
  %429 = vmatmul.mubr.bf16.gmra.mxu0 %v312
  %v430 = vpop.f32.mrf.mxu0
  %v431 = vadd.f32 %v68, %v430
  %v432 = vpop.f32.mrf.mxu0
  %v433 = vadd.f32 %v68, %v432
  %v434 = vpop.f32.mrf.mxu0
  %v435 = vpop.f32.mrf.mxu0
  %436 = vdwg.mxu0
  %437 = vmatprep.subr.bf16.mxu0 0
  %438 = vmatpush1.bf16.msra.mxu0 0
  %439 = vmatprep.subr.bf16.mxu0 0
  %440 = vmatpush1.bf16.msra.mxu0 0
  %441 = vmatprep.subr.bf16.mxu0 0
  %442 = vmatpush1.bf16.msra.mxu0 0
  %443 = vmatprep.subr.bf16.mxu0 0
  %444 = vmatpush1.bf16.msra.mxu0 0
  %445 = vmatprep.subr.bf16.mxu0 0
  %446 = vmatpush1.bf16.msra.mxu0 0
  %447 = vmatprep.subr.bf16.mxu0 %v253
  %448 = vmatpush1.bf16.msra.mxu0 %v252
  %449 = vmatprep.subr.bf16.mxu0 %v237
  %450 = vmatpush1.bf16.msra.mxu0 %v236
  %451 = vmatprep.subr.bf16.mxu0 %v221
  %452 = vmatpush1.bf16.msra.mxu0 %v220
  %453 = vmatprep.subr.bf16.mxu0 0
  %454 = vmatpush2.bf16.msra.mxu0 0
  %455 = vmatprep.subr.bf16.mxu0 0
  %456 = vmatpush2.bf16.msra.mxu0 0
  %457 = vmatprep.subr.bf16.mxu0 0
  %458 = vmatpush2.bf16.msra.mxu0 0
  %459 = vmatprep.subr.bf16.mxu0 0
  %460 = vmatpush2.bf16.msra.mxu0 0
  %461 = vmatprep.subr.bf16.mxu0 0
  %462 = vmatpush2.bf16.msra.mxu0 0
  %463 = vmatprep.subr.bf16.mxu0 0
  %464 = vmatpush2.bf16.msra.mxu0 0
  %465 = vmatprep.subr.bf16.mxu0 0
  %466 = vmatpush2.bf16.msra.mxu0 0
  %467 = vmatprep.subr.bf16.mxu0 0
  %468 = vmatpush2.bf16.msra.mxu0 0
  %469 = vmatprep.mubr.bf16.mxu0 0
  %470 = vmatmul.mubr.bf16.gmra.mxu0 %v312
  %v471 = vpop.f32.mrf.mxu0
  %v472 = vadd.f32 %v68, %v471
  %v473 = vpop.f32.mrf.mxu0
  %v474 = vadd.f32 %v68, %v473
  %v475 = vpop.f32.mrf.mxu0
  %v476 = vpop.f32.mrf.mxu0
  %477 = vdwg.mxu0
  %478 = vmatprep.subr.bf16.mxu0 0
  %479 = vmatpush1.bf16.msra.mxu0 0
  %480 = vmatprep.subr.bf16.mxu0 0
  %481 = vmatpush1.bf16.msra.mxu0 0
  %482 = vmatprep.subr.bf16.mxu0 0
  %483 = vmatpush1.bf16.msra.mxu0 0
  %484 = vmatprep.subr.bf16.mxu0 0
  %485 = vmatpush1.bf16.msra.mxu0 0
  %486 = vmatprep.subr.bf16.mxu0 0
  %487 = vmatpush1.bf16.msra.mxu0 0
  %488 = vmatprep.subr.bf16.mxu0 %v255
  %489 = vmatpush1.bf16.msra.mxu0 %v254
  %490 = vmatprep.subr.bf16.mxu0 %v239
  %491 = vmatpush1.bf16.msra.mxu0 %v238
  %492 = vmatprep.subr.bf16.mxu0 %v223
  %493 = vmatpush1.bf16.msra.mxu0 %v222
  %494 = vmatprep.subr.bf16.mxu0 0
  %495 = vmatpush2.bf16.msra.mxu0 0
  %496 = vmatprep.subr.bf16.mxu0 0
  %497 = vmatpush2.bf16.msra.mxu0 0
  %498 = vmatprep.subr.bf16.mxu0 0
  %499 = vmatpush2.bf16.msra.mxu0 0
  %500 = vmatprep.subr.bf16.mxu0 0
  %501 = vmatpush2.bf16.msra.mxu0 0
  %502 = vmatprep.subr.bf16.mxu0 0
  %503 = vmatpush2.bf16.msra.mxu0 0
  %504 = vmatprep.subr.bf16.mxu0 0
  %505 = vmatpush2.bf16.msra.mxu0 0
  %506 = vmatprep.subr.bf16.mxu0 0
  %507 = vmatpush2.bf16.msra.mxu0 0
  %508 = vmatprep.subr.bf16.mxu0 0
  %509 = vmatpush2.bf16.msra.mxu0 0
  %510 = vmatprep.mubr.bf16.mxu0 0
  %511 = vmatmul.mubr.bf16.gmra.mxu0 %v312
  %v512 = vpop.f32.mrf.mxu0
  %v513 = vadd.f32 %v68, %v512
  %v514 = vpop.f32.mrf.mxu0
  %v515 = vadd.f32 %v68, %v514
  %v516 = vpop.f32.mrf.mxu0
  %v517 = vpop.f32.mrf.mxu0
  %518 = vdwg.mxu0
  %519 = vmatprep.subr.bf16.mxu0 0
  %520 = vmatpush1.bf16.msra.mxu0 0
  %521 = vmatprep.subr.bf16.mxu0 0
  %522 = vmatpush1.bf16.msra.mxu0 0
  %523 = vmatprep.subr.bf16.mxu0 0
  %524 = vmatpush1.bf16.msra.mxu0 0
  %525 = vmatprep.subr.bf16.mxu0 0
  %526 = vmatpush1.bf16.msra.mxu0 0
  %527 = vmatprep.subr.bf16.mxu0 0
  %528 = vmatpush1.bf16.msra.mxu0 0
  %529 = vmatprep.subr.bf16.mxu0 %v257
  %530 = vmatpush1.bf16.msra.mxu0 %v256
  %531 = vmatprep.subr.bf16.mxu0 %v241
  %532 = vmatpush1.bf16.msra.mxu0 %v240
  %533 = vmatprep.subr.bf16.mxu0 %v225
  %534 = vmatpush1.bf16.msra.mxu0 %v224
  %535 = vmatprep.subr.bf16.mxu0 0
  %536 = vmatpush2.bf16.msra.mxu0 0
  %537 = vmatprep.subr.bf16.mxu0 0
  %538 = vmatpush2.bf16.msra.mxu0 0
  %539 = vmatprep.subr.bf16.mxu0 0
  %540 = vmatpush2.bf16.msra.mxu0 0
  %541 = vmatprep.subr.bf16.mxu0 0
  %542 = vmatpush2.bf16.msra.mxu0 0
  %543 = vmatprep.subr.bf16.mxu0 0
  %544 = vmatpush2.bf16.msra.mxu0 0
  %545 = vmatprep.subr.bf16.mxu0 0
  %546 = vmatpush2.bf16.msra.mxu0 0
  %547 = vmatprep.subr.bf16.mxu0 0
  %548 = vmatpush2.bf16.msra.mxu0 0
  %549 = vmatprep.subr.bf16.mxu0 0
  %550 = vmatpush2.bf16.msra.mxu0 0
  %551 = vmatprep.mubr.bf16.mxu0 0
  %552 = vmatmul.mubr.bf16.gmra.mxu0 %v312
  %v553 = vpop.f32.mrf.mxu0
  %v554 = vadd.f32 %v68, %v553
  %v555 = vpop.f32.mrf.mxu0
  %v556 = vadd.f32 %v68, %v555
  %v557 = vpop.f32.mrf.mxu0
  %v558 = vpop.f32.mrf.mxu0
  %559 = vdwg.mxu0
  %560 = vmatprep.subr.bf16.mxu0 0
  %561 = vmatpush1.bf16.msra.mxu0 0
  %562 = vmatprep.subr.bf16.mxu0 0
  %563 = vmatpush1.bf16.msra.mxu0 0
  %564 = vmatprep.subr.bf16.mxu0 0
  %565 = vmatpush1.bf16.msra.mxu0 0
  %566 = vmatprep.subr.bf16.mxu0 0
  %567 = vmatpush1.bf16.msra.mxu0 0
  %568 = vmatprep.subr.bf16.mxu0 0
  %569 = vmatpush1.bf16.msra.mxu0 0
  %570 = vmatprep.subr.bf16.mxu0 %v259
  %571 = vmatpush1.bf16.msra.mxu0 %v258
  %572 = vmatprep.subr.bf16.mxu0 %v243
  %573 = vmatpush1.bf16.msra.mxu0 %v242
  %574 = vmatprep.subr.bf16.mxu0 %v227
  %575 = vmatpush1.bf16.msra.mxu0 %v226
  %576 = vmatprep.subr.bf16.mxu0 0
  %577 = vmatpush2.bf16.msra.mxu0 0
  %578 = vmatprep.subr.bf16.mxu0 0
  %579 = vmatpush2.bf16.msra.mxu0 0
  %580 = vmatprep.subr.bf16.mxu0 0
  %581 = vmatpush2.bf16.msra.mxu0 0
  %582 = vmatprep.subr.bf16.mxu0 0
  %583 = vmatpush2.bf16.msra.mxu0 0
  %584 = vmatprep.subr.bf16.mxu0 0
  %585 = vmatpush2.bf16.msra.mxu0 0
  %586 = vmatprep.subr.bf16.mxu0 0
  %587 = vmatpush2.bf16.msra.mxu0 0
  %588 = vmatprep.subr.bf16.mxu0 0
  %589 = vmatpush2.bf16.msra.mxu0 0
  %590 = vmatprep.subr.bf16.mxu0 0
  %591 = vmatpush2.bf16.msra.mxu0 0
  %592 = vmatprep.mubr.bf16.mxu0 0
  %593 = vmatmul.mubr.bf16.gmra.mxu0 %v312
  %v594 = vpop.f32.mrf.mxu0
  %v595 = vadd.f32 %v68, %v594
  %v596 = vpop.f32.mrf.mxu0
  %v597 = vadd.f32 %v68, %v596
  %v598 = vpop.f32.mrf.mxu0
  %v599 = vpop.f32.mrf.mxu0
  %600 = vdwg.mxu0
  %601 = vmatprep.subr.bf16.mxu0 0
  %602 = vmatpush1.bf16.msra.mxu0 0
  %603 = vmatprep.subr.bf16.mxu0 0
  %604 = vmatpush1.bf16.msra.mxu0 0
  %605 = vmatprep.subr.bf16.mxu0 0
  %606 = vmatpush1.bf16.msra.mxu0 0
  %607 = vmatprep.subr.bf16.mxu0 0
  %608 = vmatpush1.bf16.msra.mxu0 0
  %609 = vmatprep.subr.bf16.mxu0 0
  %610 = vmatpush1.bf16.msra.mxu0 0
  %611 = vmatprep.subr.bf16.mxu0 %v261
  %612 = vmatpush1.bf16.msra.mxu0 %v260
  %613 = vmatprep.subr.bf16.mxu0 %v245
  %614 = vmatpush1.bf16.msra.mxu0 %v244
  %615 = vmatprep.subr.bf16.mxu0 %v229
  %616 = vmatpush1.bf16.msra.mxu0 %v228
  %617 = vmatprep.subr.bf16.mxu0 0
  %618 = vmatpush2.bf16.msra.mxu0 0
  %619 = vmatprep.subr.bf16.mxu0 0
  %620 = vmatpush2.bf16.msra.mxu0 0
  %621 = vmatprep.subr.bf16.mxu0 0
  %622 = vmatpush2.bf16.msra.mxu0 0
  %623 = vmatprep.subr.bf16.mxu0 0
  %624 = vmatpush2.bf16.msra.mxu0 0
  %625 = vmatprep.subr.bf16.mxu0 0
  %626 = vmatpush2.bf16.msra.mxu0 0
  %627 = vmatprep.subr.bf16.mxu0 0
  %628 = vmatpush2.bf16.msra.mxu0 0
  %629 = vmatprep.subr.bf16.mxu0 0
  %630 = vmatpush2.bf16.msra.mxu0 0
  %631 = vmatprep.subr.bf16.mxu0 0
  %632 = vmatpush2.bf16.msra.mxu0 0
  %633 = vmatprep.mubr.bf16.mxu0 0
  %634 = vmatmul.mubr.bf16.gmra.mxu0 %v312
  %v635 = vpop.f32.mrf.mxu0
  %v636 = vadd.f32 %v68, %v635
  %v637 = vpop.f32.mrf.mxu0
  %v638 = vadd.f32 %v68, %v637
  %v639 = vpop.f32.mrf.mxu0
  %v640 = vpop.f32.mrf.mxu0
  %641 = vdwg.mxu0
  %vm642 = vcmp.ge.f32.partialorder %v349, 0.0
  %vm643 = vcmp.ge.f32.partialorder %v351, 0.0
  %vm644 = vcmp.ge.f32.partialorder %v390, 0.0
  %vm645 = vcmp.ge.f32.partialorder %v392, 0.0
  %vm646 = vcmp.ge.f32.partialorder %v431, 0.0
  %vm647 = vcmp.ge.f32.partialorder %v433, 0.0
  %vm648 = vcmp.ge.f32.partialorder %v472, 0.0
  %vm649 = vcmp.ge.f32.partialorder %v474, 0.0
  %vm650 = vcmp.ge.f32.partialorder %v513, 0.0
  %vm651 = vcmp.ge.f32.partialorder %v515, 0.0
  %vm652 = vcmp.ge.f32.partialorder %v554, 0.0
  %vm653 = vcmp.ge.f32.partialorder %v556, 0.0
  %vm654 = vcmp.ge.f32.partialorder %v595, 0.0
  %vm655 = vcmp.ge.f32.partialorder %v597, 0.0
  %vm656 = vcmp.ge.f32.partialorder %v636, 0.0
  %vm657 = vcmp.ge.f32.partialorder %v638, 0.0
  %v658 = vmul.f32 %v349, 0.2
  %v659 = vmul.f32 %v351, 0.2
  %v660 = vmul.f32 %v390, 0.2
  %v661 = vmul.f32 %v392, 0.2
  %v662 = vmul.f32 %v431, 0.2
  %v663 = vmul.f32 %v433, 0.2
  %v664 = vmul.f32 %v472, 0.2
  %v665 = vmul.f32 %v474, 0.2
  %v666 = vmul.f32 %v513, 0.2
  %v667 = vmul.f32 %v515, 0.2
  %v668 = vmul.f32 %v554, 0.2
  %v669 = vmul.f32 %v556, 0.2
  %v670 = vmul.f32 %v595, 0.2
  %v671 = vmul.f32 %v597, 0.2
  %v672 = vmul.f32 %v636, 0.2
  %v673 = vmul.f32 %v638, 0.2
  %v674 = vsel %vm642, %v349, %v658
  %v675 = vsel %vm643, %v351, %v659
  %v676 = vsel %vm644, %v390, %v660
  %v677 = vsel %vm645, %v392, %v661
  %v678 = vsel %vm646, %v431, %v662
  %v679 = vsel %vm647, %v433, %v663
  %v680 = vsel %vm648, %v472, %v664
  %v681 = vsel %vm649, %v474, %v665
  %v682 = vsel %vm650, %v513, %v666
  %v683 = vsel %vm651, %v515, %v667
  %v684 = vsel %vm652, %v554, %v668
  %v685 = vsel %vm653, %v556, %v669
  %v686 = vsel %vm654, %v595, %v670
  %v687 = vsel %vm655, %v597, %v671
  %v688 = vsel %vm656, %v636, %v672
  %v689 = vsel %vm657, %v638, %v673
  %v690 = vpack.c.bf16 %v674, %v674
  %v691 = vpack.c.bf16 %v675, %v675
  %v692 = vpack.c.bf16 %v676, %v676
  %v693 = vpack.c.bf16 %v677, %v677
  %v694 = vpack.c.bf16 %v678, %v678
  %v695 = vpack.c.bf16 %v679, %v679
  %v696 = vpack.c.bf16 %v680, %v680
  %v697 = vpack.c.bf16 %v681, %v681
  %v698 = vpack.c.bf16 %v682, %v682
  %v699 = vpack.c.bf16 %v683, %v683
  %v700 = vpack.c.bf16 %v684, %v684
  %v701 = vpack.c.bf16 %v685, %v685
  %v702 = vpack.c.bf16 %v686, %v686
  %v703 = vpack.c.bf16 %v687, %v687
  %v704 = vpack.c.bf16 %v688, %v688
  %v705 = vpack.c.bf16 %v689, %v689
  %v722 = vunpack.c.l.b16 %v690
  %v723 = vunpack.c.l.b16 %v691
  %v724 = vunpack.c.l.b16 %v692
  %v725 = vunpack.c.l.b16 %v693
  %v726 = vunpack.c.l.b16 %v694
  %v727 = vunpack.c.l.b16 %v695
  %v728 = vunpack.c.l.b16 %v696
  %v729 = vunpack.c.l.b16 %v697
  %v730 = vunpack.c.l.b16 %v698
  %v731 = vunpack.c.l.b16 %v699
  %v732 = vunpack.c.l.b16 %v700
  %v733 = vunpack.c.l.b16 %v701
  %v734 = vunpack.c.l.b16 %v702
  %v735 = vunpack.c.l.b16 %v703
  %v736 = vunpack.c.l.b16 %v704
  %v737 = vunpack.c.l.b16 %v705
  %v738 = vpack.c.b16 %v723, %v722
  %v739 = vpack.c.b16 %v725, %v724
  %v740 = vpack.c.b16 %v727, %v726
  %v741 = vpack.c.b16 %v729, %v728
  %v742 = vpack.c.b16 %v731, %v730
  %v743 = vpack.c.b16 %v733, %v732
  %v744 = vpack.c.b16 %v735, %v734
  %v745 = vpack.c.b16 %v737, %v736
  %754 = vst [vmem:[%s3] sm:$0xff] %v738
  %755 = vst [vmem:[%s3 + $0x8] sm:$0xff] %v739
  %756 = vst [vmem:[%s3 + $0x10] sm:$0xff] %v740
  %757 = vst [vmem:[%s3 + $0x18] sm:$0xff] %v741
  %758 = vst [vmem:[%s3 + $0x20] sm:$0xff] %v742
  %759 = vst [vmem:[%s3 + $0x28] sm:$0xff] %v743
  %760 = vst [vmem:[%s3 + $0x30] sm:$0xff] %v744
  %761 = vst [vmem:[%s3 + $0x38] sm:$0xff] %v745
  // Predicated region
  $region14: #{discriminator_forward.4} parent=0 // pred_check
    _
  $region15: #{discriminator_forward.4} parent=0 // pred_check_branch
    %763 = sbr.rel (0) target = $region17
  $region16: #{discriminator_forward.4} parent=0 // pred_region
    _
  $region17: #{discriminator_forward.4} parent=0 // pred_fallthru
    _
  // Predicated region
  $region18: #{discriminator_forward.4} parent=0 // pred_check
    _
  $region19: #{discriminator_forward.4} parent=0 // pred_check_branch
    %765 = sbr.rel (0) target = $region21
  $region20: #{discriminator_forward.4} parent=0 // pred_region
    _
  $region21: #{discriminator_forward.4} parent=0 // pred_fallthru
    _

// kernel: discriminator_forward.5
$region0: #{discriminator_forward.5}
  #allocation0 [shape = 'u32[]', space=smem, size = 0x4, offset = 0x4, fixed_abs, tag = 'smem constant byte address 0x4 - core index']
  #allocation1 [shape = 'u32[144,128]{1,0:T(1,128)}', space=vmem, size = 0x12000, scoped, tag = 'internal scratch']
  #allocation2 [shape = 'f32[16,512]{1,0:T(8,128)}', space=vmem, size = 0x8000, scoped, tag = 'scratch operand']
  #allocation3 [shape = 'f32[16,2]{1,0:T(8,128)}', space=vmem, size = 0x2000, scoped, tag = 'scratch operand']
  %s0 = inlined_call_operand.vmem [shape: bf16[16,128], index: 0, kind: input, shape index: {}]
  %s1 = inlined_call_operand.vmem [shape: bf16[128,512], index: 1, kind: input, shape index: {}]
  %s2 = inlined_call_operand.vmem [shape: f32[16,2], index: 2, kind: input, shape index: {}]
  %s3 = inlined_call_operand.vmem [shape: bf16[16,512], index: 3, kind: output, shape index: {}]
  %s4 = sld [smem:[#allocation0]]
  $region57: #{discriminator_forward.5} parent=0
    _
  %s6 = ssub.s32 1, %s4
  %s7 = scalar_select 0, %s6, %s4
  loop: start=0, step=1, limit=4
  $region2: #{discriminator_forward.5} parent=0 // loop_pre_header
    _
  $region3: #{discriminator_forward.5} parent=0 // loop_header
    %s9 = sphi 0, %s13
    %p10 = scmp.ge.s32.totalorder %s9, 4
    %s16 = sphi 0, %s28
    %s17 = sphi 0, %s24
    %s18 = sphi 0, %s16
    %s19 = sphi 0, %s17
    %s20 = sphi 0, %s18
    %s21 = sphi 0, %s19
    %s29 = sphi 0, %s29
    %s31 = sphi 0, %s29
    %s32 = sphi 0, %s31
    %s46 = sphi 0, %s32
    %s56 = sphi 0, %s58
    %s59 = sphi 0, %s56
    %s60 = sphi 0, %s59
    %s76 = sphi 0, %s60
    %s80 = sphi 0, %s80
    %s82 = sphi 0, %s80
    %s83 = sphi 0, %s82
    %s97 = sphi 0, %s83
    %s105 = sphi 0, %s107
    %s108 = sphi 0, %s105
    %s109 = sphi 0, %s108
    %s125 = sphi 0, %s109
  $region4: #{discriminator_forward.5} parent=0 // loop_header_branch
    %12 = sbr.rel (%p10) target = $region8
  $region5: #{discriminator_forward.5} parent=0 // loop_body
    %s14 = ssub.s32 %s9, 1
    %s15 = ssub.s32 %s9, 2
    %s22 = sadd.s32 1, %s17
    %p23 = scmp.ge.s32.totalorder %s22, 1
    %s24 = scalar_select %p23, 0, %s22
    %s25 = sadd.s32 1, %s16
    %s26 = scalar_select %p23, %s25, %s16
    %p27 = scmp.ge.s32.totalorder %s26, 2
    %s28 = scalar_select %p27, 0, %s26
    %s30 = sadd.s32 %s29, 1
    %p33 = scmp.eq.s32.totalorder %s9, 1
    %p34 = scmp.ne.s32.totalorder %s29, %s31
    %p35 = scmp.eq.s32.totalorder %s9, 0
    %p36 = por %p34, %p35
    %p37 = scmp.ne.s32.totalorder %s29, %s31
    %p38 = scmp.eq.s32.totalorder %s14, 1
    %p39 = por %p37, %p38
    %p40 = scmp.ne.s32.totalorder %s31, %s32
    %p41 = scmp.eq.s32.totalorder %s14, 0
    %p42 = por %p40, %p41
    %p43 = scmp.ne.s32.totalorder %s31, %s32
    %p44 = scmp.eq.s32.totalorder %s15, 1
    %p45 = por %p43, %p44
    %p47 = scmp.ne.s32.totalorder %s32, %s46
    %p48 = scmp.eq.s32.totalorder %s15, 0
    %p49 = por %p47, %p48
    %s50 = ssub.s32 1, %s16
    %s51 = smul.u32 %s17, %s50
    %s52 = ssub.s32 1, %s28
    %s53 = smul.u32 %s24, %s52
    %s54 = ssub.s32 %s51, %s53
    %p55 = scmp.eq.s32.totalorder %s54, 0
    %s57 = sadd.s32 %s56, 1
    %s58 = scalar_select %p55, %s56, %s57
    %p61 = pneg %p55
    %p62 = scmp.eq.s32.totalorder %s9, 1
    %p63 = por %p61, %p62
    %p64 = scmp.ne.s32.totalorder %s56, %s59
    %p65 = scmp.eq.s32.totalorder %s9, 0
    %p66 = por %p64, %p65
    %p67 = scmp.ne.s32.totalorder %s56, %s59
    %p68 = scmp.eq.s32.totalorder %s14, 1
    %p69 = por %p67, %p68
    %p70 = scmp.ne.s32.totalorder %s59, %s60
    %p71 = scmp.eq.s32.totalorder %s14, 0
    %p72 = por %p70, %p71
    %p73 = scmp.ne.s32.totalorder %s59, %s60
    %p74 = scmp.eq.s32.totalorder %s15, 1
    %p75 = por %p73, %p74
    %p77 = scmp.ne.s32.totalorder %s60, %s76
    %p78 = scmp.eq.s32.totalorder %s15, 0
    %p79 = por %p77, %p78
    %s81 = sadd.s32 %s80, 1
    %p84 = scmp.eq.s32.totalorder %s9, 1
    %p85 = scmp.ne.s32.totalorder %s80, %s82
    %p86 = scmp.eq.s32.totalorder %s9, 0
    %p87 = por %p85, %p86
    %p88 = scmp.ne.s32.totalorder %s80, %s82
    %p89 = scmp.eq.s32.totalorder %s14, 1
    %p90 = por %p88, %p89
    %p91 = scmp.ne.s32.totalorder %s82, %s83
    %p92 = scmp.eq.s32.totalorder %s14, 0
    %p93 = por %p91, %p92
    %p94 = scmp.ne.s32.totalorder %s82, %s83
    %p95 = scmp.eq.s32.totalorder %s15, 1
    %p96 = por %p94, %p95
    %p98 = scmp.ne.s32.totalorder %s83, %s97
    %p99 = scmp.eq.s32.totalorder %s15, 0
    %p100 = por %p98, %p99
    %s101 = smul.u32 %s17, %s16
    %s102 = smul.u32 %s24, %s28
    %s103 = ssub.s32 %s101, %s102
    %p104 = scmp.eq.s32.totalorder %s103, 0
    %s106 = sadd.s32 %s105, 1
    %s107 = scalar_select %p104, %s105, %s106
    %p110 = pneg %p104
    %p111 = scmp.eq.s32.totalorder %s9, 1
    %p112 = por %p110, %p111
    %p113 = scmp.ne.s32.totalorder %s105, %s108
    %p114 = scmp.eq.s32.totalorder %s9, 0
    %p115 = por %p113, %p114
    %p116 = scmp.ne.s32.totalorder %s105, %s108
    %p117 = scmp.eq.s32.totalorder %s14, 1
    %p118 = por %p116, %p117
    %p119 = scmp.ne.s32.totalorder %s108, %s109
    %p120 = scmp.eq.s32.totalorder %s14, 0
    %p121 = por %p119, %p120
    %p122 = scmp.ne.s32.totalorder %s108, %s109
    %p123 = scmp.eq.s32.totalorder %s15, 1
    %p124 = por %p122, %p123
    %p126 = scmp.ne.s32.totalorder %s109, %s125
    %p127 = scmp.eq.s32.totalorder %s15, 0
    %p128 = por %p126, %p127
    %p129 = scmp.le.s32.totalorder 1, %s9
    %p130 = scmp.lt.s32.totalorder %s9, 3
    %p131 = pnand %p129, %p130
    %p132 = pneg %p131
    // Predicated region
    $region9: #{discriminator_forward.5} parent=5 // pred_check
      _
    $region10: #{discriminator_forward.5} parent=5 // pred_check_branch
      %134 = sbr.rel (%p131) target = $region12
    $region11: #{discriminator_forward.5} parent=5 // pred_region
      %s135 = ssub.s32 %s9, 1
      // Predicated region
      $region13: #{discriminator_forward.5} parent=11 // pred_check
        %p136 = pneg %p42
      $region14: #{discriminator_forward.5} parent=11 // pred_check_branch
        %138 = sbr.rel (%p136) target = $region16
      $region15: #{discriminator_forward.5} parent=11 // pred_region
        _
      $region16: #{discriminator_forward.5} parent=11 // pred_fallthru
        _
      // Predicated region
      $region17: #{discriminator_forward.5} parent=11 // pred_check
        %p139 = pneg %p93
      $region18: #{discriminator_forward.5} parent=11 // pred_check_branch
        %141 = sbr.rel (%p139) target = $region20
      $region19: #{discriminator_forward.5} parent=11 // pred_region
        _
      $region20: #{discriminator_forward.5} parent=11 // pred_fallthru
        _
    $region12: #{discriminator_forward.5} parent=5 // pred_fallthru
      _
    %p142 = scmp.lt.s32.totalorder %s9, 2
    // Predicated region
    $region21: #{discriminator_forward.5} parent=5 // pred_check
      %p143 = pneg %p142
    $region22: #{discriminator_forward.5} parent=5 // pred_check_branch
      %145 = sbr.rel (%p143) target = $region24
    $region23: #{discriminator_forward.5} parent=5 // pred_region
      // Predicated region
      $region25: #{discriminator_forward.5} parent=23 // pred_check
        %p146 = pneg %p66
      $region26: #{discriminator_forward.5} parent=23 // pred_check_branch
        %148 = sbr.rel (%p146) target = $region28
      $region27: #{discriminator_forward.5} parent=23 // pred_region
        %s149 = ssub.s32 1, %s16
        %s150 = smul.u32 %s17, %s149
        %s151 = smul.u32 4, %s150
        %p152 = scmp.lt.s32.totalorder %s151, 3
        %s153 = scalar_select %p152, %s151, 3
        %s154 = smul.addr %s153, 4
        %s155 = scalar_lea.vmem %s1, %s154
        %s156 = ssub.s32 1, %s16
        %s157 = smul.u32 %s17, %s156
        %s158 = smul.u32 4, %s157
      $region28: #{discriminator_forward.5} parent=23 // pred_fallthru
        _
    $region24: #{discriminator_forward.5} parent=5 // pred_fallthru
      _
    %p159 = scmp.le.s32.totalorder 1, %s9
    %p160 = scmp.lt.s32.totalorder %s9, 3
    %p161 = pnand %p159, %p160
    %p162 = pneg %p161
    // Predicated region
    $region29: #{discriminator_forward.5} parent=5 // pred_check
      _
    $region30: #{discriminator_forward.5} parent=5 // pred_check_branch
      %164 = sbr.rel (%p161) target = $region32
    $region31: #{discriminator_forward.5} parent=5 // pred_region
      %s165 = ssub.s32 %s9, 1
      %p166 = pneg %p42
      %p167 = pneg %p39
      %s168 = ssub.s32 1, %s18
      %s169 = smul.u32 %s19, %s168
      %s170 = smul.u32 4, %s169
      %p171 = scmp.lt.s32.totalorder %s170, 3
      %s172 = scalar_select %p171, %s170, 3
      %s173 = smul.addr %s172, 4
      %s174 = scalar_lea.vmem %s1, %s173
      %p175 = pneg %p72
      %p176 = pneg %p69
      %p177 = pneg %p93
      %p178 = pneg %p90
      %p179 = pneg %p121
      %p180 = pneg %p118
      %s181 = smul.u32 %s19, %s18
      %s182 = smul.u32 4, %s181
      %p183 = scmp.lt.s32.totalorder %s182, 3
      %s184 = scalar_select %p183, %s182, 3
      %s185 = smul.addr %s184, 4
      %s186 = scalar_lea.vmem %s3, %s185
      %s187 = ssub.s32 1, %s18
      %s188 = smul.u32 %s19, %s187
      %s189 = smul.u32 4, %s188
      %p190 = scmp.lt.s32.totalorder %s189, 3
      %s191 = scalar_select %p190, %s189, 3
      %s192 = smul.addr %s191, 4
      %s193 = scalar_lea.vmem %s1, %s192
      %s194 = ssub.s32 1, %s18
      %s195 = smul.u32 %s19, %s194
      %s196 = smul.u32 4, %s195
      %s197 = smul.u32 %s19, %s18
      %s198 = smul.u32 4, %s197
      %p199 = scmp.lt.s32.totalorder %s198, 3
      %s200 = scalar_select %p199, %s198, 3
      %s201 = smul.addr %s200, 4
      %s202 = scalar_lea.vmem %s3, %s201
      %s203 = smul.u32 %s19, %s18
      %s204 = smul.u32 4, %s203
      %p206 = scmp.eq.s32.totalorder %s18, 0
      %p207 = scmp.eq.s32.totalorder %s19, 0
      %p208 = pnand %p206, %p207
      %p209 = pneg %p208
      // Predicated region
      $region33: #{discriminator_forward.5} parent=31 // pred_check
        _
      $region34: #{discriminator_forward.5} parent=31 // pred_check_branch
        %211 = sbr.rel (%p208) target = $region36
      $region35: #{discriminator_forward.5} parent=31 // pred_region
        %vm212 = vcmask 15360
        %213 = vst.msk [vmem:[#allocation3] sm:$0xff] %vm212, 0.0
        %214 = vst.msk [vmem:[#allocation3 + $0x8] sm:$0xff] %vm212, 0.0
      $region36: #{discriminator_forward.5} parent=31 // pred_fallthru
        _
      // Predicated region
      $region37: #{discriminator_forward.5} parent=31 // pred_check
        %p215 = pneg %p206
      $region38: #{discriminator_forward.5} parent=31 // pred_check_branch
        %217 = sbr.rel (%p215) target = $region40
      $region39: #{discriminator_forward.5} parent=31 // pred_region
        %v218 = vld [vmem:[%s0] sm:$0xf]
        %v219 = vld [vmem:[%s0 + $0x4] sm:$0xf]
        %v220 = vld [vmem:[%s193] sm:$0xff]
        %v221 = vld [vmem:[%s193 + $0x8] sm:$0xff]
        %v222 = vld [vmem:[%s193 + $0x10] sm:$0xff]
        %v223 = vld [vmem:[%s193 + $0x18] sm:$0xff]
        %v224 = vld [vmem:[%s193 + $0x20] sm:$0xff]
        %v225 = vld [vmem:[%s193 + $0x28] sm:$0xff]
        %v226 = vld [vmem:[%s193 + $0x30] sm:$0xff]
        %v227 = vld [vmem:[%s193 + $0x38] sm:$0xff]
        %v228 = vld [vmem:[%s193 + $0x40] sm:$0xff]
        %v229 = vld [vmem:[%s193 + $0x48] sm:$0xff]
        %v230 = vld [vmem:[%s193 + $0x50] sm:$0xff]
        %v231 = vld [vmem:[%s193 + $0x58] sm:$0xff]
        %v232 = vld [vmem:[%s193 + $0x60] sm:$0xff]
        %v233 = vld [vmem:[%s193 + $0x68] sm:$0xff]
        %v234 = vld [vmem:[%s193 + $0x70] sm:$0xff]
        %v235 = vld [vmem:[%s193 + $0x78] sm:$0xff]
        %v236 = vld [vmem:[%s193 + $0x80] sm:$0xff]
        %v237 = vld [vmem:[%s193 + $0x88] sm:$0xff]
        %v238 = vld [vmem:[%s193 + $0x90] sm:$0xff]
        %v239 = vld [vmem:[%s193 + $0x98] sm:$0xff]
        %v240 = vld [vmem:[%s193 + $0xa0] sm:$0xff]
        %v241 = vld [vmem:[%s193 + $0xa8] sm:$0xff]
        %v242 = vld [vmem:[%s193 + $0xb0] sm:$0xff]
        %v243 = vld [vmem:[%s193 + $0xb8] sm:$0xff]
        %v244 = vld [vmem:[%s193 + $0xc0] sm:$0xff]
        %v245 = vld [vmem:[%s193 + $0xc8] sm:$0xff]
        %v246 = vld [vmem:[%s193 + $0xd0] sm:$0xff]
        %v247 = vld [vmem:[%s193 + $0xd8] sm:$0xff]
        %v248 = vld [vmem:[%s193 + $0xe0] sm:$0xff]
        %v249 = vld [vmem:[%s193 + $0xe8] sm:$0xff]
        %v250 = vld [vmem:[%s193 + $0xf0] sm:$0xff]
        %v251 = vld [vmem:[%s193 + $0xf8] sm:$0xff]
        %v254 = vunpack.c.l.b16 %v218
        %v255 = vunpack.c.l.b16 %v219
        %v256 = vpack.c.b16 %v255, %v254
        %v290 = vunpack.c.l.b16 %v220
        %v291 = vunpack.c.h.b16 %v220
        %v292 = vunpack.c.l.b16 %v221
        %v293 = vunpack.c.h.b16 %v221
        %v294 = vunpack.c.l.b16 %v222
        %v295 = vunpack.c.h.b16 %v222
        %v296 = vunpack.c.l.b16 %v223
        %v297 = vunpack.c.h.b16 %v223
        %v298 = vunpack.c.l.b16 %v224
        %v299 = vunpack.c.h.b16 %v224
        %v300 = vunpack.c.l.b16 %v225
        %v301 = vunpack.c.h.b16 %v225
        %v302 = vunpack.c.l.b16 %v226
        %v303 = vunpack.c.h.b16 %v226
        %v304 = vunpack.c.l.b16 %v227
        %v305 = vunpack.c.h.b16 %v227
        %v306 = vunpack.c.l.b16 %v228
        %v307 = vunpack.c.h.b16 %v228
        %v308 = vunpack.c.l.b16 %v229
        %v309 = vunpack.c.h.b16 %v229
        %v310 = vunpack.c.l.b16 %v230
        %v311 = vunpack.c.h.b16 %v230
        %v312 = vunpack.c.l.b16 %v231
        %v313 = vunpack.c.h.b16 %v231
        %v314 = vunpack.c.l.b16 %v232
        %v315 = vunpack.c.h.b16 %v232
        %v316 = vunpack.c.l.b16 %v233
        %v317 = vunpack.c.h.b16 %v233
        %v318 = vunpack.c.l.b16 %v234
        %v319 = vunpack.c.h.b16 %v234
        %v320 = vunpack.c.l.b16 %v235
        %v321 = vunpack.c.h.b16 %v235
        %v322 = vunpack.c.l.b16 %v236
        %v323 = vunpack.c.h.b16 %v236
        %v324 = vunpack.c.l.b16 %v237
        %v325 = vunpack.c.h.b16 %v237
        %v326 = vunpack.c.l.b16 %v238
        %v327 = vunpack.c.h.b16 %v238
        %v328 = vunpack.c.l.b16 %v239
        %v329 = vunpack.c.h.b16 %v239
        %v330 = vunpack.c.l.b16 %v240
        %v331 = vunpack.c.h.b16 %v240
        %v332 = vunpack.c.l.b16 %v241
        %v333 = vunpack.c.h.b16 %v241
        %v334 = vunpack.c.l.b16 %v242
        %v335 = vunpack.c.h.b16 %v242
        %v336 = vunpack.c.l.b16 %v243
        %v337 = vunpack.c.h.b16 %v243
        %v338 = vunpack.c.l.b16 %v244
        %v339 = vunpack.c.h.b16 %v244
        %v340 = vunpack.c.l.b16 %v245
        %v341 = vunpack.c.h.b16 %v245
        %v342 = vunpack.c.l.b16 %v246
        %v343 = vunpack.c.h.b16 %v246
        %v344 = vunpack.c.l.b16 %v247
        %v345 = vunpack.c.h.b16 %v247
        %v346 = vunpack.c.l.b16 %v248
        %v347 = vunpack.c.h.b16 %v248
        %v348 = vunpack.c.l.b16 %v249
        %v349 = vunpack.c.h.b16 %v249
        %v350 = vunpack.c.l.b16 %v250
        %v351 = vunpack.c.h.b16 %v250
        %v352 = vunpack.c.l.b16 %v251
        %v353 = vunpack.c.h.b16 %v251
        %v354 = vpack.c.b16 %v294, %v290
        %v355 = vpack.c.b16 %v295, %v291
        %v356 = vpack.c.b16 %v296, %v292
        %v357 = vpack.c.b16 %v297, %v293
        %v358 = vpack.c.b16 %v302, %v298
        %v359 = vpack.c.b16 %v303, %v299
        %v360 = vpack.c.b16 %v304, %v300
        %v361 = vpack.c.b16 %v305, %v301
        %v362 = vpack.c.b16 %v310, %v306
        %v363 = vpack.c.b16 %v311, %v307
        %v364 = vpack.c.b16 %v312, %v308
        %v365 = vpack.c.b16 %v313, %v309
        %v366 = vpack.c.b16 %v318, %v314
        %v367 = vpack.c.b16 %v319, %v315
        %v368 = vpack.c.b16 %v320, %v316
        %v369 = vpack.c.b16 %v321, %v317
        %v370 = vpack.c.b16 %v326, %v322
        %v371 = vpack.c.b16 %v327, %v323
        %v372 = vpack.c.b16 %v328, %v324
        %v373 = vpack.c.b16 %v329, %v325
        %v374 = vpack.c.b16 %v334, %v330
        %v375 = vpack.c.b16 %v335, %v331
        %v376 = vpack.c.b16 %v336, %v332
        %v377 = vpack.c.b16 %v337, %v333
        %v378 = vpack.c.b16 %v342, %v338
        %v379 = vpack.c.b16 %v343, %v339
        %v380 = vpack.c.b16 %v344, %v340
        %v381 = vpack.c.b16 %v345, %v341
        %v382 = vpack.c.b16 %v350, %v346
        %v383 = vpack.c.b16 %v351, %v347
        %v384 = vpack.c.b16 %v352, %v348
        %v385 = vpack.c.b16 %v353, %v349
        %418 = vmatprep.subr.bf16.mxu0 %v383
        %419 = vmatpush1.bf16.msra.mxu0 %v382
        %420 = vmatprep.subr.bf16.mxu0 %v379
        %421 = vmatpush1.bf16.msra.mxu0 %v378
        %422 = vmatprep.subr.bf16.mxu0 %v375
        %423 = vmatpush1.bf16.msra.mxu0 %v374
        %424 = vmatprep.subr.bf16.mxu0 %v371
        %425 = vmatpush1.bf16.msra.mxu0 %v370
        %426 = vmatprep.subr.bf16.mxu0 %v367
        %427 = vmatpush1.bf16.msra.mxu0 %v366
        %428 = vmatprep.subr.bf16.mxu0 %v363
        %429 = vmatpush1.bf16.msra.mxu0 %v362
        %430 = vmatprep.subr.bf16.mxu0 %v359
        %431 = vmatpush1.bf16.msra.mxu0 %v358
        %432 = vmatprep.subr.bf16.mxu0 %v355
        %433 = vmatpush1.bf16.msra.mxu0 %v354
        %434 = vmatprep.subr.bf16.mxu0 0
        %435 = vmatpush2.bf16.msra.mxu0 0
        %436 = vmatprep.subr.bf16.mxu0 0
        %437 = vmatpush2.bf16.msra.mxu0 0
        %438 = vmatprep.subr.bf16.mxu0 0
        %439 = vmatpush2.bf16.msra.mxu0 0
        %440 = vmatprep.subr.bf16.mxu0 0
        %441 = vmatpush2.bf16.msra.mxu0 0
        %442 = vmatprep.subr.bf16.mxu0 0
        %443 = vmatpush2.bf16.msra.mxu0 0
        %444 = vmatprep.subr.bf16.mxu0 0
        %445 = vmatpush2.bf16.msra.mxu0 0
        %446 = vmatprep.subr.bf16.mxu0 0
        %447 = vmatpush2.bf16.msra.mxu0 0
        %448 = vmatprep.subr.bf16.mxu0 0
        %449 = vmatpush2.bf16.msra.mxu0 0
        %450 = vmatprep.mubr.bf16.mxu0 0
        %451 = vmatmul.mubr.bf16.gmra.mxu0 %v256
        %v452 = vpop.f32.mrf.mxu0
        %v453 = vadd.f32 0.0, %v452
        %v454 = vpop.f32.mrf.mxu0
        %v455 = vadd.f32 0.0, %v454
        %v456 = vpop.f32.mrf.mxu0
        %v457 = vadd.f32 0.0, %v456
        %v458 = vpop.f32.mrf.mxu0
        %v459 = vadd.f32 0.0, %v458
        %460 = vdwg.mxu0
        %461 = vmatprep.subr.bf16.mxu0 %v385
        %462 = vmatpush1.bf16.msra.mxu0 %v384
        %463 = vmatprep.subr.bf16.mxu0 %v381
        %464 = vmatpush1.bf16.msra.mxu0 %v380
        %465 = vmatprep.subr.bf16.mxu0 %v377
        %466 = vmatpush1.bf16.msra.mxu0 %v376
        %467 = vmatprep.subr.bf16.mxu0 %v373
        %468 = vmatpush1.bf16.msra.mxu0 %v372
        %469 = vmatprep.subr.bf16.mxu0 %v369
        %470 = vmatpush1.bf16.msra.mxu0 %v368
        %471 = vmatprep.subr.bf16.mxu0 %v365
        %472 = vmatpush1.bf16.msra.mxu0 %v364
        %473 = vmatprep.subr.bf16.mxu0 %v361
        %474 = vmatpush1.bf16.msra.mxu0 %v360
        %475 = vmatprep.subr.bf16.mxu0 %v357
        %476 = vmatpush1.bf16.msra.mxu0 %v356
        %477 = vmatprep.subr.bf16.mxu0 0
        %478 = vmatpush2.bf16.msra.mxu0 0
        %479 = vmatprep.subr.bf16.mxu0 0
        %480 = vmatpush2.bf16.msra.mxu0 0
        %481 = vmatprep.subr.bf16.mxu0 0
        %482 = vmatpush2.bf16.msra.mxu0 0
        %483 = vmatprep.subr.bf16.mxu0 0
        %484 = vmatpush2.bf16.msra.mxu0 0
        %485 = vmatprep.subr.bf16.mxu0 0
        %486 = vmatpush2.bf16.msra.mxu0 0
        %487 = vmatprep.subr.bf16.mxu0 0
        %488 = vmatpush2.bf16.msra.mxu0 0
        %489 = vmatprep.subr.bf16.mxu0 0
        %490 = vmatpush2.bf16.msra.mxu0 0
        %491 = vmatprep.subr.bf16.mxu0 0
        %492 = vmatpush2.bf16.msra.mxu0 0
        %493 = vmatprep.mubr.bf16.mxu0 0
        %494 = vmatmul.mubr.bf16.gmra.mxu0 %v256
        %v495 = vpop.f32.mrf.mxu0
        %v496 = vadd.f32 0.0, %v495
        %v497 = vpop.f32.mrf.mxu0
        %v498 = vadd.f32 0.0, %v497
        %v499 = vpop.f32.mrf.mxu0
        %v500 = vadd.f32 0.0, %v499
        %v501 = vpop.f32.mrf.mxu0
        %v502 = vadd.f32 0.0, %v501
        %503 = vdwg.mxu0
        %s504 = smul.u32 %s19, 512
        %s505 = sshra.s32 %s504, 7
        %s506 = sand.u32 %s504, 127
        %s507 = smul.addr %s505, 8
        %s508 = scalar_lea.vmem [#allocation2], %s507
        %509 = vst [vmem:[%s508] sm:$0xff] %v453
        %510 = vst [vmem:[%s508 + $0x8] sm:$0xff] %v455
        %511 = vst [vmem:[%s508 + $0x10] sm:$0xff] %v496
        %512 = vst [vmem:[%s508 + $0x18] sm:$0xff] %v498
        %513 = vst [vmem:[%s508 + $0x20] sm:$0xff] %v457
        %514 = vst [vmem:[%s508 + $0x28] sm:$0xff] %v459
        %515 = vst [vmem:[%s508 + $0x30] sm:$0xff] %v500
        %516 = vst [vmem:[%s508 + $0x38] sm:$0xff] %v502
        %v517 = vld [vmem:[#allocation3] sm:$0xff]
        %v518 = vld [vmem:[#allocation3 + $0x8] sm:$0xff]
        %v519 = vadd.f32 %v453, %v455
        %v520 = vadd.f32 %v519, %v496
        %v521 = vadd.f32 %v520, %v498
        %522 = vadd.xlane.f32.xlu0 %v521
        %v523 = vpop.xlane.xlu0 %522
        %v524 = vadd.f32 %v457, %v459
        %v525 = vadd.f32 %v524, %v500
        %v526 = vadd.f32 %v525, %v502
        %527 = vadd.xlane.f32.xlu0 %v526
        %v528 = vpop.xlane.xlu0 %527
        %v529 = vadd.f32 %v517, %v523
        %v530 = vadd.f32 %v518, %v528
        %vm531 = vcmask 7168
        %532 = vst.msk [vmem:[#allocation3] sm:$0xff] %vm531, %v529
        %533 = vst.msk [vmem:[#allocation3 + $0x8] sm:$0xff] %vm531, %v530
        %v534 = vld [vmem:[#allocation3] sm:$0xff]
        %v535 = vld [vmem:[#allocation3 + $0x8] sm:$0xff]
        %v536 = vmul.f32 %v453, %v453
        %v537 = vmul.f32 %v455, %v455
        %v538 = vmul.f32 %v496, %v496
        %v539 = vmul.f32 %v498, %v498
        %v540 = vmul.f32 %v457, %v457
        %v541 = vmul.f32 %v459, %v459
        %v542 = vmul.f32 %v500, %v500
        %v543 = vmul.f32 %v502, %v502
        %v544 = vadd.f32 %v536, %v537
        %v545 = vadd.f32 %v544, %v538
        %v546 = vadd.f32 %v545, %v539
        %547 = vadd.xlane.f32.xlu0 %v546
        %v548 = vpop.xlane.xlu0 %547
        %v549 = vadd.f32 %v540, %v541
        %v550 = vadd.f32 %v549, %v542
        %v551 = vadd.f32 %v550, %v543
        %552 = vadd.xlane.f32.xlu0 %v551
        %v553 = vpop.xlane.xlu0 %552
        %v554 = vadd.f32 %v534, %v548
        %v555 = vadd.f32 %v535, %v553
        %vm556 = vcmask 15368
        %557 = vst.msk [vmem:[#allocation3] sm:$0xff] %vm556, %v554
        %558 = vst.msk [vmem:[#allocation3 + $0x8] sm:$0xff] %vm556, %v555
      $region40: #{discriminator_forward.5} parent=31 // pred_fallthru
        _
      %p559 = scmp.eq.s32.totalorder %s18, 1
      // Predicated region
      $region41: #{discriminator_forward.5} parent=31 // pred_check
        %p560 = pneg %p559
      $region42: #{discriminator_forward.5} parent=31 // pred_check_branch
        %562 = sbr.rel (%p560) target = $region44
      $region43: #{discriminator_forward.5} parent=31 // pred_region
        %v563 = vld [vmem:[#allocation3] sm:$0xff]
        %v564 = vld [vmem:[#allocation3 + $0x8] sm:$0xff]
        %v565 = vmul.f32 %v563, 0.001953125
        %v566 = vmul.f32 %v564, 0.001953125
        %v567 = vmul.f32 %v565, %v565
        %v568 = vmul.f32 %v566, %v566
        %571 = vrot.lane.b32.xlu0 %v567, 1
        %v572 = vpop.permute.xlu0 %571
        %573 = vrot.lane.b32.xlu0 %v568, 1
        %v574 = vpop.permute.xlu0 %573
        %v577 = vsub.f32 %v565, %v572
        %v578 = vsub.f32 %v566, %v574
        %v579 = vmax.f32 %v577, 0.0
        %v580 = vmax.f32 %v578, 0.0
        %v581 = vld [vmem:[%s2] sm:$0xff]
        %v582 = vld [vmem:[%s2 + $0x8] sm:$0xff]
        %v583 = vadd.f32 %v579, 1e-05
        %v584 = vadd.f32 %v580, 1e-05
        %v585 = vrsqrt.pop %v583
        %v586 = vrsqrt.pop %v584
        %589 = vrot.lane.b32.xlu0 %v585, 127
        %v590 = vpop.permute.xlu0 %589
        %591 = vrot.lane.b32.xlu0 %v586, 127
        %v592 = vpop.permute.xlu0 %591
        %v595 = vmul.f32 %v581, %v590
        %v596 = vmul.f32 %v582, %v592
        %v597 = vmul.f32 %v565, %v595
        %v598 = vmul.f32 %v566, %v596
        %601 = vrot.lane.b32.xlu0 %v597, 1
        %v602 = vpop.permute.xlu0 %601
        %603 = vrot.lane.b32.xlu0 %v598, 1
        %v604 = vpop.permute.xlu0 %603
        %v607 = vsub.f32 %v581, %v602
        %v608 = vsub.f32 %v582, %v604
        %s609 = smul.u32 %s19, 512
        %s610 = sshra.s32 %s609, 7
        %s611 = sand.u32 %s609, 127
        %s612 = smul.addr %s610, 8
        %s613 = scalar_lea.vmem [#allocation2], %s612
        %v614 = vld [vmem:[%s613] sm:$0xff]
        %v615 = vld [vmem:[%s613 + $0x8] sm:$0xff]
        %v616 = vld [vmem:[%s613 + $0x10] sm:$0xff]
        %v617 = vld [vmem:[%s613 + $0x18] sm:$0xff]
        %v618 = vld [vmem:[%s613 + $0x20] sm:$0xff]
        %v619 = vld [vmem:[%s613 + $0x28] sm:$0xff]
        %v620 = vld [vmem:[%s613 + $0x30] sm:$0xff]
        %v621 = vld [vmem:[%s613 + $0x38] sm:$0xff]
        %623 = vset.pattern.permute.xlu0 0
        %624 = vperm.xlu0 %623, %v595
        %v625 = vpop.permute.xlu0 %624
        %628 = vset.pattern.permute.xlu0 0
        %629 = vperm.xlu0 %628, %v596
        %v630 = vpop.permute.xlu0 %629
        %v632 = vmul.f32 %v614, %v625
        %v633 = vmul.f32 %v615, %v625
        %v634 = vmul.f32 %v616, %v625
        %v635 = vmul.f32 %v617, %v625
        %v636 = vmul.f32 %v618, %v630
        %v637 = vmul.f32 %v619, %v630
        %v638 = vmul.f32 %v620, %v630
        %v639 = vmul.f32 %v621, %v630
        %641 = vset.pattern.permute.xlu0 1
        %642 = vperm.xlu0 %641, %v607
        %v643 = vpop.permute.xlu0 %642
        %646 = vset.pattern.permute.xlu0 1
        %647 = vperm.xlu0 %646, %v608
        %v648 = vpop.permute.xlu0 %647
        %v650 = vadd.f32 %v632, %v643
        %v651 = vadd.f32 %v633, %v643
        %v652 = vadd.f32 %v634, %v643
        %v653 = vadd.f32 %v635, %v643
        %v654 = vadd.f32 %v636, %v648
        %v655 = vadd.f32 %v637, %v648
        %v656 = vadd.f32 %v638, %v648
        %v657 = vadd.f32 %v639, %v648
        %vm658 = vcmp.ge.f32.partialorder %v650, 0.0
        %vm659 = vcmp.ge.f32.partialorder %v651, 0.0
        %vm660 = vcmp.ge.f32.partialorder %v652, 0.0
        %vm661 = vcmp.ge.f32.partialorder %v653, 0.0
        %vm662 = vcmp.ge.f32.partialorder %v654, 0.0
        %vm663 = vcmp.ge.f32.partialorder %v655, 0.0
        %vm664 = vcmp.ge.f32.partialorder %v656, 0.0
        %vm665 = vcmp.ge.f32.partialorder %v657, 0.0
        %v666 = vmul.f32 %v650, 0.2
        %v667 = vmul.f32 %v651, 0.2
        %v668 = vmul.f32 %v652, 0.2
        %v669 = vmul.f32 %v653, 0.2
        %v670 = vmul.f32 %v654, 0.2
        %v671 = vmul.f32 %v655, 0.2
        %v672 = vmul.f32 %v656, 0.2
        %v673 = vmul.f32 %v657, 0.2
        %v674 = vsel %vm658, %v650, %v666
        %v675 = vsel %vm659, %v651, %v667
        %v676 = vsel %vm660, %v652, %v668
        %v677 = vsel %vm661, %v653, %v669
        %v678 = vsel %vm662, %v654, %v670
        %v679 = vsel %vm663, %v655, %v671
        %v680 = vsel %vm664, %v656, %v672
        %v681 = vsel %vm665, %v657, %v673
        %v682 = vpack.c.bf16 %v678, %v674
        %v683 = vpack.c.bf16 %v679, %v675
        %v684 = vpack.c.bf16 %v680, %v676
        %v685 = vpack.c.bf16 %v681, %v677
        %v690 = vunpack.c.l.b16 %v682
        %v691 = vunpack.c.l.b16 %v683
        %v692 = vunpack.c.l.b16 %v684
        %v693 = vunpack.c.l.b16 %v685
        %v694 = vunpack.c.h.b16 %v682
        %v695 = vunpack.c.h.b16 %v683
        %v696 = vunpack.c.h.b16 %v684
        %v697 = vunpack.c.h.b16 %v685
        %v698 = vpack.c.b16 %v691, %v690
        %v699 = vpack.c.b16 %v693, %v692
        %v700 = vpack.c.b16 %v695, %v694
        %v701 = vpack.c.b16 %v697, %v696
        %706 = vst [vmem:[%s202] sm:$0xff] %v698
        %707 = vst [vmem:[%s202 + $0x8] sm:$0xff] %v699
        %708 = vst [vmem:[%s202 + $0x10] sm:$0xff] %v700
        %709 = vst [vmem:[%s202 + $0x18] sm:$0xff] %v701
      $region44: #{discriminator_forward.5} parent=31 // pred_fallthru
        _
      %s710 = smul.u32 %s19, %s18
      %s711 = smul.u32 4, %s710
      %p712 = scmp.lt.s32.totalorder %s711, 3
      %s713 = scalar_select %p712, %s711, 3
      %s714 = smul.addr %s713, 4
      %s715 = scalar_lea.vmem %s3, %s714
      // Predicated region
      $region45: #{discriminator_forward.5} parent=31 // pred_check
        %p716 = pneg %p118
      $region46: #{discriminator_forward.5} parent=31 // pred_check_branch
        %718 = sbr.rel (%p716) target = $region48
      $region47: #{discriminator_forward.5} parent=31 // pred_region
        %s719 = smul.u32 %s19, %s18
        %s720 = smul.u32 4, %s719
      $region48: #{discriminator_forward.5} parent=31 // pred_fallthru
        _
    $region32: #{discriminator_forward.5} parent=5 // pred_fallthru
      _
    %p721 = scmp.le.s32.totalorder 2, %s9
    // Predicated region
    $region49: #{discriminator_forward.5} parent=5 // pred_check
      %p722 = pneg %p721
    $region50: #{discriminator_forward.5} parent=5 // pred_check_branch
      %724 = sbr.rel (%p722) target = $region52
    $region51: #{discriminator_forward.5} parent=5 // pred_region
      %s725 = ssub.s32 %s9, 2
      // Predicated region
      $region53: #{discriminator_forward.5} parent=51 // pred_check
        %p726 = pneg %p124
      $region54: #{discriminator_forward.5} parent=51 // pred_check_branch
        %728 = sbr.rel (%p726) target = $region56
      $region55: #{discriminator_forward.5} parent=51 // pred_region
        %s729 = smul.u32 %s21, %s20
        %s730 = smul.u32 4, %s729
        %p731 = scmp.lt.s32.totalorder %s730, 3
        %s732 = scalar_select %p731, %s730, 3
        %s733 = smul.addr %s732, 4
        %s734 = scalar_lea.vmem %s3, %s733
      $region56: #{discriminator_forward.5} parent=51 // pred_fallthru
        _
    $region52: #{discriminator_forward.5} parent=5 // pred_fallthru
      _
  $region6: #{discriminator_forward.5} parent=0 // loop_footer
    %s13 = sadd.s32 1, %s9
  $region7: #{discriminator_forward.5} parent=0 // loop_footer_branch
    %8 = sbr.rel target = $region3
  $region8: #{discriminator_forward.5} parent=0 // loop_exit
    _

// kernel: discriminator_forward.6
$region0: #{discriminator_forward.6}
  #allocation0 [shape = 'u32[]', space=smem, size = 0x4, offset = 0x4, fixed_abs, tag = 'smem constant byte address 0x4 - core index']
  #allocation1 [shape = 'u32[144,128]{1,0:T(1,128)}', space=vmem, size = 0x12000, scoped, tag = 'internal scratch']
  #allocation2 [shape = 'f32[32,128]{1,0:T(8,128)}', space=vmem, size = 0x4000, scoped, tag = 'scratch operand']
  #allocation3 [shape = 'f32[32,2]{1,0:T(8,128)}', space=vmem, size = 0x4000, scoped, tag = 'scratch operand']
  %s0 = inlined_call_operand.vmem [shape: bf16[32,256], index: 0, kind: input, shape index: {}]
  %s1 = inlined_call_operand.vmem [shape: bf16[256,128], index: 1, kind: input, shape index: {}]
  %s2 = inlined_call_operand.vmem [shape: f32[32,2], index: 2, kind: input, shape index: {}]
  %s3 = inlined_call_operand.vmem [shape: bf16[32,128], index: 3, kind: output, shape index: {}]
  %s4 = sld [smem:[#allocation0]]
  $region57: #{discriminator_forward.6} parent=0
    _
  %s6 = ssub.s32 1, %s4
  %s7 = scalar_select 0, %s6, %s4
  loop: start=0, step=1, limit=4
  $region2: #{discriminator_forward.6} parent=0 // loop_pre_header
    _
  $region3: #{discriminator_forward.6} parent=0 // loop_header
    %s9 = sphi 0, %s13
    %p10 = scmp.ge.s32.totalorder %s9, 4
    %s16 = sphi 0, %s28
    %s17 = sphi 0, %s24
    %s18 = sphi 0, %s16
    %s19 = sphi 0, %s17
    %s20 = sphi 0, %s18
    %s21 = sphi 0, %s19
    %s29 = sphi 0, %s29
    %s31 = sphi 0, %s29
    %s32 = sphi 0, %s31
    %s46 = sphi 0, %s32
    %s56 = sphi 0, %s58
    %s59 = sphi 0, %s56
    %s60 = sphi 0, %s59
    %s76 = sphi 0, %s60
    %s80 = sphi 0, %s80
    %s82 = sphi 0, %s80
    %s83 = sphi 0, %s82
    %s97 = sphi 0, %s83
    %s105 = sphi 0, %s107
    %s108 = sphi 0, %s105
    %s109 = sphi 0, %s108
    %s125 = sphi 0, %s109
  $region4: #{discriminator_forward.6} parent=0 // loop_header_branch
    %12 = sbr.rel (%p10) target = $region8
  $region5: #{discriminator_forward.6} parent=0 // loop_body
    %s14 = ssub.s32 %s9, 1
    %s15 = ssub.s32 %s9, 2
    %s22 = sadd.s32 1, %s17
    %p23 = scmp.ge.s32.totalorder %s22, 1
    %s24 = scalar_select %p23, 0, %s22
    %s25 = sadd.s32 1, %s16
    %s26 = scalar_select %p23, %s25, %s16
    %p27 = scmp.ge.s32.totalorder %s26, 2
    %s28 = scalar_select %p27, 0, %s26
    %s30 = sadd.s32 %s29, 1
    %p33 = scmp.eq.s32.totalorder %s9, 1
    %p34 = scmp.ne.s32.totalorder %s29, %s31
    %p35 = scmp.eq.s32.totalorder %s9, 0
    %p36 = por %p34, %p35
    %p37 = scmp.ne.s32.totalorder %s29, %s31
    %p38 = scmp.eq.s32.totalorder %s14, 1
    %p39 = por %p37, %p38
    %p40 = scmp.ne.s32.totalorder %s31, %s32
    %p41 = scmp.eq.s32.totalorder %s14, 0
    %p42 = por %p40, %p41
    %p43 = scmp.ne.s32.totalorder %s31, %s32
    %p44 = scmp.eq.s32.totalorder %s15, 1
    %p45 = por %p43, %p44
    %p47 = scmp.ne.s32.totalorder %s32, %s46
    %p48 = scmp.eq.s32.totalorder %s15, 0
    %p49 = por %p47, %p48
    %s50 = ssub.s32 1, %s16
    %s51 = smul.u32 %s17, %s50
    %s52 = ssub.s32 1, %s28
    %s53 = smul.u32 %s24, %s52
    %s54 = ssub.s32 %s51, %s53
    %p55 = scmp.eq.s32.totalorder %s54, 0
    %s57 = sadd.s32 %s56, 1
    %s58 = scalar_select %p55, %s56, %s57
    %p61 = pneg %p55
    %p62 = scmp.eq.s32.totalorder %s9, 1
    %p63 = por %p61, %p62
    %p64 = scmp.ne.s32.totalorder %s56, %s59
    %p65 = scmp.eq.s32.totalorder %s9, 0
    %p66 = por %p64, %p65
    %p67 = scmp.ne.s32.totalorder %s56, %s59
    %p68 = scmp.eq.s32.totalorder %s14, 1
    %p69 = por %p67, %p68
    %p70 = scmp.ne.s32.totalorder %s59, %s60
    %p71 = scmp.eq.s32.totalorder %s14, 0
    %p72 = por %p70, %p71
    %p73 = scmp.ne.s32.totalorder %s59, %s60
    %p74 = scmp.eq.s32.totalorder %s15, 1
    %p75 = por %p73, %p74
    %p77 = scmp.ne.s32.totalorder %s60, %s76
    %p78 = scmp.eq.s32.totalorder %s15, 0
    %p79 = por %p77, %p78
    %s81 = sadd.s32 %s80, 1
    %p84 = scmp.eq.s32.totalorder %s9, 1
    %p85 = scmp.ne.s32.totalorder %s80, %s82
    %p86 = scmp.eq.s32.totalorder %s9, 0
    %p87 = por %p85, %p86
    %p88 = scmp.ne.s32.totalorder %s80, %s82
    %p89 = scmp.eq.s32.totalorder %s14, 1
    %p90 = por %p88, %p89
    %p91 = scmp.ne.s32.totalorder %s82, %s83
    %p92 = scmp.eq.s32.totalorder %s14, 0
    %p93 = por %p91, %p92
    %p94 = scmp.ne.s32.totalorder %s82, %s83
    %p95 = scmp.eq.s32.totalorder %s15, 1
    %p96 = por %p94, %p95
    %p98 = scmp.ne.s32.totalorder %s83, %s97
    %p99 = scmp.eq.s32.totalorder %s15, 0
    %p100 = por %p98, %p99
    %s101 = smul.u32 %s17, %s16
    %s102 = smul.u32 %s24, %s28
    %s103 = ssub.s32 %s101, %s102
    %p104 = scmp.eq.s32.totalorder %s103, 0
    %s106 = sadd.s32 %s105, 1
    %s107 = scalar_select %p104, %s105, %s106
    %p110 = pneg %p104
    %p111 = scmp.eq.s32.totalorder %s9, 1
    %p112 = por %p110, %p111
    %p113 = scmp.ne.s32.totalorder %s105, %s108
    %p114 = scmp.eq.s32.totalorder %s9, 0
    %p115 = por %p113, %p114
    %p116 = scmp.ne.s32.totalorder %s105, %s108
    %p117 = scmp.eq.s32.totalorder %s14, 1
    %p118 = por %p116, %p117
    %p119 = scmp.ne.s32.totalorder %s108, %s109
    %p120 = scmp.eq.s32.totalorder %s14, 0
    %p121 = por %p119, %p120
    %p122 = scmp.ne.s32.totalorder %s108, %s109
    %p123 = scmp.eq.s32.totalorder %s15, 1
    %p124 = por %p122, %p123
    %p126 = scmp.ne.s32.totalorder %s109, %s125
    %p127 = scmp.eq.s32.totalorder %s15, 0
    %p128 = por %p126, %p127
    %p129 = scmp.le.s32.totalorder 1, %s9
    %p130 = scmp.lt.s32.totalorder %s9, 3
    %p131 = pnand %p129, %p130
    %p132 = pneg %p131
    // Predicated region
    $region9: #{discriminator_forward.6} parent=5 // pred_check
      _
    $region10: #{discriminator_forward.6} parent=5 // pred_check_branch
      %134 = sbr.rel (%p131) target = $region12
    $region11: #{discriminator_forward.6} parent=5 // pred_region
      %s135 = ssub.s32 %s9, 1
      // Predicated region
      $region13: #{discriminator_forward.6} parent=11 // pred_check
        %p136 = pneg %p42
      $region14: #{discriminator_forward.6} parent=11 // pred_check_branch
        %138 = sbr.rel (%p136) target = $region16
      $region15: #{discriminator_forward.6} parent=11 // pred_region
        _
      $region16: #{discriminator_forward.6} parent=11 // pred_fallthru
        _
      // Predicated region
      $region17: #{discriminator_forward.6} parent=11 // pred_check
        %p139 = pneg %p93
      $region18: #{discriminator_forward.6} parent=11 // pred_check_branch
        %141 = sbr.rel (%p139) target = $region20
      $region19: #{discriminator_forward.6} parent=11 // pred_region
        _
      $region20: #{discriminator_forward.6} parent=11 // pred_fallthru
        _
    $region12: #{discriminator_forward.6} parent=5 // pred_fallthru
      _
    %p142 = scmp.lt.s32.totalorder %s9, 2
    // Predicated region
    $region21: #{discriminator_forward.6} parent=5 // pred_check
      %p143 = pneg %p142
    $region22: #{discriminator_forward.6} parent=5 // pred_check_branch
      %145 = sbr.rel (%p143) target = $region24
    $region23: #{discriminator_forward.6} parent=5 // pred_region
      // Predicated region
      $region25: #{discriminator_forward.6} parent=23 // pred_check
        %p146 = pneg %p66
      $region26: #{discriminator_forward.6} parent=23 // pred_check_branch
        %148 = sbr.rel (%p146) target = $region28
      $region27: #{discriminator_forward.6} parent=23 // pred_region
        %s149 = ssub.s32 1, %s16
        %s150 = smul.u32 %s17, %s149
        %p151 = scmp.lt.s32.totalorder %s150, 0
        %s152 = scalar_select %p151, %s150, 0
        %s153 = smul.addr %s152, 4
        %s154 = scalar_lea.vmem %s1, %s153
        %s155 = ssub.s32 1, %s16
        %s156 = smul.u32 %s17, %s155
      $region28: #{discriminator_forward.6} parent=23 // pred_fallthru
        _
    $region24: #{discriminator_forward.6} parent=5 // pred_fallthru
      _
    %p157 = scmp.le.s32.totalorder 1, %s9
    %p158 = scmp.lt.s32.totalorder %s9, 3
    %p159 = pnand %p157, %p158
    %p160 = pneg %p159
    // Predicated region
    $region29: #{discriminator_forward.6} parent=5 // pred_check
      _
    $region30: #{discriminator_forward.6} parent=5 // pred_check_branch
      %162 = sbr.rel (%p159) target = $region32
    $region31: #{discriminator_forward.6} parent=5 // pred_region
      %s163 = ssub.s32 %s9, 1
      %p164 = pneg %p42
      %p165 = pneg %p39
      %s166 = ssub.s32 1, %s18
      %s167 = smul.u32 %s19, %s166
      %p168 = scmp.lt.s32.totalorder %s167, 0
      %s169 = scalar_select %p168, %s167, 0
      %s170 = smul.addr %s169, 4
      %s171 = scalar_lea.vmem %s1, %s170
      %p172 = pneg %p72
      %p173 = pneg %p69
      %p174 = pneg %p93
      %p175 = pneg %p90
      %p176 = pneg %p121
      %p177 = pneg %p118
      %s178 = smul.u32 %s19, %s18
      %p179 = scmp.lt.s32.totalorder %s178, 0
      %s180 = scalar_select %p179, %s178, 0
      %s181 = smul.addr %s180, 4
      %s182 = scalar_lea.vmem %s3, %s181
      %s183 = ssub.s32 1, %s18
      %s184 = smul.u32 %s19, %s183
      %p185 = scmp.lt.s32.totalorder %s184, 0
      %s186 = scalar_select %p185, %s184, 0
      %s187 = smul.addr %s186, 4
      %s188 = scalar_lea.vmem %s1, %s187
      %s189 = ssub.s32 1, %s18
      %s190 = smul.u32 %s19, %s189
      %s191 = smul.u32 %s19, %s18
      %p192 = scmp.lt.s32.totalorder %s191, 0
      %s193 = scalar_select %p192, %s191, 0
      %s194 = smul.addr %s193, 4
      %s195 = scalar_lea.vmem %s3, %s194
      %s196 = smul.u32 %s19, %s18
      %p198 = scmp.eq.s32.totalorder %s18, 0
      %p199 = scmp.eq.s32.totalorder %s19, 0
      %p200 = pnand %p198, %p199
      %p201 = pneg %p200
      // Predicated region
      $region33: #{discriminator_forward.6} parent=31 // pred_check
        _
      $region34: #{discriminator_forward.6} parent=31 // pred_check_branch
        %203 = sbr.rel (%p200) target = $region36
      $region35: #{discriminator_forward.6} parent=31 // pred_region
        %vm204 = vcmask 15360
        %205 = vst.msk [vmem:[#allocation3] sm:$0xff] %vm204, 0.0
        %206 = vst.msk [vmem:[#allocation3 + $0x8] sm:$0xff] %vm204, 0.0
        %207 = vst.msk [vmem:[#allocation3 + $0x10] sm:$0xff] %vm204, 0.0
        %208 = vst.msk [vmem:[#allocation3 + $0x18] sm:$0xff] %vm204, 0.0
      $region36: #{discriminator_forward.6} parent=31 // pred_fallthru
        _
      // Predicated region
      $region37: #{discriminator_forward.6} parent=31 // pred_check
        %p209 = pneg %p198
      $region38: #{discriminator_forward.6} parent=31 // pred_check_branch
        %211 = sbr.rel (%p209) target = $region40
      $region39: #{discriminator_forward.6} parent=31 // pred_region
        %v212 = vld [vmem:[%s0] sm:$0xff]
        %v213 = vld [vmem:[%s0 + $0x8] sm:$0xff]
        %v214 = vld [vmem:[%s0 + $0x10] sm:$0xff]
        %v215 = vld [vmem:[%s0 + $0x18] sm:$0xff]
        %v216 = vld [vmem:[%s188] sm:$0xf]
        %v217 = vld [vmem:[%s188 + $0x4] sm:$0xf]
        %v218 = vld [vmem:[%s188 + $0x8] sm:$0xf]
        %v219 = vld [vmem:[%s188 + $0xc] sm:$0xf]
        %v220 = vld [vmem:[%s188 + $0x10] sm:$0xf]
        %v221 = vld [vmem:[%s188 + $0x14] sm:$0xf]
        %v222 = vld [vmem:[%s188 + $0x18] sm:$0xf]
        %v223 = vld [vmem:[%s188 + $0x1c] sm:$0xf]
        %v224 = vld [vmem:[%s188 + $0x20] sm:$0xf]
        %v225 = vld [vmem:[%s188 + $0x24] sm:$0xf]
        %v226 = vld [vmem:[%s188 + $0x28] sm:$0xf]
        %v227 = vld [vmem:[%s188 + $0x2c] sm:$0xf]
        %v228 = vld [vmem:[%s188 + $0x30] sm:$0xf]
        %v229 = vld [vmem:[%s188 + $0x34] sm:$0xf]
        %v230 = vld [vmem:[%s188 + $0x38] sm:$0xf]
        %v231 = vld [vmem:[%s188 + $0x3c] sm:$0xf]
        %v232 = vld [vmem:[%s188 + $0x40] sm:$0xf]
        %v233 = vld [vmem:[%s188 + $0x44] sm:$0xf]
        %v234 = vld [vmem:[%s188 + $0x48] sm:$0xf]
        %v235 = vld [vmem:[%s188 + $0x4c] sm:$0xf]
        %v236 = vld [vmem:[%s188 + $0x50] sm:$0xf]
        %v237 = vld [vmem:[%s188 + $0x54] sm:$0xf]
        %v238 = vld [vmem:[%s188 + $0x58] sm:$0xf]
        %v239 = vld [vmem:[%s188 + $0x5c] sm:$0xf]
        %v240 = vld [vmem:[%s188 + $0x60] sm:$0xf]
        %v241 = vld [vmem:[%s188 + $0x64] sm:$0xf]
        %v242 = vld [vmem:[%s188 + $0x68] sm:$0xf]
        %v243 = vld [vmem:[%s188 + $0x6c] sm:$0xf]
        %v244 = vld [vmem:[%s188 + $0x70] sm:$0xf]
        %v245 = vld [vmem:[%s188 + $0x74] sm:$0xf]
        %v246 = vld [vmem:[%s188 + $0x78] sm:$0xf]
        %v247 = vld [vmem:[%s188 + $0x7c] sm:$0xf]
        %v252 = vunpack.c.l.b16 %v212
        %v253 = vunpack.c.h.b16 %v212
        %v254 = vunpack.c.l.b16 %v213
        %v255 = vunpack.c.h.b16 %v213
        %v256 = vunpack.c.l.b16 %v214
        %v257 = vunpack.c.h.b16 %v214
        %v258 = vunpack.c.l.b16 %v215
        %v259 = vunpack.c.h.b16 %v215
        %v260 = vpack.c.b16 %v254, %v252
        %v261 = vpack.c.b16 %v255, %v253
        %v262 = vpack.c.b16 %v258, %v256
        %v263 = vpack.c.b16 %v259, %v257
        %v300 = vunpack.c.l.b16 %v216
        %v301 = vunpack.c.l.b16 %v217
        %v302 = vunpack.c.l.b16 %v218
        %v303 = vunpack.c.l.b16 %v219
        %v304 = vunpack.c.l.b16 %v220
        %v305 = vunpack.c.l.b16 %v221
        %v306 = vunpack.c.l.b16 %v222
        %v307 = vunpack.c.l.b16 %v223
        %v308 = vunpack.c.l.b16 %v224
        %v309 = vunpack.c.l.b16 %v225
        %v310 = vunpack.c.l.b16 %v226
        %v311 = vunpack.c.l.b16 %v227
        %v312 = vunpack.c.l.b16 %v228
        %v313 = vunpack.c.l.b16 %v229
        %v314 = vunpack.c.l.b16 %v230
        %v315 = vunpack.c.l.b16 %v231
        %v316 = vunpack.c.l.b16 %v232
        %v317 = vunpack.c.l.b16 %v233
        %v318 = vunpack.c.l.b16 %v234
        %v319 = vunpack.c.l.b16 %v235
        %v320 = vunpack.c.l.b16 %v236
        %v321 = vunpack.c.l.b16 %v237
        %v322 = vunpack.c.l.b16 %v238
        %v323 = vunpack.c.l.b16 %v239
        %v324 = vunpack.c.l.b16 %v240
        %v325 = vunpack.c.l.b16 %v241
        %v326 = vunpack.c.l.b16 %v242
        %v327 = vunpack.c.l.b16 %v243
        %v328 = vunpack.c.l.b16 %v244
        %v329 = vunpack.c.l.b16 %v245
        %v330 = vunpack.c.l.b16 %v246
        %v331 = vunpack.c.l.b16 %v247
        %v332 = vpack.c.b16 %v301, %v300
        %v333 = vpack.c.b16 %v303, %v302
        %v334 = vpack.c.b16 %v305, %v304
        %v335 = vpack.c.b16 %v307, %v306
        %v336 = vpack.c.b16 %v309, %v308
        %v337 = vpack.c.b16 %v311, %v310
        %v338 = vpack.c.b16 %v313, %v312
        %v339 = vpack.c.b16 %v315, %v314
        %v340 = vpack.c.b16 %v317, %v316
        %v341 = vpack.c.b16 %v319, %v318
        %v342 = vpack.c.b16 %v321, %v320
        %v343 = vpack.c.b16 %v323, %v322
        %v344 = vpack.c.b16 %v325, %v324
        %v345 = vpack.c.b16 %v327, %v326
        %v346 = vpack.c.b16 %v329, %v328
        %v347 = vpack.c.b16 %v331, %v330
        %364 = vmatprep.subr.bf16.mxu0 0
        %365 = vmatpush1.bf16.msra.mxu0 %v339
        %366 = vmatprep.subr.bf16.mxu0 0
        %367 = vmatpush1.bf16.msra.mxu0 %v338
        %368 = vmatprep.subr.bf16.mxu0 0
        %369 = vmatpush1.bf16.msra.mxu0 %v337
        %370 = vmatprep.subr.bf16.mxu0 0
        %371 = vmatpush1.bf16.msra.mxu0 %v336
        %372 = vmatprep.subr.bf16.mxu0 0
        %373 = vmatpush1.bf16.msra.mxu0 %v335
        %374 = vmatprep.subr.bf16.mxu0 0
        %375 = vmatpush1.bf16.msra.mxu0 %v334
        %376 = vmatprep.subr.bf16.mxu0 0
        %377 = vmatpush1.bf16.msra.mxu0 %v333
        %378 = vmatprep.subr.bf16.mxu0 0
        %379 = vmatpush1.bf16.msra.mxu0 %v332
        %380 = vmatprep.subr.bf16.mxu0 0
        %381 = vmatpush2.bf16.msra.mxu0 %v347
        %382 = vmatprep.subr.bf16.mxu0 0
        %383 = vmatpush2.bf16.msra.mxu0 %v346
        %384 = vmatprep.subr.bf16.mxu0 0
        %385 = vmatpush2.bf16.msra.mxu0 %v345
        %386 = vmatprep.subr.bf16.mxu0 0
        %387 = vmatpush2.bf16.msra.mxu0 %v344
        %388 = vmatprep.subr.bf16.mxu0 0
        %389 = vmatpush2.bf16.msra.mxu0 %v343
        %390 = vmatprep.subr.bf16.mxu0 0
        %391 = vmatpush2.bf16.msra.mxu0 %v342
        %392 = vmatprep.subr.bf16.mxu0 0
        %393 = vmatpush2.bf16.msra.mxu0 %v341
        %394 = vmatprep.subr.bf16.mxu0 0
        %395 = vmatpush2.bf16.msra.mxu0 %v340
        %396 = vmatprep.mubr.bf16.mxu0 %v261
        %397 = vmatmul.mubr.bf16.gmra.mxu0 %v260
        %v398 = vpop.f32.mrf.mxu0
        %v399 = vadd.f32 0.0, %v398
        %v400 = vpop.f32.mrf.mxu0
        %v401 = vpop.f32.mrf.mxu0
        %v402 = vadd.f32 0.0, %v401
        %v403 = vpop.f32.mrf.mxu0
        %404 = vmatprep.mubr.bf16.mxu0 %v263
        %405 = vmatmul.mubr.bf16.gmra.mxu0 %v262
        %v406 = vpop.f32.mrf.mxu0
        %v407 = vadd.f32 0.0, %v406
        %v408 = vpop.f32.mrf.mxu0
        %v409 = vpop.f32.mrf.mxu0
        %v410 = vadd.f32 0.0, %v409
        %v411 = vpop.f32.mrf.mxu0
        %412 = vdwg.mxu0
        %s413 = smul.u32 %s19, 128
        %s414 = sshra.s32 %s413, 7
        %s415 = sand.u32 %s413, 127
        %s416 = scalar_lea.vmem [#allocation2], %s414
        %417 = vst [vmem:[%s416] sm:$0xff] %v399
        %418 = vst [vmem:[%s416 + $0x8] sm:$0xff] %v402
        %419 = vst [vmem:[%s416 + $0x10] sm:$0xff] %v407
        %420 = vst [vmem:[%s416 + $0x18] sm:$0xff] %v410
        %v421 = vld [vmem:[#allocation3] sm:$0xff]
        %v422 = vld [vmem:[#allocation3 + $0x8] sm:$0xff]
        %v423 = vld [vmem:[#allocation3 + $0x10] sm:$0xff]
        %v424 = vld [vmem:[#allocation3 + $0x18] sm:$0xff]
        %425 = vadd.xlane.f32.xlu0 %v399
        %v426 = vpop.xlane.xlu0 %425
        %427 = vadd.xlane.f32.xlu0 %v402
        %v428 = vpop.xlane.xlu0 %427
        %429 = vadd.xlane.f32.xlu0 %v407
        %v430 = vpop.xlane.xlu0 %429
        %431 = vadd.xlane.f32.xlu0 %v410
        %v432 = vpop.xlane.xlu0 %431
        %v433 = vadd.f32 %v421, %v426
        %v434 = vadd.f32 %v422, %v428
        %v435 = vadd.f32 %v423, %v430
        %v436 = vadd.f32 %v424, %v432
        %vm437 = vcmask 7168
        %438 = vst.msk [vmem:[#allocation3] sm:$0xff] %vm437, %v433
        %439 = vst.msk [vmem:[#allocation3 + $0x8] sm:$0xff] %vm437, %v434
        %440 = vst.msk [vmem:[#allocation3 + $0x10] sm:$0xff] %vm437, %v435
        %441 = vst.msk [vmem:[#allocation3 + $0x18] sm:$0xff] %vm437, %v436
        %v442 = vld [vmem:[#allocation3] sm:$0xff]
        %v443 = vld [vmem:[#allocation3 + $0x8] sm:$0xff]
        %v444 = vld [vmem:[#allocation3 + $0x10] sm:$0xff]
        %v445 = vld [vmem:[#allocation3 + $0x18] sm:$0xff]
        %v446 = vmul.f32 %v399, %v399
        %v447 = vmul.f32 %v402, %v402
        %v448 = vmul.f32 %v407, %v407
        %v449 = vmul.f32 %v410, %v410
        %450 = vadd.xlane.f32.xlu0 %v446
        %v451 = vpop.xlane.xlu0 %450
        %452 = vadd.xlane.f32.xlu0 %v447
        %v453 = vpop.xlane.xlu0 %452
        %454 = vadd.xlane.f32.xlu0 %v448
        %v455 = vpop.xlane.xlu0 %454
        %456 = vadd.xlane.f32.xlu0 %v449
        %v457 = vpop.xlane.xlu0 %456
        %v458 = vadd.f32 %v442, %v451
        %v459 = vadd.f32 %v443, %v453
        %v460 = vadd.f32 %v444, %v455
        %v461 = vadd.f32 %v445, %v457
        %vm462 = vcmask 15368
        %463 = vst.msk [vmem:[#allocation3] sm:$0xff] %vm462, %v458
        %464 = vst.msk [vmem:[#allocation3 + $0x8] sm:$0xff] %vm462, %v459
        %465 = vst.msk [vmem:[#allocation3 + $0x10] sm:$0xff] %vm462, %v460
        %466 = vst.msk [vmem:[#allocation3 + $0x18] sm:$0xff] %vm462, %v461
      $region40: #{discriminator_forward.6} parent=31 // pred_fallthru
        _
      %p467 = scmp.eq.s32.totalorder %s18, 1
      // Predicated region
      $region41: #{discriminator_forward.6} parent=31 // pred_check
        %p468 = pneg %p467
      $region42: #{discriminator_forward.6} parent=31 // pred_check_branch
        %470 = sbr.rel (%p468) target = $region44
      $region43: #{discriminator_forward.6} parent=31 // pred_region
        %v471 = vld [vmem:[#allocation3] sm:$0xff]
        %v472 = vld [vmem:[#allocation3 + $0x8] sm:$0xff]
        %v473 = vld [vmem:[#allocation3 + $0x10] sm:$0xff]
        %v474 = vld [vmem:[#allocation3 + $0x18] sm:$0xff]
        %v475 = vmul.f32 %v471, 0.0078125
        %v476 = vmul.f32 %v472, 0.0078125
        %v477 = vmul.f32 %v473, 0.0078125
        %v478 = vmul.f32 %v474, 0.0078125
        %v479 = vmul.f32 %v475, %v475
        %v480 = vmul.f32 %v476, %v476
        %v481 = vmul.f32 %v477, %v477
        %v482 = vmul.f32 %v478, %v478
        %487 = vrot.lane.b32.xlu0 %v479, 1
        %v488 = vpop.permute.xlu0 %487
        %489 = vrot.lane.b32.xlu0 %v480, 1
        %v490 = vpop.permute.xlu0 %489
        %491 = vrot.lane.b32.xlu0 %v481, 1
        %v492 = vpop.permute.xlu0 %491
        %493 = vrot.lane.b32.xlu0 %v482, 1
        %v494 = vpop.permute.xlu0 %493
        %v499 = vsub.f32 %v475, %v488
        %v500 = vsub.f32 %v476, %v490
        %v501 = vsub.f32 %v477, %v492
        %v502 = vsub.f32 %v478, %v494
        %v503 = vmax.f32 %v499, 0.0
        %v504 = vmax.f32 %v500, 0.0
        %v505 = vmax.f32 %v501, 0.0
        %v506 = vmax.f32 %v502, 0.0
        %v507 = vld [vmem:[%s2] sm:$0xff]
        %v508 = vld [vmem:[%s2 + $0x8] sm:$0xff]
        %v509 = vld [vmem:[%s2 + $0x10] sm:$0xff]
        %v510 = vld [vmem:[%s2 + $0x18] sm:$0xff]
        %v511 = vadd.f32 %v503, 1e-05
        %v512 = vadd.f32 %v504, 1e-05
        %v513 = vadd.f32 %v505, 1e-05
        %v514 = vadd.f32 %v506, 1e-05
        %v515 = vrsqrt.pop %v511
        %v516 = vrsqrt.pop %v512
        %v517 = vrsqrt.pop %v513
        %v518 = vrsqrt.pop %v514
        %523 = vrot.lane.b32.xlu0 %v515, 127
        %v524 = vpop.permute.xlu0 %523
        %525 = vrot.lane.b32.xlu0 %v516, 127
        %v526 = vpop.permute.xlu0 %525
        %527 = vrot.lane.b32.xlu0 %v517, 127
        %v528 = vpop.permute.xlu0 %527
        %529 = vrot.lane.b32.xlu0 %v518, 127
        %v530 = vpop.permute.xlu0 %529
        %v535 = vmul.f32 %v507, %v524
        %v536 = vmul.f32 %v508, %v526
        %v537 = vmul.f32 %v509, %v528
        %v538 = vmul.f32 %v510, %v530
        %v539 = vmul.f32 %v475, %v535
        %v540 = vmul.f32 %v476, %v536
        %v541 = vmul.f32 %v477, %v537
        %v542 = vmul.f32 %v478, %v538
        %547 = vrot.lane.b32.xlu0 %v539, 1
        %v548 = vpop.permute.xlu0 %547
        %549 = vrot.lane.b32.xlu0 %v540, 1
        %v550 = vpop.permute.xlu0 %549
        %551 = vrot.lane.b32.xlu0 %v541, 1
        %v552 = vpop.permute.xlu0 %551
        %553 = vrot.lane.b32.xlu0 %v542, 1
        %v554 = vpop.permute.xlu0 %553
        %v559 = vsub.f32 %v507, %v548
        %v560 = vsub.f32 %v508, %v550
        %v561 = vsub.f32 %v509, %v552
        %v562 = vsub.f32 %v510, %v554
        %s563 = smul.u32 %s19, 128
        %s564 = sshra.s32 %s563, 7
        %s565 = sand.u32 %s563, 127
        %s566 = scalar_lea.vmem [#allocation2], %s564
        %v567 = vld [vmem:[%s566] sm:$0xff]
        %v568 = vld [vmem:[%s566 + $0x8] sm:$0xff]
        %v569 = vld [vmem:[%s566 + $0x10] sm:$0xff]
        %v570 = vld [vmem:[%s566 + $0x18] sm:$0xff]
        %572 = vset.pattern.permute.xlu0 0
        %573 = vperm.xlu0 %572, %v535
        %v574 = vpop.permute.xlu0 %573
        %577 = vset.pattern.permute.xlu0 0
        %578 = vperm.xlu0 %577, %v536
        %v579 = vpop.permute.xlu0 %578
        %582 = vset.pattern.permute.xlu0 0
        %583 = vperm.xlu0 %582, %v537
        %v584 = vpop.permute.xlu0 %583
        %587 = vset.pattern.permute.xlu0 0
        %588 = vperm.xlu0 %587, %v538
        %v589 = vpop.permute.xlu0 %588
        %v591 = vmul.f32 %v567, %v574
        %v592 = vmul.f32 %v568, %v579
        %v593 = vmul.f32 %v569, %v584
        %v594 = vmul.f32 %v570, %v589
        %596 = vset.pattern.permute.xlu0 1
        %597 = vperm.xlu0 %596, %v559
        %v598 = vpop.permute.xlu0 %597
        %601 = vset.pattern.permute.xlu0 1
        %602 = vperm.xlu0 %601, %v560
        %v603 = vpop.permute.xlu0 %602
        %606 = vset.pattern.permute.xlu0 1
        %607 = vperm.xlu0 %606, %v561
        %v608 = vpop.permute.xlu0 %607
        %611 = vset.pattern.permute.xlu0 1
        %612 = vperm.xlu0 %611, %v562
        %v613 = vpop.permute.xlu0 %612
        %v615 = vadd.f32 %v591, %v598
        %v616 = vadd.f32 %v592, %v603
        %v617 = vadd.f32 %v593, %v608
        %v618 = vadd.f32 %v594, %v613
        %vm619 = vcmp.ge.f32.partialorder %v615, 0.0
        %vm620 = vcmp.ge.f32.partialorder %v616, 0.0
        %vm621 = vcmp.ge.f32.partialorder %v617, 0.0
        %vm622 = vcmp.ge.f32.partialorder %v618, 0.0
        %v623 = vmul.f32 %v615, 0.2
        %v624 = vmul.f32 %v616, 0.2
        %v625 = vmul.f32 %v617, 0.2
        %v626 = vmul.f32 %v618, 0.2
        %v627 = vsel %vm619, %v615, %v623
        %v628 = vsel %vm620, %v616, %v624
        %v629 = vsel %vm621, %v617, %v625
        %v630 = vsel %vm622, %v618, %v626
        %v631 = vpack.c.bf16 %v628, %v627
        %v632 = vpack.c.bf16 %v630, %v629
        %v635 = vunpack.c.l.b16 %v631
        %v636 = vunpack.c.h.b16 %v631
        %v637 = vunpack.c.l.b16 %v632
        %v638 = vunpack.c.h.b16 %v632
        %v639 = vpack.c.b16 %v635, %v635
        %v640 = vpack.c.b16 %v636, %v636
        %v641 = vpack.c.b16 %v637, %v637
        %v642 = vpack.c.b16 %v638, %v638
        %647 = vst [vmem:[%s195] sm:$0xf] %v639
        %648 = vst [vmem:[%s195 + $0x4] sm:$0xf] %v640
        %649 = vst [vmem:[%s195 + $0x8] sm:$0xf] %v641
        %650 = vst [vmem:[%s195 + $0xc] sm:$0xf] %v642
      $region44: #{discriminator_forward.6} parent=31 // pred_fallthru
        _
      %s651 = smul.u32 %s19, %s18
      %p652 = scmp.lt.s32.totalorder %s651, 0
      %s653 = scalar_select %p652, %s651, 0
      %s654 = smul.addr %s653, 4
      %s655 = scalar_lea.vmem %s3, %s654
      // Predicated region
      $region45: #{discriminator_forward.6} parent=31 // pred_check
        %p656 = pneg %p118
      $region46: #{discriminator_forward.6} parent=31 // pred_check_branch
        %658 = sbr.rel (%p656) target = $region48
      $region47: #{discriminator_forward.6} parent=31 // pred_region
        %s659 = smul.u32 %s19, %s18
      $region48: #{discriminator_forward.6} parent=31 // pred_fallthru
        _
    $region32: #{discriminator_forward.6} parent=5 // pred_fallthru
      _
    %p660 = scmp.le.s32.totalorder 2, %s9
    // Predicated region
    $region49: #{discriminator_forward.6} parent=5 // pred_check
      %p661 = pneg %p660
    $region50: #{discriminator_forward.6} parent=5 // pred_check_branch
      %663 = sbr.rel (%p661) target = $region52
    $region51: #{discriminator_forward.6} parent=5 // pred_region
      %s664 = ssub.s32 %s9, 2
      // Predicated region
      $region53: #{discriminator_forward.6} parent=51 // pred_check
        %p665 = pneg %p124
      $region54: #{discriminator_forward.6} parent=51 // pred_check_branch
        %667 = sbr.rel (%p665) target = $region56
      $region55: #{discriminator_forward.6} parent=51 // pred_region
        %s668 = smul.u32 %s21, %s20
        %p669 = scmp.lt.s32.totalorder %s668, 0
        %s670 = scalar_select %p669, %s668, 0
        %s671 = smul.addr %s670, 4
        %s672 = scalar_lea.vmem %s3, %s671
      $region56: #{discriminator_forward.6} parent=51 // pred_fallthru
        _
    $region52: #{discriminator_forward.6} parent=5 // pred_fallthru
      _
  $region6: #{discriminator_forward.6} parent=0 // loop_footer
    %s13 = sadd.s32 1, %s9
  $region7: #{discriminator_forward.6} parent=0 // loop_footer_branch
    %8 = sbr.rel target = $region3
  $region8: #{discriminator_forward.6} parent=0 // loop_exit
    _

// kernel: discriminator_forward.7
$region0: #{discriminator_forward.7}
  #allocation0 [shape = 'u32[]', space=smem, size = 0x4, offset = 0x4, fixed_abs, tag = 'smem constant byte address 0x4 - core index']
  #allocation1 [shape = 'u32[144,128]{1,0:T(1,128)}', space=vmem, size = 0x12000, scoped, tag = 'internal scratch']
  #allocation2 [shape = 'f32[1,1]{1,0:T(1,128)S(1)}', space=vmem, size = 0x200, scoped, tag = 'scoped memory for discriminator_forward.7']
  %s0 = inlined_call_operand.vmem [shape: bf16[64,512], index: 0, kind: input, shape index: {}]
  %s1 = inlined_call_operand.vmem [shape: bf16[512,32], index: 1, kind: input, shape index: {}]
  %s2 = inlined_call_operand.vmem [shape: f32[64,2], index: 2, kind: input, shape index: {}]
  %s3 = inlined_call_operand.vmem [shape: f32[64,16], index: 3, kind: input, shape index: {}]
  %s4 = inlined_call_operand.<no memory space> [shape: f32[1,1], index: 4, kind: input, shape index: {}]
  %s5 = inlined_call_operand.hbm [shape: f32[1,2], index: 5, kind: output, shape index: {}]
  %s6 = sld [smem:[#allocation0]]
  $region30: #{discriminator_forward.7} parent=0
    _
  %s8 = ssub.s32 1, %s6
  %s9 = scalar_select 0, %s8, %s6
  %v10 = vstv %s4
  %11 = vst [vmem:[#allocation2] sm:$0x1] %v10
  $region1: #{discriminator_forward.7} parent=0
    #allocation3 [shape = 'u8[512]{0}', space=vmem, size = 0x400, scoped, tag = 'output window, operand 0, single buffered']
    #allocation4 [shape = 's32[1]{0}', space=sflag, size = 0x4, scoped, tag = 'scoped memory for discriminator_forward.7']
    %12 = vsyncpa [#allocation4], 0
    // Predicated region
    $region2: #{discriminator_forward.7} parent=1 // pred_check
      _
    $region3: #{discriminator_forward.7} parent=1 // pred_check_branch
      %14 = sbr.rel (0) target = $region5
    $region4: #{discriminator_forward.7} parent=1 // pred_region
      _
    $region5: #{discriminator_forward.7} parent=1 // pred_fallthru
      _
    // Predicated region
    $region6: #{discriminator_forward.7} parent=1 // pred_check
      _
    $region7: #{discriminator_forward.7} parent=1 // pred_check_branch
      %16 = sbr.rel (0) target = $region9
    $region8: #{discriminator_forward.7} parent=1 // pred_region
      _
    $region9: #{discriminator_forward.7} parent=1 // pred_fallthru
      _
    // Predicated region
    $region10: #{discriminator_forward.7} parent=1 // pred_check
      _
    $region11: #{discriminator_forward.7} parent=1 // pred_check_branch
      %18 = sbr.rel (0) target = $region13
    $region12: #{discriminator_forward.7} parent=1 // pred_region
      _
    $region13: #{discriminator_forward.7} parent=1 // pred_fallthru
      _
    // Predicated region
    $region14: #{discriminator_forward.7} parent=1 // pred_check
      _
    $region15: #{discriminator_forward.7} parent=1 // pred_check_branch
      %20 = sbr.rel (0) target = $region17
    $region16: #{discriminator_forward.7} parent=1 // pred_region
      _
    $region17: #{discriminator_forward.7} parent=1 // pred_fallthru
      _
    // Predicated region
    $region18: #{discriminator_forward.7} parent=1 // pred_check
      _
    $region19: #{discriminator_forward.7} parent=1 // pred_check_branch
      %22 = sbr.rel (0) target = $region21
    $region20: #{discriminator_forward.7} parent=1 // pred_region
      _
    $region21: #{discriminator_forward.7} parent=1 // pred_fallthru
      _
    %v24 = vld [vmem:[%s0] sm:$0xff]
    %v25 = vld [vmem:[%s0 + $0x8] sm:$0xff]
    %v26 = vld [vmem:[%s0 + $0x10] sm:$0xff]
    %v27 = vld [vmem:[%s0 + $0x18] sm:$0xff]
    %v28 = vld [vmem:[%s0 + $0x20] sm:$0xff]
    %v29 = vld [vmem:[%s0 + $0x28] sm:$0xff]
    %v30 = vld [vmem:[%s0 + $0x30] sm:$0xff]
    %v31 = vld [vmem:[%s0 + $0x38] sm:$0xff]
    %v32 = vld [vmem:[%s0 + $0x40] sm:$0xff]
    %v33 = vld [vmem:[%s0 + $0x48] sm:$0xff]
    %v34 = vld [vmem:[%s0 + $0x50] sm:$0xff]
    %v35 = vld [vmem:[%s0 + $0x58] sm:$0xff]
    %v36 = vld [vmem:[%s0 + $0x60] sm:$0xff]
    %v37 = vld [vmem:[%s0 + $0x68] sm:$0xff]
    %v38 = vld [vmem:[%s0 + $0x70] sm:$0xff]
    %v39 = vld [vmem:[%s0 + $0x78] sm:$0xff]
    %v40 = vld [vmem:[%s1] sm:$0xf]
    %v41 = vld [vmem:[%s1 + $0x4] sm:$0xf]
    %v42 = vld [vmem:[%s1 + $0x8] sm:$0xf]
    %v43 = vld [vmem:[%s1 + $0xc] sm:$0xf]
    %v44 = vld [vmem:[%s1 + $0x10] sm:$0xf]
    %v45 = vld [vmem:[%s1 + $0x14] sm:$0xf]
    %v46 = vld [vmem:[%s1 + $0x18] sm:$0xf]
    %v47 = vld [vmem:[%s1 + $0x1c] sm:$0xf]
    %v48 = vld [vmem:[%s1 + $0x20] sm:$0xf]
    %v49 = vld [vmem:[%s1 + $0x24] sm:$0xf]
    %v50 = vld [vmem:[%s1 + $0x28] sm:$0xf]
    %v51 = vld [vmem:[%s1 + $0x2c] sm:$0xf]
    %v52 = vld [vmem:[%s1 + $0x30] sm:$0xf]
    %v53 = vld [vmem:[%s1 + $0x34] sm:$0xf]
    %v54 = vld [vmem:[%s1 + $0x38] sm:$0xf]
    %v55 = vld [vmem:[%s1 + $0x3c] sm:$0xf]
    %v56 = vld [vmem:[%s1 + $0x40] sm:$0xf]
    %v57 = vld [vmem:[%s1 + $0x44] sm:$0xf]
    %v58 = vld [vmem:[%s1 + $0x48] sm:$0xf]
    %v59 = vld [vmem:[%s1 + $0x4c] sm:$0xf]
    %v60 = vld [vmem:[%s1 + $0x50] sm:$0xf]
    %v61 = vld [vmem:[%s1 + $0x54] sm:$0xf]
    %v62 = vld [vmem:[%s1 + $0x58] sm:$0xf]
    %v63 = vld [vmem:[%s1 + $0x5c] sm:$0xf]
    %v64 = vld [vmem:[%s1 + $0x60] sm:$0xf]
    %v65 = vld [vmem:[%s1 + $0x64] sm:$0xf]
    %v66 = vld [vmem:[%s1 + $0x68] sm:$0xf]
    %v67 = vld [vmem:[%s1 + $0x6c] sm:$0xf]
    %v68 = vld [vmem:[%s1 + $0x70] sm:$0xf]
    %v69 = vld [vmem:[%s1 + $0x74] sm:$0xf]
    %v70 = vld [vmem:[%s1 + $0x78] sm:$0xf]
    %v71 = vld [vmem:[%s1 + $0x7c] sm:$0xf]
    %v72 = vld [vmem:[%s1 + $0x80] sm:$0xf]
    %v73 = vld [vmem:[%s1 + $0x84] sm:$0xf]
    %v74 = vld [vmem:[%s1 + $0x88] sm:$0xf]
    %v75 = vld [vmem:[%s1 + $0x8c] sm:$0xf]
    %v76 = vld [vmem:[%s1 + $0x90] sm:$0xf]
    %v77 = vld [vmem:[%s1 + $0x94] sm:$0xf]
    %v78 = vld [vmem:[%s1 + $0x98] sm:$0xf]
    %v79 = vld [vmem:[%s1 + $0x9c] sm:$0xf]
    %v80 = vld [vmem:[%s1 + $0xa0] sm:$0xf]
    %v81 = vld [vmem:[%s1 + $0xa4] sm:$0xf]
    %v82 = vld [vmem:[%s1 + $0xa8] sm:$0xf]
    %v83 = vld [vmem:[%s1 + $0xac] sm:$0xf]
    %v84 = vld [vmem:[%s1 + $0xb0] sm:$0xf]
    %v85 = vld [vmem:[%s1 + $0xb4] sm:$0xf]
    %v86 = vld [vmem:[%s1 + $0xb8] sm:$0xf]
    %v87 = vld [vmem:[%s1 + $0xbc] sm:$0xf]
    %v88 = vld [vmem:[%s1 + $0xc0] sm:$0xf]
    %v89 = vld [vmem:[%s1 + $0xc4] sm:$0xf]
    %v90 = vld [vmem:[%s1 + $0xc8] sm:$0xf]
    %v91 = vld [vmem:[%s1 + $0xcc] sm:$0xf]
    %v92 = vld [vmem:[%s1 + $0xd0] sm:$0xf]
    %v93 = vld [vmem:[%s1 + $0xd4] sm:$0xf]
    %v94 = vld [vmem:[%s1 + $0xd8] sm:$0xf]
    %v95 = vld [vmem:[%s1 + $0xdc] sm:$0xf]
    %v96 = vld [vmem:[%s1 + $0xe0] sm:$0xf]
    %v97 = vld [vmem:[%s1 + $0xe4] sm:$0xf]
    %v98 = vld [vmem:[%s1 + $0xe8] sm:$0xf]
    %v99 = vld [vmem:[%s1 + $0xec] sm:$0xf]
    %v100 = vld [vmem:[%s1 + $0xf0] sm:$0xf]
    %v101 = vld [vmem:[%s1 + $0xf4] sm:$0xf]
    %v102 = vld [vmem:[%s1 + $0xf8] sm:$0xf]
    %v103 = vld [vmem:[%s1 + $0xfc] sm:$0xf]
    %v120 = vunpack.c.l.b16 %v24
    %v121 = vunpack.c.h.b16 %v24
    %v122 = vunpack.c.l.b16 %v25
    %v123 = vunpack.c.h.b16 %v25
    %v124 = vunpack.c.l.b16 %v26
    %v125 = vunpack.c.h.b16 %v26
    %v126 = vunpack.c.l.b16 %v27
    %v127 = vunpack.c.h.b16 %v27
    %v128 = vunpack.c.l.b16 %v28
    %v129 = vunpack.c.h.b16 %v28
    %v130 = vunpack.c.l.b16 %v29
    %v131 = vunpack.c.h.b16 %v29
    %v132 = vunpack.c.l.b16 %v30
    %v133 = vunpack.c.h.b16 %v30
    %v134 = vunpack.c.l.b16 %v31
    %v135 = vunpack.c.h.b16 %v31
    %v136 = vunpack.c.l.b16 %v32
    %v137 = vunpack.c.h.b16 %v32
    %v138 = vunpack.c.l.b16 %v33
    %v139 = vunpack.c.h.b16 %v33
    %v140 = vunpack.c.l.b16 %v34
    %v141 = vunpack.c.h.b16 %v34
    %v142 = vunpack.c.l.b16 %v35
    %v143 = vunpack.c.h.b16 %v35
    %v144 = vunpack.c.l.b16 %v36
    %v145 = vunpack.c.h.b16 %v36
    %v146 = vunpack.c.l.b16 %v37
    %v147 = vunpack.c.h.b16 %v37
    %v148 = vunpack.c.l.b16 %v38
    %v149 = vunpack.c.h.b16 %v38
    %v150 = vunpack.c.l.b16 %v39
    %v151 = vunpack.c.h.b16 %v39
    %v152 = vpack.c.b16 %v124, %v120
    %v153 = vpack.c.b16 %v125, %v121
    %v154 = vpack.c.b16 %v126, %v122
    %v155 = vpack.c.b16 %v127, %v123
    %v156 = vpack.c.b16 %v132, %v128
    %v157 = vpack.c.b16 %v133, %v129
    %v158 = vpack.c.b16 %v134, %v130
    %v159 = vpack.c.b16 %v135, %v131
    %v160 = vpack.c.b16 %v140, %v136
    %v161 = vpack.c.b16 %v141, %v137
    %v162 = vpack.c.b16 %v142, %v138
    %v163 = vpack.c.b16 %v143, %v139
    %v164 = vpack.c.b16 %v148, %v144
    %v165 = vpack.c.b16 %v149, %v145
    %v166 = vpack.c.b16 %v150, %v146
    %v167 = vpack.c.b16 %v151, %v147
    %v248 = vunpack.c.l.b16 %v40
    %v249 = vunpack.c.l.b16 %v41
    %v250 = vunpack.c.l.b16 %v42
    %v251 = vunpack.c.l.b16 %v43
    %v252 = vunpack.c.l.b16 %v44
    %v253 = vunpack.c.l.b16 %v45
    %v254 = vunpack.c.l.b16 %v46
    %v255 = vunpack.c.l.b16 %v47
    %v256 = vunpack.c.l.b16 %v48
    %v257 = vunpack.c.l.b16 %v49
    %v258 = vunpack.c.l.b16 %v50
    %v259 = vunpack.c.l.b16 %v51
    %v260 = vunpack.c.l.b16 %v52
    %v261 = vunpack.c.l.b16 %v53
    %v262 = vunpack.c.l.b16 %v54
    %v263 = vunpack.c.l.b16 %v55
    %v264 = vunpack.c.l.b16 %v56
    %v265 = vunpack.c.l.b16 %v57
    %v266 = vunpack.c.l.b16 %v58
    %v267 = vunpack.c.l.b16 %v59
    %v268 = vunpack.c.l.b16 %v60
    %v269 = vunpack.c.l.b16 %v61
    %v270 = vunpack.c.l.b16 %v62
    %v271 = vunpack.c.l.b16 %v63
    %v272 = vunpack.c.l.b16 %v64
    %v273 = vunpack.c.l.b16 %v65
    %v274 = vunpack.c.l.b16 %v66
    %v275 = vunpack.c.l.b16 %v67
    %v276 = vunpack.c.l.b16 %v68
    %v277 = vunpack.c.l.b16 %v69
    %v278 = vunpack.c.l.b16 %v70
    %v279 = vunpack.c.l.b16 %v71
    %v280 = vunpack.c.l.b16 %v72
    %v281 = vunpack.c.l.b16 %v73
    %v282 = vunpack.c.l.b16 %v74
    %v283 = vunpack.c.l.b16 %v75
    %v284 = vunpack.c.l.b16 %v76
    %v285 = vunpack.c.l.b16 %v77
    %v286 = vunpack.c.l.b16 %v78
    %v287 = vunpack.c.l.b16 %v79
    %v288 = vunpack.c.l.b16 %v80
    %v289 = vunpack.c.l.b16 %v81
    %v290 = vunpack.c.l.b16 %v82
    %v291 = vunpack.c.l.b16 %v83
    %v292 = vunpack.c.l.b16 %v84
    %v293 = vunpack.c.l.b16 %v85
    %v294 = vunpack.c.l.b16 %v86
    %v295 = vunpack.c.l.b16 %v87
    %v296 = vunpack.c.l.b16 %v88
    %v297 = vunpack.c.l.b16 %v89
    %v298 = vunpack.c.l.b16 %v90
    %v299 = vunpack.c.l.b16 %v91
    %v300 = vunpack.c.l.b16 %v92
    %v301 = vunpack.c.l.b16 %v93
    %v302 = vunpack.c.l.b16 %v94
    %v303 = vunpack.c.l.b16 %v95
    %v304 = vunpack.c.l.b16 %v96
    %v305 = vunpack.c.l.b16 %v97
    %v306 = vunpack.c.l.b16 %v98
    %v307 = vunpack.c.l.b16 %v99
    %v308 = vunpack.c.l.b16 %v100
    %v309 = vunpack.c.l.b16 %v101
    %v310 = vunpack.c.l.b16 %v102
    %v311 = vunpack.c.l.b16 %v103
    %v312 = vpack.c.b16 %v249, %v248
    %v313 = vpack.c.b16 %v251, %v250
    %v314 = vpack.c.b16 %v253, %v252
    %v315 = vpack.c.b16 %v255, %v254
    %v316 = vpack.c.b16 %v257, %v256
    %v317 = vpack.c.b16 %v259, %v258
    %v318 = vpack.c.b16 %v261, %v260
    %v319 = vpack.c.b16 %v263, %v262
    %v320 = vpack.c.b16 %v265, %v264
    %v321 = vpack.c.b16 %v267, %v266
    %v322 = vpack.c.b16 %v269, %v268
    %v323 = vpack.c.b16 %v271, %v270
    %v324 = vpack.c.b16 %v273, %v272
    %v325 = vpack.c.b16 %v275, %v274
    %v326 = vpack.c.b16 %v277, %v276
    %v327 = vpack.c.b16 %v279, %v278
    %v328 = vpack.c.b16 %v281, %v280
    %v329 = vpack.c.b16 %v283, %v282
    %v330 = vpack.c.b16 %v285, %v284
    %v331 = vpack.c.b16 %v287, %v286
    %v332 = vpack.c.b16 %v289, %v288
    %v333 = vpack.c.b16 %v291, %v290
    %v334 = vpack.c.b16 %v293, %v292
    %v335 = vpack.c.b16 %v295, %v294
    %v336 = vpack.c.b16 %v297, %v296
    %v337 = vpack.c.b16 %v299, %v298
    %v338 = vpack.c.b16 %v301, %v300
    %v339 = vpack.c.b16 %v303, %v302
    %v340 = vpack.c.b16 %v305, %v304
    %v341 = vpack.c.b16 %v307, %v306
    %v342 = vpack.c.b16 %v309, %v308
    %v343 = vpack.c.b16 %v311, %v310
    %376 = vmatprep.subr.bf16.mxu0 0
    %377 = vmatpush1.bf16.msra.mxu0 %v319
    %378 = vmatprep.subr.bf16.mxu0 0
    %379 = vmatpush1.bf16.msra.mxu0 %v318
    %380 = vmatprep.subr.bf16.mxu0 0
    %381 = vmatpush1.bf16.msra.mxu0 %v317
    %382 = vmatprep.subr.bf16.mxu0 0
    %383 = vmatpush1.bf16.msra.mxu0 %v316
    %384 = vmatprep.subr.bf16.mxu0 0
    %385 = vmatpush1.bf16.msra.mxu0 %v315
    %386 = vmatprep.subr.bf16.mxu0 0
    %387 = vmatpush1.bf16.msra.mxu0 %v314
    %388 = vmatprep.subr.bf16.mxu0 0
    %389 = vmatpush1.bf16.msra.mxu0 %v313
    %390 = vmatprep.subr.bf16.mxu0 0
    %391 = vmatpush1.bf16.msra.mxu0 %v312
    %392 = vmatprep.subr.bf16.mxu0 0
    %393 = vmatpush2.bf16.msra.mxu0 %v327
    %394 = vmatprep.subr.bf16.mxu0 0
    %395 = vmatpush2.bf16.msra.mxu0 %v326
    %396 = vmatprep.subr.bf16.mxu0 0
    %397 = vmatpush2.bf16.msra.mxu0 %v325
    %398 = vmatprep.subr.bf16.mxu0 0
    %399 = vmatpush2.bf16.msra.mxu0 %v324
    %400 = vmatprep.subr.bf16.mxu0 0
    %401 = vmatpush2.bf16.msra.mxu0 %v323
    %402 = vmatprep.subr.bf16.mxu0 0
    %403 = vmatpush2.bf16.msra.mxu0 %v322
    %404 = vmatprep.subr.bf16.mxu0 0
    %405 = vmatpush2.bf16.msra.mxu0 %v321
    %406 = vmatprep.subr.bf16.mxu0 0
    %407 = vmatpush2.bf16.msra.mxu0 %v320
    %408 = vmatprep.mubr.bf16.mxu0 %v153
    %409 = vmatmul.mubr.bf16.gmra.mxu0 %v152
    %v410 = vpop.f32.mrf.mxu0
    %v411 = vadd.f32 0.0, %v410
    %v412 = vpop.f32.mrf.mxu0
    %v413 = vpop.f32.mrf.mxu0
    %v414 = vadd.f32 0.0, %v413
    %v415 = vpop.f32.mrf.mxu0
    %416 = vmatprep.mubr.bf16.mxu0 %v157
    %417 = vmatmul.mubr.bf16.gmra.mxu0 %v156
    %v418 = vpop.f32.mrf.mxu0
    %v419 = vadd.f32 0.0, %v418
    %v420 = vpop.f32.mrf.mxu0
    %v421 = vpop.f32.mrf.mxu0
    %v422 = vadd.f32 0.0, %v421
    %v423 = vpop.f32.mrf.mxu0
    %424 = vmatprep.mubr.bf16.mxu0 %v161
    %425 = vmatmul.mubr.bf16.gmra.mxu0 %v160
    %v426 = vpop.f32.mrf.mxu0
    %v427 = vadd.f32 0.0, %v426
    %v428 = vpop.f32.mrf.mxu0
    %v429 = vpop.f32.mrf.mxu0
    %v430 = vadd.f32 0.0, %v429
    %v431 = vpop.f32.mrf.mxu0
    %432 = vmatprep.mubr.bf16.mxu0 %v165
    %433 = vmatmul.mubr.bf16.gmra.mxu0 %v164
    %v434 = vpop.f32.mrf.mxu0
    %v435 = vadd.f32 0.0, %v434
    %v436 = vpop.f32.mrf.mxu0
    %v437 = vpop.f32.mrf.mxu0
    %v438 = vadd.f32 0.0, %v437
    %v439 = vpop.f32.mrf.mxu0
    %440 = vdwg.mxu0
    %441 = vmatprep.subr.bf16.mxu0 0
    %442 = vmatpush1.bf16.msra.mxu0 %v335
    %443 = vmatprep.subr.bf16.mxu0 0
    %444 = vmatpush1.bf16.msra.mxu0 %v334
    %445 = vmatprep.subr.bf16.mxu0 0
    %446 = vmatpush1.bf16.msra.mxu0 %v333
    %447 = vmatprep.subr.bf16.mxu0 0
    %448 = vmatpush1.bf16.msra.mxu0 %v332
    %449 = vmatprep.subr.bf16.mxu0 0
    %450 = vmatpush1.bf16.msra.mxu0 %v331
    %451 = vmatprep.subr.bf16.mxu0 0
    %452 = vmatpush1.bf16.msra.mxu0 %v330
    %453 = vmatprep.subr.bf16.mxu0 0
    %454 = vmatpush1.bf16.msra.mxu0 %v329
    %455 = vmatprep.subr.bf16.mxu0 0
    %456 = vmatpush1.bf16.msra.mxu0 %v328
    %457 = vmatprep.subr.bf16.mxu0 0
    %458 = vmatpush2.bf16.msra.mxu0 %v343
    %459 = vmatprep.subr.bf16.mxu0 0
    %460 = vmatpush2.bf16.msra.mxu0 %v342
    %461 = vmatprep.subr.bf16.mxu0 0
    %462 = vmatpush2.bf16.msra.mxu0 %v341
    %463 = vmatprep.subr.bf16.mxu0 0
    %464 = vmatpush2.bf16.msra.mxu0 %v340
    %465 = vmatprep.subr.bf16.mxu0 0
    %466 = vmatpush2.bf16.msra.mxu0 %v339
    %467 = vmatprep.subr.bf16.mxu0 0
    %468 = vmatpush2.bf16.msra.mxu0 %v338
    %469 = vmatprep.subr.bf16.mxu0 0
    %470 = vmatpush2.bf16.msra.mxu0 %v337
    %471 = vmatprep.subr.bf16.mxu0 0
    %472 = vmatpush2.bf16.msra.mxu0 %v336
    %473 = vmatprep.mubr.bf16.mxu0 %v155
    %474 = vmatmul.mubr.bf16.gmra.mxu0 %v154
    %v475 = vpop.f32.mrf.mxu0
    %v476 = vadd.f32 %v411, %v475
    %v477 = vpop.f32.mrf.mxu0
    %v478 = vpop.f32.mrf.mxu0
    %v479 = vadd.f32 %v414, %v478
    %v480 = vpop.f32.mrf.mxu0
    %481 = vmatprep.mubr.bf16.mxu0 %v159
    %482 = vmatmul.mubr.bf16.gmra.mxu0 %v158
    %v483 = vpop.f32.mrf.mxu0
    %v484 = vadd.f32 %v419, %v483
    %v485 = vpop.f32.mrf.mxu0
    %v486 = vpop.f32.mrf.mxu0
    %v487 = vadd.f32 %v422, %v486
    %v488 = vpop.f32.mrf.mxu0
    %489 = vmatprep.mubr.bf16.mxu0 %v163
    %490 = vmatmul.mubr.bf16.gmra.mxu0 %v162
    %v491 = vpop.f32.mrf.mxu0
    %v492 = vadd.f32 %v427, %v491
    %v493 = vpop.f32.mrf.mxu0
    %v494 = vpop.f32.mrf.mxu0
    %v495 = vadd.f32 %v430, %v494
    %v496 = vpop.f32.mrf.mxu0
    %497 = vmatprep.mubr.bf16.mxu0 %v167
    %498 = vmatmul.mubr.bf16.gmra.mxu0 %v166
    %v499 = vpop.f32.mrf.mxu0
    %v500 = vadd.f32 %v435, %v499
    %v501 = vpop.f32.mrf.mxu0
    %v502 = vpop.f32.mrf.mxu0
    %v503 = vadd.f32 %v438, %v502
    %v504 = vpop.f32.mrf.mxu0
    %505 = vdwg.mxu0
    %vm506 = vcmask 261120
    %v507 = vsel %vm506, %v476, 0.0
    %508 = vadd.xlane.f32.xlu0 %v507
    %v509 = vpop.xlane.xlu0 %508
    %v510 = vsel %vm506, %v479, 0.0
    %511 = vadd.xlane.f32.xlu0 %v510
    %v512 = vpop.xlane.xlu0 %511
    %v513 = vsel %vm506, %v484, 0.0
    %514 = vadd.xlane.f32.xlu0 %v513
    %v515 = vpop.xlane.xlu0 %514
    %v516 = vsel %vm506, %v487, 0.0
    %517 = vadd.xlane.f32.xlu0 %v516
    %v518 = vpop.xlane.xlu0 %517
    %v519 = vsel %vm506, %v492, 0.0
    %520 = vadd.xlane.f32.xlu0 %v519
    %v521 = vpop.xlane.xlu0 %520
    %v522 = vsel %vm506, %v495, 0.0
    %523 = vadd.xlane.f32.xlu0 %v522
    %v524 = vpop.xlane.xlu0 %523
    %v525 = vsel %vm506, %v500, 0.0
    %526 = vadd.xlane.f32.xlu0 %v525
    %v527 = vpop.xlane.xlu0 %526
    %v528 = vsel %vm506, %v503, 0.0
    %529 = vadd.xlane.f32.xlu0 %v528
    %v530 = vpop.xlane.xlu0 %529
    %v531 = vmul.f32 %v509, 0.03125
    %v532 = vmul.f32 %v512, 0.03125
    %v533 = vmul.f32 %v515, 0.03125
    %v534 = vmul.f32 %v518, 0.03125
    %v535 = vmul.f32 %v521, 0.03125
    %v536 = vmul.f32 %v524, 0.03125
    %v537 = vmul.f32 %v527, 0.03125
    %v538 = vmul.f32 %v530, 0.03125
    %v539 = vmul.f32 %v476, %v476
    %v540 = vmul.f32 %v479, %v479
    %v541 = vmul.f32 %v484, %v484
    %v542 = vmul.f32 %v487, %v487
    %v543 = vmul.f32 %v492, %v492
    %v544 = vmul.f32 %v495, %v495
    %v545 = vmul.f32 %v500, %v500
    %v546 = vmul.f32 %v503, %v503
    %v547 = vsel %vm506, %v539, 0.0
    %548 = vadd.xlane.f32.xlu0 %v547
    %v549 = vpop.xlane.xlu0 %548
    %v550 = vsel %vm506, %v540, 0.0
    %551 = vadd.xlane.f32.xlu0 %v550
    %v552 = vpop.xlane.xlu0 %551
    %v553 = vsel %vm506, %v541, 0.0
    %554 = vadd.xlane.f32.xlu0 %v553
    %v555 = vpop.xlane.xlu0 %554
    %v556 = vsel %vm506, %v542, 0.0
    %557 = vadd.xlane.f32.xlu0 %v556
    %v558 = vpop.xlane.xlu0 %557
    %v559 = vsel %vm506, %v543, 0.0
    %560 = vadd.xlane.f32.xlu0 %v559
    %v561 = vpop.xlane.xlu0 %560
    %v562 = vsel %vm506, %v544, 0.0
    %563 = vadd.xlane.f32.xlu0 %v562
    %v564 = vpop.xlane.xlu0 %563
    %v565 = vsel %vm506, %v545, 0.0
    %566 = vadd.xlane.f32.xlu0 %v565
    %v567 = vpop.xlane.xlu0 %566
    %v568 = vsel %vm506, %v546, 0.0
    %569 = vadd.xlane.f32.xlu0 %v568
    %v570 = vpop.xlane.xlu0 %569
    %v571 = vmul.f32 %v549, 0.03125
    %v572 = vmul.f32 %v552, 0.03125
    %v573 = vmul.f32 %v555, 0.03125
    %v574 = vmul.f32 %v558, 0.03125
    %v575 = vmul.f32 %v561, 0.03125
    %v576 = vmul.f32 %v564, 0.03125
    %v577 = vmul.f32 %v567, 0.03125
    %v578 = vmul.f32 %v570, 0.03125
    %v579 = vmul.f32 %v531, %v531
    %v580 = vmul.f32 %v532, %v532
    %v581 = vmul.f32 %v533, %v533
    %v582 = vmul.f32 %v534, %v534
    %v583 = vmul.f32 %v535, %v535
    %v584 = vmul.f32 %v536, %v536
    %v585 = vmul.f32 %v537, %v537
    %v586 = vmul.f32 %v538, %v538
    %v587 = vsub.f32 %v571, %v579
    %v588 = vsub.f32 %v572, %v580
    %v589 = vsub.f32 %v573, %v581
    %v590 = vsub.f32 %v574, %v582
    %v591 = vsub.f32 %v575, %v583
    %v592 = vsub.f32 %v576, %v584
    %v593 = vsub.f32 %v577, %v585
    %v594 = vsub.f32 %v578, %v586
    %v595 = vmax.f32 %v587, 0.0
    %v596 = vmax.f32 %v588, 0.0
    %v597 = vmax.f32 %v589, 0.0
    %v598 = vmax.f32 %v590, 0.0
    %v599 = vmax.f32 %v591, 0.0
    %v600 = vmax.f32 %v592, 0.0
    %v601 = vmax.f32 %v593, 0.0
    %v602 = vmax.f32 %v594, 0.0
    %v603 = vld [vmem:[%s2] sm:$0xff]
    %v604 = vld [vmem:[%s2 + $0x8] sm:$0xff]
    %v605 = vld [vmem:[%s2 + $0x10] sm:$0xff]
    %v606 = vld [vmem:[%s2 + $0x18] sm:$0xff]
    %v607 = vld [vmem:[%s2 + $0x20] sm:$0xff]
    %v608 = vld [vmem:[%s2 + $0x28] sm:$0xff]
    %v609 = vld [vmem:[%s2 + $0x30] sm:$0xff]
    %v610 = vld [vmem:[%s2 + $0x38] sm:$0xff]
    %v611 = vadd.f32 %v595, 1e-05
    %v612 = vadd.f32 %v596, 1e-05
    %v613 = vadd.f32 %v597, 1e-05
    %v614 = vadd.f32 %v598, 1e-05
    %v615 = vadd.f32 %v599, 1e-05
    %v616 = vadd.f32 %v600, 1e-05
    %v617 = vadd.f32 %v601, 1e-05
    %v618 = vadd.f32 %v602, 1e-05
    %v619 = vrsqrt.pop %v611
    %v620 = vrsqrt.pop %v612
    %v621 = vrsqrt.pop %v613
    %v622 = vrsqrt.pop %v614
    %v623 = vrsqrt.pop %v615
    %v624 = vrsqrt.pop %v616
    %v625 = vrsqrt.pop %v617
    %v626 = vrsqrt.pop %v618
    %v627 = vmul.f32 %v603, %v619
    %v628 = vmul.f32 %v604, %v620
    %v629 = vmul.f32 %v605, %v621
    %v630 = vmul.f32 %v606, %v622
    %v631 = vmul.f32 %v607, %v623
    %v632 = vmul.f32 %v608, %v624
    %v633 = vmul.f32 %v609, %v625
    %v634 = vmul.f32 %v610, %v626
    %v635 = vmul.f32 %v531, %v627
    %v636 = vmul.f32 %v532, %v628
    %v637 = vmul.f32 %v533, %v629
    %v638 = vmul.f32 %v534, %v630
    %v639 = vmul.f32 %v535, %v631
    %v640 = vmul.f32 %v536, %v632
    %v641 = vmul.f32 %v537, %v633
    %v642 = vmul.f32 %v538, %v634
    %651 = vrot.lane.b32.xlu0 %v635, 1
    %v652 = vpop.permute.xlu0 %651
    %653 = vrot.lane.b32.xlu0 %v636, 1
    %v654 = vpop.permute.xlu0 %653
    %655 = vrot.lane.b32.xlu0 %v637, 1
    %v656 = vpop.permute.xlu0 %655
    %657 = vrot.lane.b32.xlu0 %v638, 1
    %v658 = vpop.permute.xlu0 %657
    %659 = vrot.lane.b32.xlu0 %v639, 1
    %v660 = vpop.permute.xlu0 %659
    %661 = vrot.lane.b32.xlu0 %v640, 1
    %v662 = vpop.permute.xlu0 %661
    %663 = vrot.lane.b32.xlu0 %v641, 1
    %v664 = vpop.permute.xlu0 %663
    %665 = vrot.lane.b32.xlu0 %v642, 1
    %v666 = vpop.permute.xlu0 %665
    %v675 = vsub.f32 %v603, %v652
    %v676 = vsub.f32 %v604, %v654
    %v677 = vsub.f32 %v605, %v656
    %v678 = vsub.f32 %v606, %v658
    %v679 = vsub.f32 %v607, %v660
    %v680 = vsub.f32 %v608, %v662
    %v681 = vsub.f32 %v609, %v664
    %v682 = vsub.f32 %v610, %v666
    %684 = vset.pattern.permute.xlu0 0
    %685 = vperm.xlu0 %684, %v627
    %v686 = vpop.permute.xlu0 %685
    %689 = vset.pattern.permute.xlu0 0
    %690 = vperm.xlu0 %689, %v628
    %v691 = vpop.permute.xlu0 %690
    %694 = vset.pattern.permute.xlu0 0
    %695 = vperm.xlu0 %694, %v629
    %v696 = vpop.permute.xlu0 %695
    %699 = vset.pattern.permute.xlu0 0
    %700 = vperm.xlu0 %699, %v630
    %v701 = vpop.permute.xlu0 %700
    %704 = vset.pattern.permute.xlu0 0
    %705 = vperm.xlu0 %704, %v631
    %v706 = vpop.permute.xlu0 %705
    %709 = vset.pattern.permute.xlu0 0
    %710 = vperm.xlu0 %709, %v632
    %v711 = vpop.permute.xlu0 %710
    %714 = vset.pattern.permute.xlu0 0
    %715 = vperm.xlu0 %714, %v633
    %v716 = vpop.permute.xlu0 %715
    %719 = vset.pattern.permute.xlu0 0
    %720 = vperm.xlu0 %719, %v634
    %v721 = vpop.permute.xlu0 %720
    %v723 = vmul.f32 %v476, %v686
    %v724 = vmul.f32 %v479, %v691
    %v725 = vmul.f32 %v484, %v696
    %v726 = vmul.f32 %v487, %v701
    %v727 = vmul.f32 %v492, %v706
    %v728 = vmul.f32 %v495, %v711
    %v729 = vmul.f32 %v500, %v716
    %v730 = vmul.f32 %v503, %v721
    %732 = vset.pattern.permute.xlu0 1
    %733 = vperm.xlu0 %732, %v675
    %v734 = vpop.permute.xlu0 %733
    %737 = vset.pattern.permute.xlu0 1
    %738 = vperm.xlu0 %737, %v676
    %v739 = vpop.permute.xlu0 %738
    %742 = vset.pattern.permute.xlu0 1
    %743 = vperm.xlu0 %742, %v677
    %v744 = vpop.permute.xlu0 %743
    %747 = vset.pattern.permute.xlu0 1
    %748 = vperm.xlu0 %747, %v678
    %v749 = vpop.permute.xlu0 %748
    %752 = vset.pattern.permute.xlu0 1
    %753 = vperm.xlu0 %752, %v679
    %v754 = vpop.permute.xlu0 %753
    %757 = vset.pattern.permute.xlu0 1
    %758 = vperm.xlu0 %757, %v680
    %v759 = vpop.permute.xlu0 %758
    %762 = vset.pattern.permute.xlu0 1
    %763 = vperm.xlu0 %762, %v681
    %v764 = vpop.permute.xlu0 %763
    %767 = vset.pattern.permute.xlu0 1
    %768 = vperm.xlu0 %767, %v682
    %v769 = vpop.permute.xlu0 %768
    %v771 = vadd.f32 %v723, %v734
    %v772 = vadd.f32 %v724, %v739
    %v773 = vadd.f32 %v725, %v744
    %v774 = vadd.f32 %v726, %v749
    %v775 = vadd.f32 %v727, %v754
    %v776 = vadd.f32 %v728, %v759
    %v777 = vadd.f32 %v729, %v764
    %v778 = vadd.f32 %v730, %v769
    %vm779 = vcmp.ge.f32.partialorder %v771, 0.0
    %vm780 = vcmp.ge.f32.partialorder %v772, 0.0
    %vm781 = vcmp.ge.f32.partialorder %v773, 0.0
    %vm782 = vcmp.ge.f32.partialorder %v774, 0.0
    %vm783 = vcmp.ge.f32.partialorder %v775, 0.0
    %vm784 = vcmp.ge.f32.partialorder %v776, 0.0
    %vm785 = vcmp.ge.f32.partialorder %v777, 0.0
    %vm786 = vcmp.ge.f32.partialorder %v778, 0.0
    %v787 = vmul.f32 %v771, 0.2
    %v788 = vmul.f32 %v772, 0.2
    %v789 = vmul.f32 %v773, 0.2
    %v790 = vmul.f32 %v774, 0.2
    %v791 = vmul.f32 %v775, 0.2
    %v792 = vmul.f32 %v776, 0.2
    %v793 = vmul.f32 %v777, 0.2
    %v794 = vmul.f32 %v778, 0.2
    %v795 = vsel %vm779, %v771, %v787
    %v796 = vsel %vm780, %v772, %v788
    %v797 = vsel %vm781, %v773, %v789
    %v798 = vsel %vm782, %v774, %v790
    %v799 = vsel %vm783, %v775, %v791
    %v800 = vsel %vm784, %v776, %v792
    %v801 = vsel %vm785, %v777, %v793
    %v802 = vsel %vm786, %v778, %v794
    %v803 = vld [vmem:[#allocation2] sm:$0x1]
    %805 = vset.pattern.permute.xlu0 0
    %806 = vperm.xlu0 %805, %v803
    %v807 = vpop.permute.xlu0 %806
    %v809 = vlaneseq
    %v810 = vshrl.u32 %v809, 7
    %v811 = vsub.s32 0, %v810
    %v812 = vrot.slane %v807, %v811
    %v813 = vadd.f32 %v812, 0.0
    %v814 = vld [vmem:[%s3] sm:$0xff]
    %v815 = vld [vmem:[%s3 + $0x8] sm:$0xff]
    %v816 = vld [vmem:[%s3 + $0x10] sm:$0xff]
    %v817 = vld [vmem:[%s3 + $0x18] sm:$0xff]
    %v818 = vld [vmem:[%s3 + $0x20] sm:$0xff]
    %v819 = vld [vmem:[%s3 + $0x28] sm:$0xff]
    %v820 = vld [vmem:[%s3 + $0x30] sm:$0xff]
    %v821 = vld [vmem:[%s3 + $0x38] sm:$0xff]
    %823 = vset.pattern.permute.xlu0 0
    %824 = vperm.xlu0 %823, %v814
    %v825 = vpop.permute.xlu0 %824
    %828 = vset.pattern.permute.xlu0 0
    %829 = vperm.xlu0 %828, %v815
    %v830 = vpop.permute.xlu0 %829
    %833 = vset.pattern.permute.xlu0 0
    %834 = vperm.xlu0 %833, %v816
    %v835 = vpop.permute.xlu0 %834
    %838 = vset.pattern.permute.xlu0 0
    %839 = vperm.xlu0 %838, %v817
    %v840 = vpop.permute.xlu0 %839
    %843 = vset.pattern.permute.xlu0 0
    %844 = vperm.xlu0 %843, %v818
    %v845 = vpop.permute.xlu0 %844
    %848 = vset.pattern.permute.xlu0 0
    %849 = vperm.xlu0 %848, %v819
    %v850 = vpop.permute.xlu0 %849
    %853 = vset.pattern.permute.xlu0 0
    %854 = vperm.xlu0 %853, %v820
    %v855 = vpop.permute.xlu0 %854
    %858 = vset.pattern.permute.xlu0 0
    %859 = vperm.xlu0 %858, %v821
    %v860 = vpop.permute.xlu0 %859
    %v862 = vmul.f32 %v795, %v825
    %v863 = vmul.f32 %v796, %v830
    %v864 = vmul.f32 %v797, %v835
    %v865 = vmul.f32 %v798, %v840
    %v866 = vmul.f32 %v799, %v845
    %v867 = vmul.f32 %v800, %v850
    %v868 = vmul.f32 %v801, %v855
    %v869 = vmul.f32 %v802, %v860
    %vm870 = vcmask 15360
    %v871 = vsel %vm870, %v862, 0.0
    %v872 = vsel %vm870, %v863, 0.0
    %v873 = vadd.f32 %v871, %v872
    %v874 = vsel %vm870, %v864, 0.0
    %v875 = vadd.f32 %v873, %v874
    %v876 = vsel %vm870, %v865, 0.0
    %v877 = vadd.f32 %v875, %v876
    %v878 = vsel %vm870, %v866, 0.0
    %v879 = vadd.f32 %v877, %v878
    %v880 = vsel %vm870, %v867, 0.0
    %v881 = vadd.f32 %v879, %v880
    %v882 = vsel %vm870, %v868, 0.0
    %v883 = vadd.f32 %v881, %v882
    %v884 = vsel %vm870, %v869, 0.0
    %v885 = vadd.f32 %v883, %v884
    %v886 = vrot.slane %v885, 4
    %v887 = vadd.f32 %v885, %v886
    %v888 = vrot.slane %v887, 2
    %v889 = vadd.f32 %v887, %v888
    %v890 = vrot.slane %v889, 1
    %v891 = vadd.f32 %v889, %v890
    %v892 = vadd.f32 %v813, %v891
    %893 = vset.pattern.permute.xlu0 1
    %894 = vperm.xlu0 %893, %v814
    %v895 = vpop.permute.xlu0 %894
    %897 = vset.pattern.permute.xlu0 1
    %898 = vperm.xlu0 %897, %v815
    %v899 = vpop.permute.xlu0 %898
    %901 = vset.pattern.permute.xlu0 1
    %902 = vperm.xlu0 %901, %v816
    %v903 = vpop.permute.xlu0 %902
    %905 = vset.pattern.permute.xlu0 1
    %906 = vperm.xlu0 %905, %v817
    %v907 = vpop.permute.xlu0 %906
    %909 = vset.pattern.permute.xlu0 1
    %910 = vperm.xlu0 %909, %v818
    %v911 = vpop.permute.xlu0 %910
    %913 = vset.pattern.permute.xlu0 1
    %914 = vperm.xlu0 %913, %v819
    %v915 = vpop.permute.xlu0 %914
    %917 = vset.pattern.permute.xlu0 1
    %918 = vperm.xlu0 %917, %v820
    %v919 = vpop.permute.xlu0 %918
    %921 = vset.pattern.permute.xlu0 1
    %922 = vperm.xlu0 %921, %v821
    %v923 = vpop.permute.xlu0 %922
    %v925 = vmul.f32 %v795, %v895
    %v926 = vmul.f32 %v796, %v899
    %v927 = vmul.f32 %v797, %v903
    %v928 = vmul.f32 %v798, %v907
    %v929 = vmul.f32 %v799, %v911
    %v930 = vmul.f32 %v800, %v915
    %v931 = vmul.f32 %v801, %v919
    %v932 = vmul.f32 %v802, %v923
    %vm933 = vcmask 31760
    %v934 = vsel %vm933, %v925, 0.0
    %v935 = vsel %vm933, %v926, 0.0
    %v936 = vadd.f32 %v934, %v935
    %v937 = vsel %vm933, %v927, 0.0
    %v938 = vadd.f32 %v936, %v937
    %v939 = vsel %vm933, %v928, 0.0
    %v940 = vadd.f32 %v938, %v939
    %v941 = vsel %vm933, %v929, 0.0
    %v942 = vadd.f32 %v940, %v941
    %v943 = vsel %vm933, %v930, 0.0
    %v944 = vadd.f32 %v942, %v943
    %v945 = vsel %vm933, %v931, 0.0
    %v946 = vadd.f32 %v944, %v945
    %v947 = vsel %vm933, %v932, 0.0
    %v948 = vadd.f32 %v946, %v947
    %v949 = vrot.slane %v948, 4
    %v950 = vadd.f32 %v948, %v949
    %v951 = vrot.slane %v950, 2
    %v952 = vadd.f32 %v950, %v951
    %v953 = vrot.slane %v952, 1
    %v954 = vadd.f32 %v952, %v953
    %956 = vrot.lane.b32.xlu0 %v954, 126
    %v957 = vpop.permute.xlu0 %956
    %v959 = vadd.f32 %v892, %v957
    %960 = vset.pattern.permute.xlu0 2
    %961 = vperm.xlu0 %960, %v814
    %v962 = vpop.permute.xlu0 %961
    %964 = vset.pattern.permute.xlu0 2
    %965 = vperm.xlu0 %964, %v815
    %v966 = vpop.permute.xlu0 %965
    %968 = vset.pattern.permute.xlu0 2
    %969 = vperm.xlu0 %968, %v816
    %v970 = vpop.permute.xlu0 %969
    %972 = vset.pattern.permute.xlu0 2
    %973 = vperm.xlu0 %972, %v817
    %v974 = vpop.permute.xlu0 %973
    %976 = vset.pattern.permute.xlu0 2
    %977 = vperm.xlu0 %976, %v818
    %v978 = vpop.permute.xlu0 %977
    %980 = vset.pattern.permute.xlu0 2
    %981 = vperm.xlu0 %980, %v819
    %v982 = vpop.permute.xlu0 %981
    %984 = vset.pattern.permute.xlu0 2
    %985 = vperm.xlu0 %984, %v820
    %v986 = vpop.permute.xlu0 %985
    %988 = vset.pattern.permute.xlu0 2
    %989 = vperm.xlu0 %988, %v821
    %v990 = vpop.permute.xlu0 %989
    %v992 = vmul.f32 %v795, %v962
    %v993 = vmul.f32 %v796, %v966
    %v994 = vmul.f32 %v797, %v970
    %v995 = vmul.f32 %v798, %v974
    %v996 = vmul.f32 %v799, %v978
    %v997 = vmul.f32 %v800, %v982
    %v998 = vmul.f32 %v801, %v986
    %v999 = vmul.f32 %v802, %v990
    %vm1000 = vcmask 48160
    %v1001 = vsel %vm1000, %v992, 0.0
    %v1002 = vsel %vm1000, %v993, 0.0
    %v1003 = vadd.f32 %v1001, %v1002
    %v1004 = vsel %vm1000, %v994, 0.0
    %v1005 = vadd.f32 %v1003, %v1004
    %v1006 = vsel %vm1000, %v995, 0.0
    %v1007 = vadd.f32 %v1005, %v1006
    %v1008 = vsel %vm1000, %v996, 0.0
    %v1009 = vadd.f32 %v1007, %v1008
    %v1010 = vsel %vm1000, %v997, 0.0
    %v1011 = vadd.f32 %v1009, %v1010
    %v1012 = vsel %vm1000, %v998, 0.0
    %v1013 = vadd.f32 %v1011, %v1012
    %v1014 = vsel %vm1000, %v999, 0.0
    %v1015 = vadd.f32 %v1013, %v1014
    %v1016 = vrot.slane %v1015, 4
    %v1017 = vadd.f32 %v1015, %v1016
    %v1018 = vrot.slane %v1017, 2
    %v1019 = vadd.f32 %v1017, %v1018
    %v1020 = vrot.slane %v1019, 1
    %v1021 = vadd.f32 %v1019, %v1020
    %1023 = vrot.lane.b32.xlu0 %v1021, 124
    %v1024 = vpop.permute.xlu0 %1023
    %v1026 = vadd.f32 %v959, %v1024
    %1027 = vset.pattern.permute.xlu0 3
    %1028 = vperm.xlu0 %1027, %v814
    %v1029 = vpop.permute.xlu0 %1028
    %1031 = vset.pattern.permute.xlu0 3
    %1032 = vperm.xlu0 %1031, %v815
    %v1033 = vpop.permute.xlu0 %1032
    %1035 = vset.pattern.permute.xlu0 3
    %1036 = vperm.xlu0 %1035, %v816
    %v1037 = vpop.permute.xlu0 %1036
    %1039 = vset.pattern.permute.xlu0 3
    %1040 = vperm.xlu0 %1039, %v817
    %v1041 = vpop.permute.xlu0 %1040
    %1043 = vset.pattern.permute.xlu0 3
    %1044 = vperm.xlu0 %1043, %v818
    %v1045 = vpop.permute.xlu0 %1044
    %1047 = vset.pattern.permute.xlu0 3
    %1048 = vperm.xlu0 %1047, %v819
    %v1049 = vpop.permute.xlu0 %1048
    %1051 = vset.pattern.permute.xlu0 3
    %1052 = vperm.xlu0 %1051, %v820
    %v1053 = vpop.permute.xlu0 %1052
    %1055 = vset.pattern.permute.xlu0 3
    %1056 = vperm.xlu0 %1055, %v821
    %v1057 = vpop.permute.xlu0 %1056
    %v1059 = vmul.f32 %v795, %v1029
    %v1060 = vmul.f32 %v796, %v1033
    %v1061 = vmul.f32 %v797, %v1037
    %v1062 = vmul.f32 %v798, %v1041
    %v1063 = vmul.f32 %v799, %v1045
    %v1064 = vmul.f32 %v800, %v1049
    %v1065 = vmul.f32 %v801, %v1053
    %v1066 = vmul.f32 %v802, %v1057
    %vm1067 = vcmask 64560
    %v1068 = vsel %vm1067, %v1059, 0.0
    %v1069 = vsel %vm1067, %v1060, 0.0
    %v1070 = vadd.f32 %v1068, %v1069
    %v1071 = vsel %vm1067, %v1061, 0.0
    %v1072 = vadd.f32 %v1070, %v1071
    %v1073 = vsel %vm1067, %v1062, 0.0
    %v1074 = vadd.f32 %v1072, %v1073
    %v1075 = vsel %vm1067, %v1063, 0.0
    %v1076 = vadd.f32 %v1074, %v1075
    %v1077 = vsel %vm1067, %v1064, 0.0
    %v1078 = vadd.f32 %v1076, %v1077
    %v1079 = vsel %vm1067, %v1065, 0.0
    %v1080 = vadd.f32 %v1078, %v1079
    %v1081 = vsel %vm1067, %v1066, 0.0
    %v1082 = vadd.f32 %v1080, %v1081
    %v1083 = vrot.slane %v1082, 4
    %v1084 = vadd.f32 %v1082, %v1083
    %v1085 = vrot.slane %v1084, 2
    %v1086 = vadd.f32 %v1084, %v1085
    %v1087 = vrot.slane %v1086, 1
    %v1088 = vadd.f32 %v1086, %v1087
    %1090 = vrot.lane.b32.xlu0 %v1088, 122
    %v1091 = vpop.permute.xlu0 %1090
    %v1093 = vadd.f32 %v1026, %v1091
    %1094 = vset.pattern.permute.xlu0 4
    %1095 = vperm.xlu0 %1094, %v814
    %v1096 = vpop.permute.xlu0 %1095
    %1098 = vset.pattern.permute.xlu0 4
    %1099 = vperm.xlu0 %1098, %v815
    %v1100 = vpop.permute.xlu0 %1099
    %1102 = vset.pattern.permute.xlu0 4
    %1103 = vperm.xlu0 %1102, %v816
    %v1104 = vpop.permute.xlu0 %1103
    %1106 = vset.pattern.permute.xlu0 4
    %1107 = vperm.xlu0 %1106, %v817
    %v1108 = vpop.permute.xlu0 %1107
    %1110 = vset.pattern.permute.xlu0 4
    %1111 = vperm.xlu0 %1110, %v818
    %v1112 = vpop.permute.xlu0 %1111
    %1114 = vset.pattern.permute.xlu0 4
    %1115 = vperm.xlu0 %1114, %v819
    %v1116 = vpop.permute.xlu0 %1115
    %1118 = vset.pattern.permute.xlu0 4
    %1119 = vperm.xlu0 %1118, %v820
    %v1120 = vpop.permute.xlu0 %1119
    %1122 = vset.pattern.permute.xlu0 4
    %1123 = vperm.xlu0 %1122, %v821
    %v1124 = vpop.permute.xlu0 %1123
    %v1126 = vmul.f32 %v795, %v1096
    %v1127 = vmul.f32 %v796, %v1100
    %v1128 = vmul.f32 %v797, %v1104
    %v1129 = vmul.f32 %v798, %v1108
    %v1130 = vmul.f32 %v799, %v1112
    %v1131 = vmul.f32 %v800, %v1116
    %v1132 = vmul.f32 %v801, %v1120
    %v1133 = vmul.f32 %v802, %v1124
    %vm1134 = vcmask 80960
    %v1135 = vsel %vm1134, %v1126, 0.0
    %v1136 = vsel %vm1134, %v1127, 0.0
    %v1137 = vadd.f32 %v1135, %v1136
    %v1138 = vsel %vm1134, %v1128, 0.0
    %v1139 = vadd.f32 %v1137, %v1138
    %v1140 = vsel %vm1134, %v1129, 0.0
    %v1141 = vadd.f32 %v1139, %v1140
    %v1142 = vsel %vm1134, %v1130, 0.0
    %v1143 = vadd.f32 %v1141, %v1142
    %v1144 = vsel %vm1134, %v1131, 0.0
    %v1145 = vadd.f32 %v1143, %v1144
    %v1146 = vsel %vm1134, %v1132, 0.0
    %v1147 = vadd.f32 %v1145, %v1146
    %v1148 = vsel %vm1134, %v1133, 0.0
    %v1149 = vadd.f32 %v1147, %v1148
    %v1150 = vrot.slane %v1149, 4
    %v1151 = vadd.f32 %v1149, %v1150
    %v1152 = vrot.slane %v1151, 2
    %v1153 = vadd.f32 %v1151, %v1152
    %v1154 = vrot.slane %v1153, 1
    %v1155 = vadd.f32 %v1153, %v1154
    %1157 = vrot.lane.b32.xlu0 %v1155, 120
    %v1158 = vpop.permute.xlu0 %1157
    %v1160 = vadd.f32 %v1093, %v1158
    %1161 = vset.pattern.permute.xlu0 5
    %1162 = vperm.xlu0 %1161, %v814
    %v1163 = vpop.permute.xlu0 %1162
    %1165 = vset.pattern.permute.xlu0 5
    %1166 = vperm.xlu0 %1165, %v815
    %v1167 = vpop.permute.xlu0 %1166
    %1169 = vset.pattern.permute.xlu0 5
    %1170 = vperm.xlu0 %1169, %v816
    %v1171 = vpop.permute.xlu0 %1170
    %1173 = vset.pattern.permute.xlu0 5
    %1174 = vperm.xlu0 %1173, %v817
    %v1175 = vpop.permute.xlu0 %1174
    %1177 = vset.pattern.permute.xlu0 5
    %1178 = vperm.xlu0 %1177, %v818
    %v1179 = vpop.permute.xlu0 %1178
    %1181 = vset.pattern.permute.xlu0 5
    %1182 = vperm.xlu0 %1181, %v819
    %v1183 = vpop.permute.xlu0 %1182
    %1185 = vset.pattern.permute.xlu0 5
    %1186 = vperm.xlu0 %1185, %v820
    %v1187 = vpop.permute.xlu0 %1186
    %1189 = vset.pattern.permute.xlu0 5
    %1190 = vperm.xlu0 %1189, %v821
    %v1191 = vpop.permute.xlu0 %1190
    %v1193 = vmul.f32 %v795, %v1163
    %v1194 = vmul.f32 %v796, %v1167
    %v1195 = vmul.f32 %v797, %v1171
    %v1196 = vmul.f32 %v798, %v1175
    %v1197 = vmul.f32 %v799, %v1179
    %v1198 = vmul.f32 %v800, %v1183
    %v1199 = vmul.f32 %v801, %v1187
    %v1200 = vmul.f32 %v802, %v1191
    %vm1201 = vcmask 97360
    %v1202 = vsel %vm1201, %v1193, 0.0
    %v1203 = vsel %vm1201, %v1194, 0.0
    %v1204 = vadd.f32 %v1202, %v1203
    %v1205 = vsel %vm1201, %v1195, 0.0
    %v1206 = vadd.f32 %v1204, %v1205
    %v1207 = vsel %vm1201, %v1196, 0.0
    %v1208 = vadd.f32 %v1206, %v1207
    %v1209 = vsel %vm1201, %v1197, 0.0
    %v1210 = vadd.f32 %v1208, %v1209
    %v1211 = vsel %vm1201, %v1198, 0.0
    %v1212 = vadd.f32 %v1210, %v1211
    %v1213 = vsel %vm1201, %v1199, 0.0
    %v1214 = vadd.f32 %v1212, %v1213
    %v1215 = vsel %vm1201, %v1200, 0.0
    %v1216 = vadd.f32 %v1214, %v1215
    %v1217 = vrot.slane %v1216, 4
    %v1218 = vadd.f32 %v1216, %v1217
    %v1219 = vrot.slane %v1218, 2
    %v1220 = vadd.f32 %v1218, %v1219
    %v1221 = vrot.slane %v1220, 1
    %v1222 = vadd.f32 %v1220, %v1221
    %1224 = vrot.lane.b32.xlu0 %v1222, 118
    %v1225 = vpop.permute.xlu0 %1224
    %v1227 = vadd.f32 %v1160, %v1225
    %1228 = vset.pattern.permute.xlu0 6
    %1229 = vperm.xlu0 %1228, %v814
    %v1230 = vpop.permute.xlu0 %1229
    %1232 = vset.pattern.permute.xlu0 6
    %1233 = vperm.xlu0 %1232, %v815
    %v1234 = vpop.permute.xlu0 %1233
    %1236 = vset.pattern.permute.xlu0 6
    %1237 = vperm.xlu0 %1236, %v816
    %v1238 = vpop.permute.xlu0 %1237
    %1240 = vset.pattern.permute.xlu0 6
    %1241 = vperm.xlu0 %1240, %v817
    %v1242 = vpop.permute.xlu0 %1241
    %1244 = vset.pattern.permute.xlu0 6
    %1245 = vperm.xlu0 %1244, %v818
    %v1246 = vpop.permute.xlu0 %1245
    %1248 = vset.pattern.permute.xlu0 6
    %1249 = vperm.xlu0 %1248, %v819
    %v1250 = vpop.permute.xlu0 %1249
    %1252 = vset.pattern.permute.xlu0 6
    %1253 = vperm.xlu0 %1252, %v820
    %v1254 = vpop.permute.xlu0 %1253
    %1256 = vset.pattern.permute.xlu0 6
    %1257 = vperm.xlu0 %1256, %v821
    %v1258 = vpop.permute.xlu0 %1257
    %v1260 = vmul.f32 %v795, %v1230
    %v1261 = vmul.f32 %v796, %v1234
    %v1262 = vmul.f32 %v797, %v1238
    %v1263 = vmul.f32 %v798, %v1242
    %v1264 = vmul.f32 %v799, %v1246
    %v1265 = vmul.f32 %v800, %v1250
    %v1266 = vmul.f32 %v801, %v1254
    %v1267 = vmul.f32 %v802, %v1258
    %vm1268 = vcmask 113760
    %v1269 = vsel %vm1268, %v1260, 0.0
    %v1270 = vsel %vm1268, %v1261, 0.0
    %v1271 = vadd.f32 %v1269, %v1270
    %v1272 = vsel %vm1268, %v1262, 0.0
    %v1273 = vadd.f32 %v1271, %v1272
    %v1274 = vsel %vm1268, %v1263, 0.0
    %v1275 = vadd.f32 %v1273, %v1274
    %v1276 = vsel %vm1268, %v1264, 0.0
    %v1277 = vadd.f32 %v1275, %v1276
    %v1278 = vsel %vm1268, %v1265, 0.0
    %v1279 = vadd.f32 %v1277, %v1278
    %v1280 = vsel %vm1268, %v1266, 0.0
    %v1281 = vadd.f32 %v1279, %v1280
    %v1282 = vsel %vm1268, %v1267, 0.0
    %v1283 = vadd.f32 %v1281, %v1282
    %v1284 = vrot.slane %v1283, 4
    %v1285 = vadd.f32 %v1283, %v1284
    %v1286 = vrot.slane %v1285, 2
    %v1287 = vadd.f32 %v1285, %v1286
    %v1288 = vrot.slane %v1287, 1
    %v1289 = vadd.f32 %v1287, %v1288
    %1291 = vrot.lane.b32.xlu0 %v1289, 116
    %v1292 = vpop.permute.xlu0 %1291
    %v1294 = vadd.f32 %v1227, %v1292
    %1295 = vset.pattern.permute.xlu0 7
    %1296 = vperm.xlu0 %1295, %v814
    %v1297 = vpop.permute.xlu0 %1296
    %1299 = vset.pattern.permute.xlu0 7
    %1300 = vperm.xlu0 %1299, %v815
    %v1301 = vpop.permute.xlu0 %1300
    %1303 = vset.pattern.permute.xlu0 7
    %1304 = vperm.xlu0 %1303, %v816
    %v1305 = vpop.permute.xlu0 %1304
    %1307 = vset.pattern.permute.xlu0 7
    %1308 = vperm.xlu0 %1307, %v817
    %v1309 = vpop.permute.xlu0 %1308
    %1311 = vset.pattern.permute.xlu0 7
    %1312 = vperm.xlu0 %1311, %v818
    %v1313 = vpop.permute.xlu0 %1312
    %1315 = vset.pattern.permute.xlu0 7
    %1316 = vperm.xlu0 %1315, %v819
    %v1317 = vpop.permute.xlu0 %1316
    %1319 = vset.pattern.permute.xlu0 7
    %1320 = vperm.xlu0 %1319, %v820
    %v1321 = vpop.permute.xlu0 %1320
    %1323 = vset.pattern.permute.xlu0 7
    %1324 = vperm.xlu0 %1323, %v821
    %v1325 = vpop.permute.xlu0 %1324
    %v1327 = vmul.f32 %v795, %v1297
    %v1328 = vmul.f32 %v796, %v1301
    %v1329 = vmul.f32 %v797, %v1305
    %v1330 = vmul.f32 %v798, %v1309
    %v1331 = vmul.f32 %v799, %v1313
    %v1332 = vmul.f32 %v800, %v1317
    %v1333 = vmul.f32 %v801, %v1321
    %v1334 = vmul.f32 %v802, %v1325
    %vm1335 = vcmask 130160
    %v1336 = vsel %vm1335, %v1327, 0.0
    %v1337 = vsel %vm1335, %v1328, 0.0
    %v1338 = vadd.f32 %v1336, %v1337
    %v1339 = vsel %vm1335, %v1329, 0.0
    %v1340 = vadd.f32 %v1338, %v1339
    %v1341 = vsel %vm1335, %v1330, 0.0
    %v1342 = vadd.f32 %v1340, %v1341
    %v1343 = vsel %vm1335, %v1331, 0.0
    %v1344 = vadd.f32 %v1342, %v1343
    %v1345 = vsel %vm1335, %v1332, 0.0
    %v1346 = vadd.f32 %v1344, %v1345
    %v1347 = vsel %vm1335, %v1333, 0.0
    %v1348 = vadd.f32 %v1346, %v1347
    %v1349 = vsel %vm1335, %v1334, 0.0
    %v1350 = vadd.f32 %v1348, %v1349
    %v1351 = vrot.slane %v1350, 4
    %v1352 = vadd.f32 %v1350, %v1351
    %v1353 = vrot.slane %v1352, 2
    %v1354 = vadd.f32 %v1352, %v1353
    %v1355 = vrot.slane %v1354, 1
    %v1356 = vadd.f32 %v1354, %v1355
    %1358 = vrot.lane.b32.xlu0 %v1356, 114
    %v1359 = vpop.permute.xlu0 %1358
    %v1361 = vadd.f32 %v1294, %v1359
    %1362 = vset.pattern.permute.xlu0 8
    %1363 = vperm.xlu0 %1362, %v814
    %v1364 = vpop.permute.xlu0 %1363
    %1366 = vset.pattern.permute.xlu0 8
    %1367 = vperm.xlu0 %1366, %v815
    %v1368 = vpop.permute.xlu0 %1367
    %1370 = vset.pattern.permute.xlu0 8
    %1371 = vperm.xlu0 %1370, %v816
    %v1372 = vpop.permute.xlu0 %1371
    %1374 = vset.pattern.permute.xlu0 8
    %1375 = vperm.xlu0 %1374, %v817
    %v1376 = vpop.permute.xlu0 %1375
    %1378 = vset.pattern.permute.xlu0 8
    %1379 = vperm.xlu0 %1378, %v818
    %v1380 = vpop.permute.xlu0 %1379
    %1382 = vset.pattern.permute.xlu0 8
    %1383 = vperm.xlu0 %1382, %v819
    %v1384 = vpop.permute.xlu0 %1383
    %1386 = vset.pattern.permute.xlu0 8
    %1387 = vperm.xlu0 %1386, %v820
    %v1388 = vpop.permute.xlu0 %1387
    %1390 = vset.pattern.permute.xlu0 8
    %1391 = vperm.xlu0 %1390, %v821
    %v1392 = vpop.permute.xlu0 %1391
    %v1394 = vmul.f32 %v795, %v1364
    %v1395 = vmul.f32 %v796, %v1368
    %v1396 = vmul.f32 %v797, %v1372
    %v1397 = vmul.f32 %v798, %v1376
    %v1398 = vmul.f32 %v799, %v1380
    %v1399 = vmul.f32 %v800, %v1384
    %v1400 = vmul.f32 %v801, %v1388
    %v1401 = vmul.f32 %v802, %v1392
    %vm1402 = vcmask 146560
    %v1403 = vsel %vm1402, %v1394, 0.0
    %v1404 = vsel %vm1402, %v1395, 0.0
    %v1405 = vadd.f32 %v1403, %v1404
    %v1406 = vsel %vm1402, %v1396, 0.0
    %v1407 = vadd.f32 %v1405, %v1406
    %v1408 = vsel %vm1402, %v1397, 0.0
    %v1409 = vadd.f32 %v1407, %v1408
    %v1410 = vsel %vm1402, %v1398, 0.0
    %v1411 = vadd.f32 %v1409, %v1410
    %v1412 = vsel %vm1402, %v1399, 0.0
    %v1413 = vadd.f32 %v1411, %v1412
    %v1414 = vsel %vm1402, %v1400, 0.0
    %v1415 = vadd.f32 %v1413, %v1414
    %v1416 = vsel %vm1402, %v1401, 0.0
    %v1417 = vadd.f32 %v1415, %v1416
    %v1418 = vrot.slane %v1417, 4
    %v1419 = vadd.f32 %v1417, %v1418
    %v1420 = vrot.slane %v1419, 2
    %v1421 = vadd.f32 %v1419, %v1420
    %v1422 = vrot.slane %v1421, 1
    %v1423 = vadd.f32 %v1421, %v1422
    %1425 = vrot.lane.b32.xlu0 %v1423, 112
    %v1426 = vpop.permute.xlu0 %1425
    %v1428 = vadd.f32 %v1361, %v1426
    %1429 = vset.pattern.permute.xlu0 9
    %1430 = vperm.xlu0 %1429, %v814
    %v1431 = vpop.permute.xlu0 %1430
    %1433 = vset.pattern.permute.xlu0 9
    %1434 = vperm.xlu0 %1433, %v815
    %v1435 = vpop.permute.xlu0 %1434
    %1437 = vset.pattern.permute.xlu0 9
    %1438 = vperm.xlu0 %1437, %v816
    %v1439 = vpop.permute.xlu0 %1438
    %1441 = vset.pattern.permute.xlu0 9
    %1442 = vperm.xlu0 %1441, %v817
    %v1443 = vpop.permute.xlu0 %1442
    %1445 = vset.pattern.permute.xlu0 9
    %1446 = vperm.xlu0 %1445, %v818
    %v1447 = vpop.permute.xlu0 %1446
    %1449 = vset.pattern.permute.xlu0 9
    %1450 = vperm.xlu0 %1449, %v819
    %v1451 = vpop.permute.xlu0 %1450
    %1453 = vset.pattern.permute.xlu0 9
    %1454 = vperm.xlu0 %1453, %v820
    %v1455 = vpop.permute.xlu0 %1454
    %1457 = vset.pattern.permute.xlu0 9
    %1458 = vperm.xlu0 %1457, %v821
    %v1459 = vpop.permute.xlu0 %1458
    %v1461 = vmul.f32 %v795, %v1431
    %v1462 = vmul.f32 %v796, %v1435
    %v1463 = vmul.f32 %v797, %v1439
    %v1464 = vmul.f32 %v798, %v1443
    %v1465 = vmul.f32 %v799, %v1447
    %v1466 = vmul.f32 %v800, %v1451
    %v1467 = vmul.f32 %v801, %v1455
    %v1468 = vmul.f32 %v802, %v1459
    %vm1469 = vcmask 162960
    %v1470 = vsel %vm1469, %v1461, 0.0
    %v1471 = vsel %vm1469, %v1462, 0.0
    %v1472 = vadd.f32 %v1470, %v1471
    %v1473 = vsel %vm1469, %v1463, 0.0
    %v1474 = vadd.f32 %v1472, %v1473
    %v1475 = vsel %vm1469, %v1464, 0.0
    %v1476 = vadd.f32 %v1474, %v1475
    %v1477 = vsel %vm1469, %v1465, 0.0
    %v1478 = vadd.f32 %v1476, %v1477
    %v1479 = vsel %vm1469, %v1466, 0.0
    %v1480 = vadd.f32 %v1478, %v1479
    %v1481 = vsel %vm1469, %v1467, 0.0
    %v1482 = vadd.f32 %v1480, %v1481
    %v1483 = vsel %vm1469, %v1468, 0.0
    %v1484 = vadd.f32 %v1482, %v1483
    %v1485 = vrot.slane %v1484, 4
    %v1486 = vadd.f32 %v1484, %v1485
    %v1487 = vrot.slane %v1486, 2
    %v1488 = vadd.f32 %v1486, %v1487
    %v1489 = vrot.slane %v1488, 1
    %v1490 = vadd.f32 %v1488, %v1489
    %1492 = vrot.lane.b32.xlu0 %v1490, 110
    %v1493 = vpop.permute.xlu0 %1492
    %v1495 = vadd.f32 %v1428, %v1493
    %1496 = vset.pattern.permute.xlu0 10
    %1497 = vperm.xlu0 %1496, %v814
    %v1498 = vpop.permute.xlu0 %1497
    %1500 = vset.pattern.permute.xlu0 10
    %1501 = vperm.xlu0 %1500, %v815
    %v1502 = vpop.permute.xlu0 %1501
    %1504 = vset.pattern.permute.xlu0 10
    %1505 = vperm.xlu0 %1504, %v816
    %v1506 = vpop.permute.xlu0 %1505
    %1508 = vset.pattern.permute.xlu0 10
    %1509 = vperm.xlu0 %1508, %v817
    %v1510 = vpop.permute.xlu0 %1509
    %1512 = vset.pattern.permute.xlu0 10
    %1513 = vperm.xlu0 %1512, %v818
    %v1514 = vpop.permute.xlu0 %1513
    %1516 = vset.pattern.permute.xlu0 10
    %1517 = vperm.xlu0 %1516, %v819
    %v1518 = vpop.permute.xlu0 %1517
    %1520 = vset.pattern.permute.xlu0 10
    %1521 = vperm.xlu0 %1520, %v820
    %v1522 = vpop.permute.xlu0 %1521
    %1524 = vset.pattern.permute.xlu0 10
    %1525 = vperm.xlu0 %1524, %v821
    %v1526 = vpop.permute.xlu0 %1525
    %v1528 = vmul.f32 %v795, %v1498
    %v1529 = vmul.f32 %v796, %v1502
    %v1530 = vmul.f32 %v797, %v1506
    %v1531 = vmul.f32 %v798, %v1510
    %v1532 = vmul.f32 %v799, %v1514
    %v1533 = vmul.f32 %v800, %v1518
    %v1534 = vmul.f32 %v801, %v1522
    %v1535 = vmul.f32 %v802, %v1526
    %vm1536 = vcmask 179360
    %v1537 = vsel %vm1536, %v1528, 0.0
    %v1538 = vsel %vm1536, %v1529, 0.0
    %v1539 = vadd.f32 %v1537, %v1538
    %v1540 = vsel %vm1536, %v1530, 0.0
    %v1541 = vadd.f32 %v1539, %v1540
    %v1542 = vsel %vm1536, %v1531, 0.0
    %v1543 = vadd.f32 %v1541, %v1542
    %v1544 = vsel %vm1536, %v1532, 0.0
    %v1545 = vadd.f32 %v1543, %v1544
    %v1546 = vsel %vm1536, %v1533, 0.0
    %v1547 = vadd.f32 %v1545, %v1546
    %v1548 = vsel %vm1536, %v1534, 0.0
    %v1549 = vadd.f32 %v1547, %v1548
    %v1550 = vsel %vm1536, %v1535, 0.0
    %v1551 = vadd.f32 %v1549, %v1550
    %v1552 = vrot.slane %v1551, 4
    %v1553 = vadd.f32 %v1551, %v1552
    %v1554 = vrot.slane %v1553, 2
    %v1555 = vadd.f32 %v1553, %v1554
    %v1556 = vrot.slane %v1555, 1
    %v1557 = vadd.f32 %v1555, %v1556
    %1559 = vrot.lane.b32.xlu0 %v1557, 108
    %v1560 = vpop.permute.xlu0 %1559
    %v1562 = vadd.f32 %v1495, %v1560
    %1563 = vset.pattern.permute.xlu0 11
    %1564 = vperm.xlu0 %1563, %v814
    %v1565 = vpop.permute.xlu0 %1564
    %1567 = vset.pattern.permute.xlu0 11
    %1568 = vperm.xlu0 %1567, %v815
    %v1569 = vpop.permute.xlu0 %1568
    %1571 = vset.pattern.permute.xlu0 11
    %1572 = vperm.xlu0 %1571, %v816
    %v1573 = vpop.permute.xlu0 %1572
    %1575 = vset.pattern.permute.xlu0 11
    %1576 = vperm.xlu0 %1575, %v817
    %v1577 = vpop.permute.xlu0 %1576
    %1579 = vset.pattern.permute.xlu0 11
    %1580 = vperm.xlu0 %1579, %v818
    %v1581 = vpop.permute.xlu0 %1580
    %1583 = vset.pattern.permute.xlu0 11
    %1584 = vperm.xlu0 %1583, %v819
    %v1585 = vpop.permute.xlu0 %1584
    %1587 = vset.pattern.permute.xlu0 11
    %1588 = vperm.xlu0 %1587, %v820
    %v1589 = vpop.permute.xlu0 %1588
    %1591 = vset.pattern.permute.xlu0 11
    %1592 = vperm.xlu0 %1591, %v821
    %v1593 = vpop.permute.xlu0 %1592
    %v1595 = vmul.f32 %v795, %v1565
    %v1596 = vmul.f32 %v796, %v1569
    %v1597 = vmul.f32 %v797, %v1573
    %v1598 = vmul.f32 %v798, %v1577
    %v1599 = vmul.f32 %v799, %v1581
    %v1600 = vmul.f32 %v800, %v1585
    %v1601 = vmul.f32 %v801, %v1589
    %v1602 = vmul.f32 %v802, %v1593
    %vm1603 = vcmask 195760
    %v1604 = vsel %vm1603, %v1595, 0.0
    %v1605 = vsel %vm1603, %v1596, 0.0
    %v1606 = vadd.f32 %v1604, %v1605
    %v1607 = vsel %vm1603, %v1597, 0.0
    %v1608 = vadd.f32 %v1606, %v1607
    %v1609 = vsel %vm1603, %v1598, 0.0
    %v1610 = vadd.f32 %v1608, %v1609
    %v1611 = vsel %vm1603, %v1599, 0.0
    %v1612 = vadd.f32 %v1610, %v1611
    %v1613 = vsel %vm1603, %v1600, 0.0
    %v1614 = vadd.f32 %v1612, %v1613
    %v1615 = vsel %vm1603, %v1601, 0.0
    %v1616 = vadd.f32 %v1614, %v1615
    %v1617 = vsel %vm1603, %v1602, 0.0
    %v1618 = vadd.f32 %v1616, %v1617
    %v1619 = vrot.slane %v1618, 4
    %v1620 = vadd.f32 %v1618, %v1619
    %v1621 = vrot.slane %v1620, 2
    %v1622 = vadd.f32 %v1620, %v1621
    %v1623 = vrot.slane %v1622, 1
    %v1624 = vadd.f32 %v1622, %v1623
    %1626 = vrot.lane.b32.xlu0 %v1624, 106
    %v1627 = vpop.permute.xlu0 %1626
    %v1629 = vadd.f32 %v1562, %v1627
    %1630 = vset.pattern.permute.xlu0 12
    %1631 = vperm.xlu0 %1630, %v814
    %v1632 = vpop.permute.xlu0 %1631
    %1634 = vset.pattern.permute.xlu0 12
    %1635 = vperm.xlu0 %1634, %v815
    %v1636 = vpop.permute.xlu0 %1635
    %1638 = vset.pattern.permute.xlu0 12
    %1639 = vperm.xlu0 %1638, %v816
    %v1640 = vpop.permute.xlu0 %1639
    %1642 = vset.pattern.permute.xlu0 12
    %1643 = vperm.xlu0 %1642, %v817
    %v1644 = vpop.permute.xlu0 %1643
    %1646 = vset.pattern.permute.xlu0 12
    %1647 = vperm.xlu0 %1646, %v818
    %v1648 = vpop.permute.xlu0 %1647
    %1650 = vset.pattern.permute.xlu0 12
    %1651 = vperm.xlu0 %1650, %v819
    %v1652 = vpop.permute.xlu0 %1651
    %1654 = vset.pattern.permute.xlu0 12
    %1655 = vperm.xlu0 %1654, %v820
    %v1656 = vpop.permute.xlu0 %1655
    %1658 = vset.pattern.permute.xlu0 12
    %1659 = vperm.xlu0 %1658, %v821
    %v1660 = vpop.permute.xlu0 %1659
    %v1662 = vmul.f32 %v795, %v1632
    %v1663 = vmul.f32 %v796, %v1636
    %v1664 = vmul.f32 %v797, %v1640
    %v1665 = vmul.f32 %v798, %v1644
    %v1666 = vmul.f32 %v799, %v1648
    %v1667 = vmul.f32 %v800, %v1652
    %v1668 = vmul.f32 %v801, %v1656
    %v1669 = vmul.f32 %v802, %v1660
    %vm1670 = vcmask 212160
    %v1671 = vsel %vm1670, %v1662, 0.0
    %v1672 = vsel %vm1670, %v1663, 0.0
    %v1673 = vadd.f32 %v1671, %v1672
    %v1674 = vsel %vm1670, %v1664, 0.0
    %v1675 = vadd.f32 %v1673, %v1674
    %v1676 = vsel %vm1670, %v1665, 0.0
    %v1677 = vadd.f32 %v1675, %v1676
    %v1678 = vsel %vm1670, %v1666, 0.0
    %v1679 = vadd.f32 %v1677, %v1678
    %v1680 = vsel %vm1670, %v1667, 0.0
    %v1681 = vadd.f32 %v1679, %v1680
    %v1682 = vsel %vm1670, %v1668, 0.0
    %v1683 = vadd.f32 %v1681, %v1682
    %v1684 = vsel %vm1670, %v1669, 0.0
    %v1685 = vadd.f32 %v1683, %v1684
    %v1686 = vrot.slane %v1685, 4
    %v1687 = vadd.f32 %v1685, %v1686
    %v1688 = vrot.slane %v1687, 2
    %v1689 = vadd.f32 %v1687, %v1688
    %v1690 = vrot.slane %v1689, 1
    %v1691 = vadd.f32 %v1689, %v1690
    %1693 = vrot.lane.b32.xlu0 %v1691, 104
    %v1694 = vpop.permute.xlu0 %1693
    %v1696 = vadd.f32 %v1629, %v1694
    %1697 = vset.pattern.permute.xlu0 13
    %1698 = vperm.xlu0 %1697, %v814
    %v1699 = vpop.permute.xlu0 %1698
    %1701 = vset.pattern.permute.xlu0 13
    %1702 = vperm.xlu0 %1701, %v815
    %v1703 = vpop.permute.xlu0 %1702
    %1705 = vset.pattern.permute.xlu0 13
    %1706 = vperm.xlu0 %1705, %v816
    %v1707 = vpop.permute.xlu0 %1706
    %1709 = vset.pattern.permute.xlu0 13
    %1710 = vperm.xlu0 %1709, %v817
    %v1711 = vpop.permute.xlu0 %1710
    %1713 = vset.pattern.permute.xlu0 13
    %1714 = vperm.xlu0 %1713, %v818
    %v1715 = vpop.permute.xlu0 %1714
    %1717 = vset.pattern.permute.xlu0 13
    %1718 = vperm.xlu0 %1717, %v819
    %v1719 = vpop.permute.xlu0 %1718
    %1721 = vset.pattern.permute.xlu0 13
    %1722 = vperm.xlu0 %1721, %v820
    %v1723 = vpop.permute.xlu0 %1722
    %1725 = vset.pattern.permute.xlu0 13
    %1726 = vperm.xlu0 %1725, %v821
    %v1727 = vpop.permute.xlu0 %1726
    %v1729 = vmul.f32 %v795, %v1699
    %v1730 = vmul.f32 %v796, %v1703
    %v1731 = vmul.f32 %v797, %v1707
    %v1732 = vmul.f32 %v798, %v1711
    %v1733 = vmul.f32 %v799, %v1715
    %v1734 = vmul.f32 %v800, %v1719
    %v1735 = vmul.f32 %v801, %v1723
    %v1736 = vmul.f32 %v802, %v1727
    %vm1737 = vcmask 228560
    %v1738 = vsel %vm1737, %v1729, 0.0
    %v1739 = vsel %vm1737, %v1730, 0.0
    %v1740 = vadd.f32 %v1738, %v1739
    %v1741 = vsel %vm1737, %v1731, 0.0
    %v1742 = vadd.f32 %v1740, %v1741
    %v1743 = vsel %vm1737, %v1732, 0.0
    %v1744 = vadd.f32 %v1742, %v1743
    %v1745 = vsel %vm1737, %v1733, 0.0
    %v1746 = vadd.f32 %v1744, %v1745
    %v1747 = vsel %vm1737, %v1734, 0.0
    %v1748 = vadd.f32 %v1746, %v1747
    %v1749 = vsel %vm1737, %v1735, 0.0
    %v1750 = vadd.f32 %v1748, %v1749
    %v1751 = vsel %vm1737, %v1736, 0.0
    %v1752 = vadd.f32 %v1750, %v1751
    %v1753 = vrot.slane %v1752, 4
    %v1754 = vadd.f32 %v1752, %v1753
    %v1755 = vrot.slane %v1754, 2
    %v1756 = vadd.f32 %v1754, %v1755
    %v1757 = vrot.slane %v1756, 1
    %v1758 = vadd.f32 %v1756, %v1757
    %1760 = vrot.lane.b32.xlu0 %v1758, 102
    %v1761 = vpop.permute.xlu0 %1760
    %v1763 = vadd.f32 %v1696, %v1761
    %1764 = vset.pattern.permute.xlu0 14
    %1765 = vperm.xlu0 %1764, %v814
    %v1766 = vpop.permute.xlu0 %1765
    %1768 = vset.pattern.permute.xlu0 14
    %1769 = vperm.xlu0 %1768, %v815
    %v1770 = vpop.permute.xlu0 %1769
    %1772 = vset.pattern.permute.xlu0 14
    %1773 = vperm.xlu0 %1772, %v816
    %v1774 = vpop.permute.xlu0 %1773
    %1776 = vset.pattern.permute.xlu0 14
    %1777 = vperm.xlu0 %1776, %v817
    %v1778 = vpop.permute.xlu0 %1777
    %1780 = vset.pattern.permute.xlu0 14
    %1781 = vperm.xlu0 %1780, %v818
    %v1782 = vpop.permute.xlu0 %1781
    %1784 = vset.pattern.permute.xlu0 14
    %1785 = vperm.xlu0 %1784, %v819
    %v1786 = vpop.permute.xlu0 %1785
    %1788 = vset.pattern.permute.xlu0 14
    %1789 = vperm.xlu0 %1788, %v820
    %v1790 = vpop.permute.xlu0 %1789
    %1792 = vset.pattern.permute.xlu0 14
    %1793 = vperm.xlu0 %1792, %v821
    %v1794 = vpop.permute.xlu0 %1793
    %v1796 = vmul.f32 %v795, %v1766
    %v1797 = vmul.f32 %v796, %v1770
    %v1798 = vmul.f32 %v797, %v1774
    %v1799 = vmul.f32 %v798, %v1778
    %v1800 = vmul.f32 %v799, %v1782
    %v1801 = vmul.f32 %v800, %v1786
    %v1802 = vmul.f32 %v801, %v1790
    %v1803 = vmul.f32 %v802, %v1794
    %vm1804 = vcmask 244960
    %v1805 = vsel %vm1804, %v1796, 0.0
    %v1806 = vsel %vm1804, %v1797, 0.0
    %v1807 = vadd.f32 %v1805, %v1806
    %v1808 = vsel %vm1804, %v1798, 0.0
    %v1809 = vadd.f32 %v1807, %v1808
    %v1810 = vsel %vm1804, %v1799, 0.0
    %v1811 = vadd.f32 %v1809, %v1810
    %v1812 = vsel %vm1804, %v1800, 0.0
    %v1813 = vadd.f32 %v1811, %v1812
    %v1814 = vsel %vm1804, %v1801, 0.0
    %v1815 = vadd.f32 %v1813, %v1814
    %v1816 = vsel %vm1804, %v1802, 0.0
    %v1817 = vadd.f32 %v1815, %v1816
    %v1818 = vsel %vm1804, %v1803, 0.0
    %v1819 = vadd.f32 %v1817, %v1818
    %v1820 = vrot.slane %v1819, 4
    %v1821 = vadd.f32 %v1819, %v1820
    %v1822 = vrot.slane %v1821, 2
    %v1823 = vadd.f32 %v1821, %v1822
    %v1824 = vrot.slane %v1823, 1
    %v1825 = vadd.f32 %v1823, %v1824
    %1827 = vrot.lane.b32.xlu0 %v1825, 100
    %v1828 = vpop.permute.xlu0 %1827
    %v1830 = vadd.f32 %v1763, %v1828
    %1831 = vset.pattern.permute.xlu0 15
    %1832 = vperm.xlu0 %1831, %v814
    %v1833 = vpop.permute.xlu0 %1832
    %1835 = vset.pattern.permute.xlu0 15
    %1836 = vperm.xlu0 %1835, %v815
    %v1837 = vpop.permute.xlu0 %1836
    %1839 = vset.pattern.permute.xlu0 15
    %1840 = vperm.xlu0 %1839, %v816
    %v1841 = vpop.permute.xlu0 %1840
    %1843 = vset.pattern.permute.xlu0 15
    %1844 = vperm.xlu0 %1843, %v817
    %v1845 = vpop.permute.xlu0 %1844
    %1847 = vset.pattern.permute.xlu0 15
    %1848 = vperm.xlu0 %1847, %v818
    %v1849 = vpop.permute.xlu0 %1848
    %1851 = vset.pattern.permute.xlu0 15
    %1852 = vperm.xlu0 %1851, %v819
    %v1853 = vpop.permute.xlu0 %1852
    %1855 = vset.pattern.permute.xlu0 15
    %1856 = vperm.xlu0 %1855, %v820
    %v1857 = vpop.permute.xlu0 %1856
    %1859 = vset.pattern.permute.xlu0 15
    %1860 = vperm.xlu0 %1859, %v821
    %v1861 = vpop.permute.xlu0 %1860
    %v1863 = vmul.f32 %v795, %v1833
    %v1864 = vmul.f32 %v796, %v1837
    %v1865 = vmul.f32 %v797, %v1841
    %v1866 = vmul.f32 %v798, %v1845
    %v1867 = vmul.f32 %v799, %v1849
    %v1868 = vmul.f32 %v800, %v1853
    %v1869 = vmul.f32 %v801, %v1857
    %v1870 = vmul.f32 %v802, %v1861
    %vm1871 = vcmask 261360
    %v1872 = vsel %vm1871, %v1863, 0.0
    %v1873 = vsel %vm1871, %v1864, 0.0
    %v1874 = vadd.f32 %v1872, %v1873
    %v1875 = vsel %vm1871, %v1865, 0.0
    %v1876 = vadd.f32 %v1874, %v1875
    %v1877 = vsel %vm1871, %v1866, 0.0
    %v1878 = vadd.f32 %v1876, %v1877
    %v1879 = vsel %vm1871, %v1867, 0.0
    %v1880 = vadd.f32 %v1878, %v1879
    %v1881 = vsel %vm1871, %v1868, 0.0
    %v1882 = vadd.f32 %v1880, %v1881
    %v1883 = vsel %vm1871, %v1869, 0.0
    %v1884 = vadd.f32 %v1882, %v1883
    %v1885 = vsel %vm1871, %v1870, 0.0
    %v1886 = vadd.f32 %v1884, %v1885
    %v1887 = vrot.slane %v1886, 4
    %v1888 = vadd.f32 %v1886, %v1887
    %v1889 = vrot.slane %v1888, 2
    %v1890 = vadd.f32 %v1888, %v1889
    %v1891 = vrot.slane %v1890, 1
    %v1892 = vadd.f32 %v1890, %v1891
    %1894 = vrot.lane.b32.xlu0 %v1892, 98
    %v1895 = vpop.permute.xlu0 %1894
    %v1897 = vadd.f32 %v1830, %v1895
    %v1898 = vxor.u32 %v1897, 2147483648
    %v1899 = vmul.f32 %v1898, 1.442695
    %v1900 = vpow.pop %v1899
    %v1901 = vadd.f32 %v1900, 1.0
    %v1902 = vrcp.pop %v1901
    %v1903 = vmul.f32 1.0, %v1902
    %vm1904 = vcmask 8192
    %1905 = vst.msk [vmem:[#allocation3] sm:$0x1] %vm1904, %v1903
    // Predicated region
    $region22: #{discriminator_forward.7} parent=1 // pred_check
      _
    $region23: #{discriminator_forward.7} parent=1 // pred_check_branch
      %1907 = sbr.rel (0) target = $region25
    $region24: #{discriminator_forward.7} parent=1 // pred_region
      %s1909 = ssub.s32 16, 16
      %1910 = vsyncadd [#allocation4], %s1909
      %s1912 = sshll.u32 [#allocation3], 4
      %s1913 = int_to_ptr.vmem [resolvable:$true] %s1912
      %1915 = dma.vmem_to_hbm [thread:$0]  %s1913, 16, %s5, [#allocation4]
    $region25: #{discriminator_forward.7} parent=1 // pred_fallthru
      _
    // Predicated region
    $region26: #{discriminator_forward.7} parent=1 // pred_check
      _
    $region27: #{discriminator_forward.7} parent=1 // pred_check_branch
      %1917 = sbr.rel (0) target = $region29
    $region28: #{discriminator_forward.7} parent=1 // pred_region
      %1918 = dma.done [#allocation4], 16
    $region29: #{discriminator_forward.7} parent=1 // pred_fallthru
      _
    %1919 = vsyncpa [#allocation4], 1

</llo_original>
